<compile_context>
chip_gen: v7x
topology: tpu7x:2x2x1
jax: 0.10.0
libtpu: 0.0.40
codegen_flags: <defaults>
</compile_context>

<pallas_src>
import numpy as np
import jax
import jax.numpy as jnp
from jax import lax
from jax.experimental import pallas as pl
from jax.experimental.pallas import tpu as pltpu


def _valid_mask(N, Hp, Wp, Hout, Wout):
    """1.0 at lanes of the flattened conv output that are real (n, y, x) output
    positions; 0.0 at row/batch-wrap garbage lanes. Shape (1, L), f32."""
    L = (N - 1) * Hp * Wp + (Hout - 1) * Wp + Wout
    idx = np.arange(L)
    within = idx % (Hp * Wp)
    ok = ((within // Wp) < Hout) & ((within % Wp) < Wout)
    return jnp.asarray(ok.astype(np.float32).reshape(1, L))


def _make_fused_generator_kernel(cfgs, N):
    """Builds the fused kernel for a static per-layer config tuple.

    Each cfg holds static python values:
      K, pad, Hin, Win, Hp, Wp, Hout, Wout, bn, act, eps.
    """
    n_layers = len(cfgs)

    def kernel(*refs):
        # refs layout: x, then per layer (wmat, bias, [gamma, beta,] mask),
        # then output, then per-layer padded activation scratch buffers.
        x_ref = refs[0]
        idx = 1
        params = []
        for c in cfgs:
            if c['bn']:
                params.append(tuple(refs[idx:idx + 5]))      # w, b, gamma, beta, mask
                idx += 5
            else:
                params.append((refs[idx], refs[idx + 1], None, None, refs[idx + 2]))
                idx += 3
        o_ref = refs[idx]
        pad_refs = refs[idx + 1: idx + 1 + n_layers]

        # ---- stage NC(H*W) input into layer 0's zero-padded flat buffer ----
        c0 = cfgs[0]
        p0 = pad_refs[0]
        p0[...] = jnp.zeros_like(p0)
        for n in range(N):
            base = n * c0['Hp'] * c0['Wp']
            for i in range(c0['Hin']):
                dst = base + (i + c0['pad']) * c0['Wp'] + c0['pad']
                p0[:, dst:dst + c0['Win']] = \
                    x_ref[n, :, i * c0['Win']:(i + 1) * c0['Win']]

        # ---- conv + bias (+ BN) + activation, layer by layer, all in VMEM ----
        for l, c in enumerate(cfgs):
            w_ref, b_ref, g_ref, bt_ref, m_ref = params[l]
            cur = pad_refs[l]
            K, Wp, HpWp = c['K'], c['Wp'], c['Hp'] * c['Wp']
            Hout, Wout = c['Hout'], c['Wout']
            # Flattened output length covering all batches (includes masked
            # row/batch-wrap garbage lanes).
            L = (N - 1) * HpWp + (Hout - 1) * Wp + Wout
            offs = [kh * Wp + kw for kh in range(K) for kw in range(K)]

            # im2col by lane shifts: every tap is a contiguous lane slice.
            taps = [cur[:, off:off + L] for off in offs]
            pmat = jnp.concatenate(taps, axis=0).astype(jnp.bfloat16)  # (K*K*Cin, L)
            acc = jnp.dot(w_ref[...], pmat,
                          preferred_element_type=jnp.float32) + b_ref[...]
            mask = m_ref[...]                                          # (1, L)

            if c['bn']:
                # torch BatchNorm2d training-mode forward: per-channel batch
                # statistics over (N, H, W), biased variance.
                count = float(N * Hout * Wout)
                mean = jnp.sum(acc * mask, axis=1, keepdims=True) / count
                var = jnp.sum(((acc - mean) ** 2) * mask, axis=1,
                              keepdims=True) / count
                scale = g_ref[...] * lax.rsqrt(var + c['eps'])
                shift = bt_ref[...] - mean * scale
                acc = acc * scale + shift

            if c['act'] == 'relu':
                acc = jnp.maximum(acc, 0.0)
            else:
                acc = jax.nn.sigmoid(acc)

            if l + 1 < n_layers:
                nc = cfgs[l + 1]
                nxt = pad_refs[l + 1]
                nxt[...] = jnp.zeros_like(nxt)
                if nc['Hp'] == c['Hp'] and nc['Wp'] == Wp:
                    # 'same'-chain fast path: valid -> padded placement is a
                    # constant lane shift; masked garbage lands exactly on the
                    # next layer's padding positions.
                    dst0 = nc['pad'] * nc['Wp'] + nc['pad']
                    nxt[:, dst0:dst0 + L] = acc * mask
                else:
                    # General stride-1 fallback: copy valid columns row by row.
                    nWp, nHpWp = nc['Wp'], nc['Hp'] * nc['Wp']
                    for n in range(N):
                        for i in range(Hout):
                            src = n * HpWp + i * Wp
                            dst = n * nHpWp + (i + nc['pad']) * nWp + nc['pad']
                            nxt[:, dst:dst + Wout] = acc[:, src:src + Wout]
            else:
                # Final layer: scatter valid rows into the NC(H*W) output.
                for n in range(N):
                    for i in range(Hout):
                        src = n * HpWp + i * Wp
                        o_ref[n, :, i * Wout:(i + 1) * Wout] = acc[:, src:src + Wout]

    return kernel


class Generator:
    """JAX/Pallas port of the scenario_gan Generator (NCHW in, NCHW out)."""

    def __init__(self, net_params, key):
        self.net_params = net_params
        in_ch, out_ch = net_params['input'], net_params['output']
        ks, st, pd = net_params['kernel'], net_params['stride'], net_params['padding']
        if any(s != 1 for s in st):
            # TODO(synk): stride > 1 needs strided tap gathers; not supported by
            # the flattened-lane fused kernel.
            raise NotImplementedError("fused Generator kernel supports stride=1 only")

        self.layers = []
        for i in range(4):
            key, kkey, bkey = jax.random.split(key, 3)
            cin, cout, k = in_ch[i], out_ch[i], ks[i]
            # Deterministic synthetic init (no checkpoint load), PyTorch OIHW layout.
            w_oihw = 0.1 * jax.random.normal(kkey, (cout, cin, k, k), jnp.float32)
            b = 0.01 * jax.random.normal(bkey, (cout,), jnp.float32)
            # im2col weight matrix (Cout, K*K*Cin); column index (kh*K+kw)*Cin+ci
            # matches the tap-major concatenation in the kernel.
            wmat = jnp.transpose(w_oihw, (2, 3, 1, 0)).reshape(k * k * cin, cout).T
            self.layers.append(dict(
                cin=cin, cout=cout, k=k, pad=pd[i],
                bn=(i < 3), act='relu' if i < 3 else 'sigmoid',
                w_oihw=w_oihw,                                    # for reference check
                wmat=jnp.asarray(wmat, jnp.bfloat16),             # MXU operand
                bias=b.reshape(cout, 1).astype(jnp.float32),
                gamma=jnp.ones((cout, 1), jnp.float32),           # torch BN init
                beta=jnp.zeros((cout, 1), jnp.float32)))

    def __call__(self, x_nchw):
        N, Cin, H, W = x_nchw.shape
        assert Cin == self.layers[0]['cin']

        cfgs, inputs, scratch = [], [], []
        h, w = H, W
        for L in self.layers:
            hp, wp = h + 2 * L['pad'], w + 2 * L['pad']
            hout, wout = hp - L['k'] + 1, wp - L['k'] + 1
            cfgs.append(dict(K=L['k'], pad=L['pad'], Hin=h, Win=w, Hp=hp, Wp=wp,
                             Hout=hout, Wout=wout, bn=L['bn'], act=L['act'],
                             eps=1e-5))
            inputs.append(L['wmat'])
            inputs.append(L['bias'])
            if L['bn']:
                inputs.append(L['gamma'])
                inputs.append(L['beta'])
            inputs.append(_valid_mask(N, hp, wp, hout, wout))
            # padded-flat activation buffer feeding this layer
            scratch.append(pltpu.VMEM((L['cin'], N * hp * wp), jnp.float32))
            h, w = hout, wout

        cout_last = self.layers[-1]['cout']
        kernel = _make_fused_generator_kernel(tuple(cfgs), N)
        x_flat = x_nchw.astype(jnp.float32).reshape(N, Cin, H * W)   # free reshape
        out = pl.pallas_call(
            kernel,
            out_shape=jax.ShapeDtypeStruct((N, cout_last, h * w), jnp.float32),
            in_specs=[pl.BlockSpec(memory_space=pltpu.MemorySpace.VMEM)]
                     * (1 + len(inputs)),
            out_specs=pl.BlockSpec(memory_space=pltpu.MemorySpace.VMEM),
            scratch_shapes=scratch,
        )(x_flat, *inputs)
        return out.reshape(N, cout_last, h, w)                       # free reshape


def _reference_forward(layers, x, eps=1e-5):
    """Pure-JAX reference of the torch Generator forward (training-mode BN)."""
    y = x.astype(jnp.float32)
    for L in layers:
        p = L['pad']
        y = lax.conv_general_dilated(
            y, L['w_oihw'], window_strides=(1, 1), padding=[(p, p), (p, p)],
            dimension_numbers=('NCHW', 'OIHW', 'NCHW'))
        y = y + L['bias'].reshape(1, -1, 1, 1)
        if L['bn']:
            mean = jnp.mean(y, axis=(0, 2, 3), keepdims=True)
            var = jnp.mean((y - mean) ** 2, axis=(0, 2, 3), keepdims=True)
            y = (y - mean) * lax.rsqrt(var + eps)
            y = y * L['gamma'].reshape(1, -1, 1, 1) + L['beta'].reshape(1, -1, 1, 1)
            y = jnp.maximum(y, 0.0)
        else:
            y = jax.nn.sigmoid(y)
    return y


if __name__ == "__main__":
    # Small, self-consistent net_params ('same'-style padding, stride 1, so
    # spatial dims are preserved through all 4 layers).
    net_params = {
        'input':   [4, 8, 8, 8],
        'output':  [8, 8, 8, 1],
        'kernel':  [3, 3, 3, 3],
        'stride':  [1, 1, 1, 1],
        'padding': [1, 1, 1, 1],
    }

    key = jax.random.PRNGKey(0)
    key, pkey, xkey = jax.random.split(key, 3)

    gen = Generator(net_params, pkey)

    # NCHW input, like the PyTorch module expects.
    x = jax.random.normal(xkey, (2, 4, 16, 16), jnp.float32)

    out = jax.block_until_ready(gen(x))

    assert out.shape == (2, 1, 16, 16), out.shape
    assert bool(jnp.all(jnp.isfinite(out)))
    assert bool(jnp.all(out >= 0.0)) and bool(jnp.all(out <= 1.0))   # sigmoid range

    # Numerical self-check against a pure-JAX reference (tolerance covers the
    # bf16 MXU operand path inside the kernel).
    ref = jax.block_until_ready(_reference_forward(gen.layers, x))
    err = float(jnp.max(jnp.abs(out - ref)))
    assert err < 2e-2, f"max |pallas - reference| = {err}"

    print("KERNEL_OK")
</pallas_src>

<mosaic_0001>
module attributes {stable_mosaic.version = 11 : i64} {
  func.func @kernel(%arg0: memref<2x4x256xf32, #tpu.memory_space<vmem>>, %arg1: memref<8x36xbf16, #tpu.memory_space<vmem>>, %arg2: memref<8x1xf32, #tpu.memory_space<vmem>>, %arg3: memref<8x1xf32, #tpu.memory_space<vmem>>, %arg4: memref<8x1xf32, #tpu.memory_space<vmem>>, %arg5: memref<1x610xf32, #tpu.memory_space<vmem>>, %arg6: memref<8x72xbf16, #tpu.memory_space<vmem>>, %arg7: memref<8x1xf32, #tpu.memory_space<vmem>>, %arg8: memref<8x1xf32, #tpu.memory_space<vmem>>, %arg9: memref<8x1xf32, #tpu.memory_space<vmem>>, %arg10: memref<1x610xf32, #tpu.memory_space<vmem>>, %arg11: memref<8x72xbf16, #tpu.memory_space<vmem>>, %arg12: memref<8x1xf32, #tpu.memory_space<vmem>>, %arg13: memref<8x1xf32, #tpu.memory_space<vmem>>, %arg14: memref<8x1xf32, #tpu.memory_space<vmem>>, %arg15: memref<1x610xf32, #tpu.memory_space<vmem>>, %arg16: memref<1x72xbf16, #tpu.memory_space<vmem>>, %arg17: memref<1x1xf32, #tpu.memory_space<vmem>>, %arg18: memref<1x610xf32, #tpu.memory_space<vmem>>, %arg19: memref<2x1x256xf32, #tpu.memory_space<vmem>>, %arg20: memref<4x648xf32, #tpu.memory_space<vmem>>, %arg21: memref<8x648xf32, #tpu.memory_space<vmem>>, %arg22: memref<8x648xf32, #tpu.memory_space<vmem>>, %arg23: memref<8x648xf32, #tpu.memory_space<vmem>>) attributes {dimension_semantics = [], scalar_prefetch = 0 : i64, scratch_operands = 4 : i64, tpu.core_type = #tpu.core_type<tc>} {
    %cst = arith.constant 0.000000e+00 : f32
    %0 = vector.broadcast %cst : f32 to vector<4x648xf32>
    %c0 = arith.constant 0 : index
    %c0_0 = arith.constant 0 : index
    %1 = vector.load %arg20[%c0, %c0_0] : memref<4x648xf32, #tpu.memory_space<vmem>>, vector<4x648xf32>
    tpu.vector_store %arg20[%c0, %c0_0], %0 {strides = array<i32>} : memref<4x648xf32, #tpu.memory_space<vmem>>, vector<4x648xf32>,
    %c0_1 = arith.constant 0 : index
    %c0_2 = arith.constant 0 : index
    %c0_3 = arith.constant 0 : index
    %2 = vector.load %arg0[%c0_1, %c0_2, %c0_3] : memref<2x4x256xf32, #tpu.memory_space<vmem>>, vector<1x4x16xf32>
    %3 = vector.shape_cast %2 : vector<1x4x16xf32> to vector<4x16xf32>
    %c0_4 = arith.constant 0 : index
    %c19 = arith.constant 19 : index
    %4 = vector.load %arg20[%c0_4, %c19] : memref<4x648xf32, #tpu.memory_space<vmem>>, vector<4x16xf32>
    tpu.vector_store %arg20[%c0_4, %c19], %3 {strides = array<i32>} : memref<4x648xf32, #tpu.memory_space<vmem>>, vector<4x16xf32>,
    %c0_5 = arith.constant 0 : index
    %c0_6 = arith.constant 0 : index
    %c16 = arith.constant 16 : index
    %5 = vector.load %arg0[%c0_5, %c0_6, %c16] : memref<2x4x256xf32, #tpu.memory_space<vmem>>, vector<1x4x16xf32>
    %6 = vector.shape_cast %5 : vector<1x4x16xf32> to vector<4x16xf32>
    %c0_7 = arith.constant 0 : index
    %c37 = arith.constant 37 : index
    %7 = vector.load %arg20[%c0_7, %c37] : memref<4x648xf32, #tpu.memory_space<vmem>>, vector<4x16xf32>
    tpu.vector_store %arg20[%c0_7, %c37], %6 {strides = array<i32>} : memref<4x648xf32, #tpu.memory_space<vmem>>, vector<4x16xf32>,
    %c0_8 = arith.constant 0 : index
    %c0_9 = arith.constant 0 : index
    %c32 = arith.constant 32 : index
    %8 = vector.load %arg0[%c0_8, %c0_9, %c32] : memref<2x4x256xf32, #tpu.memory_space<vmem>>, vector<1x4x16xf32>
    %9 = vector.shape_cast %8 : vector<1x4x16xf32> to vector<4x16xf32>
    %c0_10 = arith.constant 0 : index
    %c55 = arith.constant 55 : index
    %10 = vector.load %arg20[%c0_10, %c55] : memref<4x648xf32, #tpu.memory_space<vmem>>, vector<4x16xf32>
    tpu.vector_store %arg20[%c0_10, %c55], %9 {strides = array<i32>} : memref<4x648xf32, #tpu.memory_space<vmem>>, vector<4x16xf32>,
    %c0_11 = arith.constant 0 : index
    %c0_12 = arith.constant 0 : index
    %c48 = arith.constant 48 : index
    %11 = vector.load %arg0[%c0_11, %c0_12, %c48] : memref<2x4x256xf32, #tpu.memory_space<vmem>>, vector<1x4x16xf32>
    %12 = vector.shape_cast %11 : vector<1x4x16xf32> to vector<4x16xf32>
    %c0_13 = arith.constant 0 : index
    %c73 = arith.constant 73 : index
    %13 = vector.load %arg20[%c0_13, %c73] : memref<4x648xf32, #tpu.memory_space<vmem>>, vector<4x16xf32>
    tpu.vector_store %arg20[%c0_13, %c73], %12 {strides = array<i32>} : memref<4x648xf32, #tpu.memory_space<vmem>>, vector<4x16xf32>,
    %c0_14 = arith.constant 0 : index
    %c0_15 = arith.constant 0 : index
    %c64 = arith.constant 64 : index
    %14 = vector.load %arg0[%c0_14, %c0_15, %c64] : memref<2x4x256xf32, #tpu.memory_space<vmem>>, vector<1x4x16xf32>
    %15 = vector.shape_cast %14 : vector<1x4x16xf32> to vector<4x16xf32>
    %c0_16 = arith.constant 0 : index
    %c91 = arith.constant 91 : index
    %16 = vector.load %arg20[%c0_16, %c91] : memref<4x648xf32, #tpu.memory_space<vmem>>, vector<4x16xf32>
    tpu.vector_store %arg20[%c0_16, %c91], %15 {strides = array<i32>} : memref<4x648xf32, #tpu.memory_space<vmem>>, vector<4x16xf32>,
    %c0_17 = arith.constant 0 : index
    %c0_18 = arith.constant 0 : index
    %c80 = arith.constant 80 : index
    %17 = vector.load %arg0[%c0_17, %c0_18, %c80] : memref<2x4x256xf32, #tpu.memory_space<vmem>>, vector<1x4x16xf32>
    %18 = vector.shape_cast %17 : vector<1x4x16xf32> to vector<4x16xf32>
    %c0_19 = arith.constant 0 : index
    %c109 = arith.constant 109 : index
    %19 = vector.load %arg20[%c0_19, %c109] : memref<4x648xf32, #tpu.memory_space<vmem>>, vector<4x16xf32>
    tpu.vector_store %arg20[%c0_19, %c109], %18 {strides = array<i32>} : memref<4x648xf32, #tpu.memory_space<vmem>>, vector<4x16xf32>,
    %c0_20 = arith.constant 0 : index
    %c0_21 = arith.constant 0 : index
    %c96 = arith.constant 96 : index
    %20 = vector.load %arg0[%c0_20, %c0_21, %c96] : memref<2x4x256xf32, #tpu.memory_space<vmem>>, vector<1x4x16xf32>
    %21 = vector.shape_cast %20 : vector<1x4x16xf32> to vector<4x16xf32>
    %c0_22 = arith.constant 0 : index
    %c127 = arith.constant 127 : index
    %22 = vector.load %arg20[%c0_22, %c127] : memref<4x648xf32, #tpu.memory_space<vmem>>, vector<4x16xf32>
    tpu.vector_store %arg20[%c0_22, %c127], %21 {strides = array<i32>} : memref<4x648xf32, #tpu.memory_space<vmem>>, vector<4x16xf32>,
    %c0_23 = arith.constant 0 : index
    %c0_24 = arith.constant 0 : index
    %c112 = arith.constant 112 : index
    %23 = vector.load %arg0[%c0_23, %c0_24, %c112] : memref<2x4x256xf32, #tpu.memory_space<vmem>>, vector<1x4x16xf32>
    %24 = vector.shape_cast %23 : vector<1x4x16xf32> to vector<4x16xf32>
    %c0_25 = arith.constant 0 : index
    %c145 = arith.constant 145 : index
    %25 = vector.load %arg20[%c0_25, %c145] : memref<4x648xf32, #tpu.memory_space<vmem>>, vector<4x16xf32>
    tpu.vector_store %arg20[%c0_25, %c145], %24 {strides = array<i32>} : memref<4x648xf32, #tpu.memory_space<vmem>>, vector<4x16xf32>,
    %c0_26 = arith.constant 0 : index
    %c0_27 = arith.constant 0 : index
    %c128 = arith.constant 128 : index
    %26 = vector.load %arg0[%c0_26, %c0_27, %c128] : memref<2x4x256xf32, #tpu.memory_space<vmem>>, vector<1x4x16xf32>
    %27 = vector.shape_cast %26 : vector<1x4x16xf32> to vector<4x16xf32>
    %c0_28 = arith.constant 0 : index
    %c163 = arith.constant 163 : index
    %28 = vector.load %arg20[%c0_28, %c163] : memref<4x648xf32, #tpu.memory_space<vmem>>, vector<4x16xf32>
    tpu.vector_store %arg20[%c0_28, %c163], %27 {strides = array<i32>} : memref<4x648xf32, #tpu.memory_space<vmem>>, vector<4x16xf32>,
    %c0_29 = arith.constant 0 : index
    %c0_30 = arith.constant 0 : index
    %c144 = arith.constant 144 : index
    %29 = vector.load %arg0[%c0_29, %c0_30, %c144] : memref<2x4x256xf32, #tpu.memory_space<vmem>>, vector<1x4x16xf32>
    %30 = vector.shape_cast %29 : vector<1x4x16xf32> to vector<4x16xf32>
    %c0_31 = arith.constant 0 : index
    %c181 = arith.constant 181 : index
    %31 = vector.load %arg20[%c0_31, %c181] : memref<4x648xf32, #tpu.memory_space<vmem>>, vector<4x16xf32>
    tpu.vector_store %arg20[%c0_31, %c181], %30 {strides = array<i32>} : memref<4x648xf32, #tpu.memory_space<vmem>>, vector<4x16xf32>,
    %c0_32 = arith.constant 0 : index
    %c0_33 = arith.constant 0 : index
    %c160 = arith.constant 160 : index
    %32 = vector.load %arg0[%c0_32, %c0_33, %c160] : memref<2x4x256xf32, #tpu.memory_space<vmem>>, vector<1x4x16xf32>
    %33 = vector.shape_cast %32 : vector<1x4x16xf32> to vector<4x16xf32>
    %c0_34 = arith.constant 0 : index
    %c199 = arith.constant 199 : index
    %34 = vector.load %arg20[%c0_34, %c199] : memref<4x648xf32, #tpu.memory_space<vmem>>, vector<4x16xf32>
    tpu.vector_store %arg20[%c0_34, %c199], %33 {strides = array<i32>} : memref<4x648xf32, #tpu.memory_space<vmem>>, vector<4x16xf32>,
    %c0_35 = arith.constant 0 : index
    %c0_36 = arith.constant 0 : index
    %c176 = arith.constant 176 : index
    %35 = vector.load %arg0[%c0_35, %c0_36, %c176] : memref<2x4x256xf32, #tpu.memory_space<vmem>>, vector<1x4x16xf32>
    %36 = vector.shape_cast %35 : vector<1x4x16xf32> to vector<4x16xf32>
    %c0_37 = arith.constant 0 : index
    %c217 = arith.constant 217 : index
    %37 = vector.load %arg20[%c0_37, %c217] : memref<4x648xf32, #tpu.memory_space<vmem>>, vector<4x16xf32>
    tpu.vector_store %arg20[%c0_37, %c217], %36 {strides = array<i32>} : memref<4x648xf32, #tpu.memory_space<vmem>>, vector<4x16xf32>,
    %c0_38 = arith.constant 0 : index
    %c0_39 = arith.constant 0 : index
    %c192 = arith.constant 192 : index
    %38 = vector.load %arg0[%c0_38, %c0_39, %c192] : memref<2x4x256xf32, #tpu.memory_space<vmem>>, vector<1x4x16xf32>
    %39 = vector.shape_cast %38 : vector<1x4x16xf32> to vector<4x16xf32>
    %c0_40 = arith.constant 0 : index
    %c235 = arith.constant 235 : index
    %40 = vector.load %arg20[%c0_40, %c235] : memref<4x648xf32, #tpu.memory_space<vmem>>, vector<4x16xf32>
    tpu.vector_store %arg20[%c0_40, %c235], %39 {strides = array<i32>} : memref<4x648xf32, #tpu.memory_space<vmem>>, vector<4x16xf32>,
    %c0_41 = arith.constant 0 : index
    %c0_42 = arith.constant 0 : index
    %c208 = arith.constant 208 : index
    %41 = vector.load %arg0[%c0_41, %c0_42, %c208] : memref<2x4x256xf32, #tpu.memory_space<vmem>>, vector<1x4x16xf32>
    %42 = vector.shape_cast %41 : vector<1x4x16xf32> to vector<4x16xf32>
    %c0_43 = arith.constant 0 : index
    %c253 = arith.constant 253 : index
    %43 = vector.load %arg20[%c0_43, %c253] : memref<4x648xf32, #tpu.memory_space<vmem>>, vector<4x16xf32>
    tpu.vector_store %arg20[%c0_43, %c253], %42 {strides = array<i32>} : memref<4x648xf32, #tpu.memory_space<vmem>>, vector<4x16xf32>,
    %c0_44 = arith.constant 0 : index
    %c0_45 = arith.constant 0 : index
    %c224 = arith.constant 224 : index
    %44 = vector.load %arg0[%c0_44, %c0_45, %c224] : memref<2x4x256xf32, #tpu.memory_space<vmem>>, vector<1x4x16xf32>
    %45 = vector.shape_cast %44 : vector<1x4x16xf32> to vector<4x16xf32>
    %c0_46 = arith.constant 0 : index
    %c271 = arith.constant 271 : index
    %46 = vector.load %arg20[%c0_46, %c271] : memref<4x648xf32, #tpu.memory_space<vmem>>, vector<4x16xf32>
    tpu.vector_store %arg20[%c0_46, %c271], %45 {strides = array<i32>} : memref<4x648xf32, #tpu.memory_space<vmem>>, vector<4x16xf32>,
    %c0_47 = arith.constant 0 : index
    %c0_48 = arith.constant 0 : index
    %c240 = arith.constant 240 : index
    %47 = vector.load %arg0[%c0_47, %c0_48, %c240] : memref<2x4x256xf32, #tpu.memory_space<vmem>>, vector<1x4x16xf32>
    %48 = vector.shape_cast %47 : vector<1x4x16xf32> to vector<4x16xf32>
    %c0_49 = arith.constant 0 : index
    %c289 = arith.constant 289 : index
    %49 = vector.load %arg20[%c0_49, %c289] : memref<4x648xf32, #tpu.memory_space<vmem>>, vector<4x16xf32>
    tpu.vector_store %arg20[%c0_49, %c289], %48 {strides = array<i32>} : memref<4x648xf32, #tpu.memory_space<vmem>>, vector<4x16xf32>,
    %c1 = arith.constant 1 : index
    %c0_50 = arith.constant 0 : index
    %c0_51 = arith.constant 0 : index
    %50 = vector.load %arg0[%c1, %c0_50, %c0_51] : memref<2x4x256xf32, #tpu.memory_space<vmem>>, vector<1x4x16xf32>
    %51 = vector.shape_cast %50 : vector<1x4x16xf32> to vector<4x16xf32>
    %c0_52 = arith.constant 0 : index
    %c343 = arith.constant 343 : index
    %52 = vector.load %arg20[%c0_52, %c343] : memref<4x648xf32, #tpu.memory_space<vmem>>, vector<4x16xf32>
    tpu.vector_store %arg20[%c0_52, %c343], %51 {strides = array<i32>} : memref<4x648xf32, #tpu.memory_space<vmem>>, vector<4x16xf32>,
    %c1_53 = arith.constant 1 : index
    %c0_54 = arith.constant 0 : index
    %c16_55 = arith.constant 16 : index
    %53 = vector.load %arg0[%c1_53, %c0_54, %c16_55] : memref<2x4x256xf32, #tpu.memory_space<vmem>>, vector<1x4x16xf32>
    %54 = vector.shape_cast %53 : vector<1x4x16xf32> to vector<4x16xf32>
    %c0_56 = arith.constant 0 : index
    %c361 = arith.constant 361 : index
    %55 = vector.load %arg20[%c0_56, %c361] : memref<4x648xf32, #tpu.memory_space<vmem>>, vector<4x16xf32>
    tpu.vector_store %arg20[%c0_56, %c361], %54 {strides = array<i32>} : memref<4x648xf32, #tpu.memory_space<vmem>>, vector<4x16xf32>,
    %c1_57 = arith.constant 1 : index
    %c0_58 = arith.constant 0 : index
    %c32_59 = arith.constant 32 : index
    %56 = vector.load %arg0[%c1_57, %c0_58, %c32_59] : memref<2x4x256xf32, #tpu.memory_space<vmem>>, vector<1x4x16xf32>
    %57 = vector.shape_cast %56 : vector<1x4x16xf32> to vector<4x16xf32>
    %c0_60 = arith.constant 0 : index
    %c379 = arith.constant 379 : index
    %58 = vector.load %arg20[%c0_60, %c379] : memref<4x648xf32, #tpu.memory_space<vmem>>, vector<4x16xf32>
    tpu.vector_store %arg20[%c0_60, %c379], %57 {strides = array<i32>} : memref<4x648xf32, #tpu.memory_space<vmem>>, vector<4x16xf32>,
    %c1_61 = arith.constant 1 : index
    %c0_62 = arith.constant 0 : index
    %c48_63 = arith.constant 48 : index
    %59 = vector.load %arg0[%c1_61, %c0_62, %c48_63] : memref<2x4x256xf32, #tpu.memory_space<vmem>>, vector<1x4x16xf32>
    %60 = vector.shape_cast %59 : vector<1x4x16xf32> to vector<4x16xf32>
    %c0_64 = arith.constant 0 : index
    %c397 = arith.constant 397 : index
    %61 = vector.load %arg20[%c0_64, %c397] : memref<4x648xf32, #tpu.memory_space<vmem>>, vector<4x16xf32>
    tpu.vector_store %arg20[%c0_64, %c397], %60 {strides = array<i32>} : memref<4x648xf32, #tpu.memory_space<vmem>>, vector<4x16xf32>,
    %c1_65 = arith.constant 1 : index
    %c0_66 = arith.constant 0 : index
    %c64_67 = arith.constant 64 : index
    %62 = vector.load %arg0[%c1_65, %c0_66, %c64_67] : memref<2x4x256xf32, #tpu.memory_space<vmem>>, vector<1x4x16xf32>
    %63 = vector.shape_cast %62 : vector<1x4x16xf32> to vector<4x16xf32>
    %c0_68 = arith.constant 0 : index
    %c415 = arith.constant 415 : index
    %64 = vector.load %arg20[%c0_68, %c415] : memref<4x648xf32, #tpu.memory_space<vmem>>, vector<4x16xf32>
    tpu.vector_store %arg20[%c0_68, %c415], %63 {strides = array<i32>} : memref<4x648xf32, #tpu.memory_space<vmem>>, vector<4x16xf32>,
    %c1_69 = arith.constant 1 : index
    %c0_70 = arith.constant 0 : index
    %c80_71 = arith.constant 80 : index
    %65 = vector.load %arg0[%c1_69, %c0_70, %c80_71] : memref<2x4x256xf32, #tpu.memory_space<vmem>>, vector<1x4x16xf32>
    %66 = vector.shape_cast %65 : vector<1x4x16xf32> to vector<4x16xf32>
    %c0_72 = arith.constant 0 : index
    %c433 = arith.constant 433 : index
    %67 = vector.load %arg20[%c0_72, %c433] : memref<4x648xf32, #tpu.memory_space<vmem>>, vector<4x16xf32>
    tpu.vector_store %arg20[%c0_72, %c433], %66 {strides = array<i32>} : memref<4x648xf32, #tpu.memory_space<vmem>>, vector<4x16xf32>,
    %c1_73 = arith.constant 1 : index
    %c0_74 = arith.constant 0 : index
    %c96_75 = arith.constant 96 : index
    %68 = vector.load %arg0[%c1_73, %c0_74, %c96_75] : memref<2x4x256xf32, #tpu.memory_space<vmem>>, vector<1x4x16xf32>
    %69 = vector.shape_cast %68 : vector<1x4x16xf32> to vector<4x16xf32>
    %c0_76 = arith.constant 0 : index
    %c451 = arith.constant 451 : index
    %70 = vector.load %arg20[%c0_76, %c451] : memref<4x648xf32, #tpu.memory_space<vmem>>, vector<4x16xf32>
    tpu.vector_store %arg20[%c0_76, %c451], %69 {strides = array<i32>} : memref<4x648xf32, #tpu.memory_space<vmem>>, vector<4x16xf32>,
    %c1_77 = arith.constant 1 : index
    %c0_78 = arith.constant 0 : index
    %c112_79 = arith.constant 112 : index
    %71 = vector.load %arg0[%c1_77, %c0_78, %c112_79] : memref<2x4x256xf32, #tpu.memory_space<vmem>>, vector<1x4x16xf32>
    %72 = vector.shape_cast %71 : vector<1x4x16xf32> to vector<4x16xf32>
    %c0_80 = arith.constant 0 : index
    %c469 = arith.constant 469 : index
    %73 = vector.load %arg20[%c0_80, %c469] : memref<4x648xf32, #tpu.memory_space<vmem>>, vector<4x16xf32>
    tpu.vector_store %arg20[%c0_80, %c469], %72 {strides = array<i32>} : memref<4x648xf32, #tpu.memory_space<vmem>>, vector<4x16xf32>,
    %c1_81 = arith.constant 1 : index
    %c0_82 = arith.constant 0 : index
    %c128_83 = arith.constant 128 : index
    %74 = vector.load %arg0[%c1_81, %c0_82, %c128_83] : memref<2x4x256xf32, #tpu.memory_space<vmem>>, vector<1x4x16xf32>
    %75 = vector.shape_cast %74 : vector<1x4x16xf32> to vector<4x16xf32>
    %c0_84 = arith.constant 0 : index
    %c487 = arith.constant 487 : index
    %76 = vector.load %arg20[%c0_84, %c487] : memref<4x648xf32, #tpu.memory_space<vmem>>, vector<4x16xf32>
    tpu.vector_store %arg20[%c0_84, %c487], %75 {strides = array<i32>} : memref<4x648xf32, #tpu.memory_space<vmem>>, vector<4x16xf32>,
    %c1_85 = arith.constant 1 : index
    %c0_86 = arith.constant 0 : index
    %c144_87 = arith.constant 144 : index
    %77 = vector.load %arg0[%c1_85, %c0_86, %c144_87] : memref<2x4x256xf32, #tpu.memory_space<vmem>>, vector<1x4x16xf32>
    %78 = vector.shape_cast %77 : vector<1x4x16xf32> to vector<4x16xf32>
    %c0_88 = arith.constant 0 : index
    %c505 = arith.constant 505 : index
    %79 = vector.load %arg20[%c0_88, %c505] : memref<4x648xf32, #tpu.memory_space<vmem>>, vector<4x16xf32>
    tpu.vector_store %arg20[%c0_88, %c505], %78 {strides = array<i32>} : memref<4x648xf32, #tpu.memory_space<vmem>>, vector<4x16xf32>,
    %c1_89 = arith.constant 1 : index
    %c0_90 = arith.constant 0 : index
    %c160_91 = arith.constant 160 : index
    %80 = vector.load %arg0[%c1_89, %c0_90, %c160_91] : memref<2x4x256xf32, #tpu.memory_space<vmem>>, vector<1x4x16xf32>
    %81 = vector.shape_cast %80 : vector<1x4x16xf32> to vector<4x16xf32>
    %c0_92 = arith.constant 0 : index
    %c523 = arith.constant 523 : index
    %82 = vector.load %arg20[%c0_92, %c523] : memref<4x648xf32, #tpu.memory_space<vmem>>, vector<4x16xf32>
    tpu.vector_store %arg20[%c0_92, %c523], %81 {strides = array<i32>} : memref<4x648xf32, #tpu.memory_space<vmem>>, vector<4x16xf32>,
    %c1_93 = arith.constant 1 : index
    %c0_94 = arith.constant 0 : index
    %c176_95 = arith.constant 176 : index
    %83 = vector.load %arg0[%c1_93, %c0_94, %c176_95] : memref<2x4x256xf32, #tpu.memory_space<vmem>>, vector<1x4x16xf32>
    %84 = vector.shape_cast %83 : vector<1x4x16xf32> to vector<4x16xf32>
    %c0_96 = arith.constant 0 : index
    %c541 = arith.constant 541 : index
    %85 = vector.load %arg20[%c0_96, %c541] : memref<4x648xf32, #tpu.memory_space<vmem>>, vector<4x16xf32>
    tpu.vector_store %arg20[%c0_96, %c541], %84 {strides = array<i32>} : memref<4x648xf32, #tpu.memory_space<vmem>>, vector<4x16xf32>,
    %c1_97 = arith.constant 1 : index
    %c0_98 = arith.constant 0 : index
    %c192_99 = arith.constant 192 : index
    %86 = vector.load %arg0[%c1_97, %c0_98, %c192_99] : memref<2x4x256xf32, #tpu.memory_space<vmem>>, vector<1x4x16xf32>
    %87 = vector.shape_cast %86 : vector<1x4x16xf32> to vector<4x16xf32>
    %c0_100 = arith.constant 0 : index
    %c559 = arith.constant 559 : index
    %88 = vector.load %arg20[%c0_100, %c559] : memref<4x648xf32, #tpu.memory_space<vmem>>, vector<4x16xf32>
    tpu.vector_store %arg20[%c0_100, %c559], %87 {strides = array<i32>} : memref<4x648xf32, #tpu.memory_space<vmem>>, vector<4x16xf32>,
    %c1_101 = arith.constant 1 : index
    %c0_102 = arith.constant 0 : index
    %c208_103 = arith.constant 208 : index
    %89 = vector.load %arg0[%c1_101, %c0_102, %c208_103] : memref<2x4x256xf32, #tpu.memory_space<vmem>>, vector<1x4x16xf32>
    %90 = vector.shape_cast %89 : vector<1x4x16xf32> to vector<4x16xf32>
    %c0_104 = arith.constant 0 : index
    %c577 = arith.constant 577 : index
    %91 = vector.load %arg20[%c0_104, %c577] : memref<4x648xf32, #tpu.memory_space<vmem>>, vector<4x16xf32>
    tpu.vector_store %arg20[%c0_104, %c577], %90 {strides = array<i32>} : memref<4x648xf32, #tpu.memory_space<vmem>>, vector<4x16xf32>,
    %c1_105 = arith.constant 1 : index
    %c0_106 = arith.constant 0 : index
    %c224_107 = arith.constant 224 : index
    %92 = vector.load %arg0[%c1_105, %c0_106, %c224_107] : memref<2x4x256xf32, #tpu.memory_space<vmem>>, vector<1x4x16xf32>
    %93 = vector.shape_cast %92 : vector<1x4x16xf32> to vector<4x16xf32>
    %c0_108 = arith.constant 0 : index
    %c595 = arith.constant 595 : index
    %94 = vector.load %arg20[%c0_108, %c595] : memref<4x648xf32, #tpu.memory_space<vmem>>, vector<4x16xf32>
    tpu.vector_store %arg20[%c0_108, %c595], %93 {strides = array<i32>} : memref<4x648xf32, #tpu.memory_space<vmem>>, vector<4x16xf32>,
    %c1_109 = arith.constant 1 : index
    %c0_110 = arith.constant 0 : index
    %c240_111 = arith.constant 240 : index
    %95 = vector.load %arg0[%c1_109, %c0_110, %c240_111] : memref<2x4x256xf32, #tpu.memory_space<vmem>>, vector<1x4x16xf32>
    %96 = vector.shape_cast %95 : vector<1x4x16xf32> to vector<4x16xf32>
    %c0_112 = arith.constant 0 : index
    %c613 = arith.constant 613 : index
    %97 = vector.load %arg20[%c0_112, %c613] : memref<4x648xf32, #tpu.memory_space<vmem>>, vector<4x16xf32>
    tpu.vector_store %arg20[%c0_112, %c613], %96 {strides = array<i32>} : memref<4x648xf32, #tpu.memory_space<vmem>>, vector<4x16xf32>,
    %c0_113 = arith.constant 0 : index
    %c0_114 = arith.constant 0 : index
    %98 = vector.load %arg20[%c0_113, %c0_114] : memref<4x648xf32, #tpu.memory_space<vmem>>, vector<4x610xf32>
    %c0_115 = arith.constant 0 : index
    %c1_116 = arith.constant 1 : index
    %99 = vector.load %arg20[%c0_115, %c1_116] : memref<4x648xf32, #tpu.memory_space<vmem>>, vector<4x610xf32>
    %c0_117 = arith.constant 0 : index
    %c2 = arith.constant 2 : index
    %100 = vector.load %arg20[%c0_117, %c2] : memref<4x648xf32, #tpu.memory_space<vmem>>, vector<4x610xf32>
    %c0_118 = arith.constant 0 : index
    %c18 = arith.constant 18 : index
    %101 = vector.load %arg20[%c0_118, %c18] : memref<4x648xf32, #tpu.memory_space<vmem>>, vector<4x610xf32>
    %c0_119 = arith.constant 0 : index
    %c19_120 = arith.constant 19 : index
    %102 = vector.load %arg20[%c0_119, %c19_120] : memref<4x648xf32, #tpu.memory_space<vmem>>, vector<4x610xf32>
    %c0_121 = arith.constant 0 : index
    %c20 = arith.constant 20 : index
    %103 = vector.load %arg20[%c0_121, %c20] : memref<4x648xf32, #tpu.memory_space<vmem>>, vector<4x610xf32>
    %c0_122 = arith.constant 0 : index
    %c36 = arith.constant 36 : index
    %104 = vector.load %arg20[%c0_122, %c36] : memref<4x648xf32, #tpu.memory_space<vmem>>, vector<4x610xf32>
    %c0_123 = arith.constant 0 : index
    %c37_124 = arith.constant 37 : index
    %105 = vector.load %arg20[%c0_123, %c37_124] : memref<4x648xf32, #tpu.memory_space<vmem>>, vector<4x610xf32>
    %c0_125 = arith.constant 0 : index
    %c38 = arith.constant 38 : index
    %106 = vector.load %arg20[%c0_125, %c38] : memref<4x648xf32, #tpu.memory_space<vmem>>, vector<4x610xf32>
    %107 = tpu.concatenate %98, %99, %100, %101, %102, %103, %104, %105, %106 in 0 : vector<4x610xf32>, vector<4x610xf32>, vector<4x610xf32>, vector<4x610xf32>, vector<4x610xf32>, vector<4x610xf32>, vector<4x610xf32>, vector<4x610xf32>, vector<4x610xf32> -> vector<36x610xf32>
    %108 = arith.truncf %107 : vector<36x610xf32> to vector<36x610xbf16>
    %c0_126 = arith.constant 0 : index
    %c0_127 = arith.constant 0 : index
    %109 = vector.load %arg1[%c0_126, %c0_127] : memref<8x36xbf16, #tpu.memory_space<vmem>>, vector<8x36xbf16>
    %cst_128 = arith.constant dense<0.000000e+00> : vector<8x610xf32>
    %110 = tpu.matmul %109, %108, %cst_128 {dimension_numbers = #tpu.dot_dimension_numbers<[1], [0], [0], [1], [0, 0, 1, 1], [], []>} : vector<8x36xbf16>, vector<36x610xbf16>, vector<8x610xf32> -> vector<8x610xf32>
    %c0_129 = arith.constant 0 : index
    %c0_130 = arith.constant 0 : index
    %111 = vector.load %arg2[%c0_129, %c0_130] : memref<8x1xf32, #tpu.memory_space<vmem>>, vector<8x1xf32>
    %112 = vector.broadcast %111 : vector<8x1xf32> to vector<8x610xf32>
    %113 = arith.addf %110, %112 : vector<8x610xf32>
    %c0_131 = arith.constant 0 : index
    %c0_132 = arith.constant 0 : index
    %114 = vector.load %arg5[%c0_131, %c0_132] : memref<1x610xf32, #tpu.memory_space<vmem>>, vector<1x610xf32>
    %115 = vector.broadcast %114 : vector<1x610xf32> to vector<8x610xf32>
    %116 = arith.mulf %113, %115 : vector<8x610xf32>
    %cst_133 = arith.constant dense<0.000000e+00> : vector<8xf32>
    %117 = vector.multi_reduction <add>, %116, %cst_133 [1] : vector<8x610xf32> to vector<8xf32>
    %118 = vector.shape_cast %117 : vector<8xf32> to vector<8x1xf32>
    %cst_134 = arith.constant 5.120000e+02 : f32
    %119 = vector.broadcast %cst_134 : f32 to vector<8x1xf32>
    %120 = arith.divf %118, %119 : vector<8x1xf32>
    %121 = vector.broadcast %120 : vector<8x1xf32> to vector<8x610xf32>
    %122 = arith.subf %113, %121 : vector<8x610xf32>
    %123 = arith.mulf %122, %122 : vector<8x610xf32>
    %124 = vector.broadcast %114 : vector<1x610xf32> to vector<8x610xf32>
    %125 = arith.mulf %123, %124 : vector<8x610xf32>
    %cst_135 = arith.constant dense<0.000000e+00> : vector<8xf32>
    %126 = vector.multi_reduction <add>, %125, %cst_135 [1] : vector<8x610xf32> to vector<8xf32>
    %127 = vector.shape_cast %126 : vector<8xf32> to vector<8x1xf32>
    %cst_136 = arith.constant 5.120000e+02 : f32
    %128 = vector.broadcast %cst_136 : f32 to vector<8x1xf32>
    %129 = arith.divf %127, %128 : vector<8x1xf32>
    %c0_137 = arith.constant 0 : index
    %c0_138 = arith.constant 0 : index
    %130 = vector.load %arg3[%c0_137, %c0_138] : memref<8x1xf32, #tpu.memory_space<vmem>>, vector<8x1xf32>
    %cst_139 = arith.constant 9.99999974E-6 : f32
    %131 = vector.broadcast %cst_139 : f32 to vector<8x1xf32>
    %132 = arith.addf %129, %131 : vector<8x1xf32>
    %133 = math.rsqrt %132 : vector<8x1xf32>
    %134 = arith.mulf %130, %133 : vector<8x1xf32>
    %c0_140 = arith.constant 0 : index
    %c0_141 = arith.constant 0 : index
    %135 = vector.load %arg4[%c0_140, %c0_141] : memref<8x1xf32, #tpu.memory_space<vmem>>, vector<8x1xf32>
    %136 = arith.mulf %120, %134 : vector<8x1xf32>
    %137 = arith.subf %135, %136 : vector<8x1xf32>
    %138 = vector.broadcast %134 : vector<8x1xf32> to vector<8x610xf32>
    %139 = arith.mulf %113, %138 : vector<8x610xf32>
    %140 = vector.broadcast %137 : vector<8x1xf32> to vector<8x610xf32>
    %141 = arith.addf %139, %140 : vector<8x610xf32>
    %cst_142 = arith.constant 0.000000e+00 : f32
    %142 = vector.broadcast %cst_142 : f32 to vector<8x610xf32>
    %143 = arith.maximumf %141, %142 : vector<8x610xf32>
    %cst_143 = arith.constant 0.000000e+00 : f32
    %144 = vector.broadcast %cst_143 : f32 to vector<8x648xf32>
    %c0_144 = arith.constant 0 : index
    %c0_145 = arith.constant 0 : index
    %145 = vector.load %arg21[%c0_144, %c0_145] : memref<8x648xf32, #tpu.memory_space<vmem>>, vector<8x648xf32>
    tpu.vector_store %arg21[%c0_144, %c0_145], %144 {strides = array<i32>} : memref<8x648xf32, #tpu.memory_space<vmem>>, vector<8x648xf32>,
    %146 = vector.broadcast %114 : vector<1x610xf32> to vector<8x610xf32>
    %147 = arith.mulf %143, %146 : vector<8x610xf32>
    %c0_146 = arith.constant 0 : index
    %c19_147 = arith.constant 19 : index
    %148 = vector.load %arg21[%c0_146, %c19_147] : memref<8x648xf32, #tpu.memory_space<vmem>>, vector<8x610xf32>
    tpu.vector_store %arg21[%c0_146, %c19_147], %147 {strides = array<i32>} : memref<8x648xf32, #tpu.memory_space<vmem>>, vector<8x610xf32>,
    %c0_148 = arith.constant 0 : index
    %c0_149 = arith.constant 0 : index
    %149 = vector.load %arg21[%c0_148, %c0_149] : memref<8x648xf32, #tpu.memory_space<vmem>>, vector<8x610xf32>
    %c0_150 = arith.constant 0 : index
    %c1_151 = arith.constant 1 : index
    %150 = vector.load %arg21[%c0_150, %c1_151] : memref<8x648xf32, #tpu.memory_space<vmem>>, vector<8x610xf32>
    %c0_152 = arith.constant 0 : index
    %c2_153 = arith.constant 2 : index
    %151 = vector.load %arg21[%c0_152, %c2_153] : memref<8x648xf32, #tpu.memory_space<vmem>>, vector<8x610xf32>
    %c0_154 = arith.constant 0 : index
    %c18_155 = arith.constant 18 : index
    %152 = vector.load %arg21[%c0_154, %c18_155] : memref<8x648xf32, #tpu.memory_space<vmem>>, vector<8x610xf32>
    %c0_156 = arith.constant 0 : index
    %c19_157 = arith.constant 19 : index
    %153 = vector.load %arg21[%c0_156, %c19_157] : memref<8x648xf32, #tpu.memory_space<vmem>>, vector<8x610xf32>
    %c0_158 = arith.constant 0 : index
    %c20_159 = arith.constant 20 : index
    %154 = vector.load %arg21[%c0_158, %c20_159] : memref<8x648xf32, #tpu.memory_space<vmem>>, vector<8x610xf32>
    %c0_160 = arith.constant 0 : index
    %c36_161 = arith.constant 36 : index
    %155 = vector.load %arg21[%c0_160, %c36_161] : memref<8x648xf32, #tpu.memory_space<vmem>>, vector<8x610xf32>
    %c0_162 = arith.constant 0 : index
    %c37_163 = arith.constant 37 : index
    %156 = vector.load %arg21[%c0_162, %c37_163] : memref<8x648xf32, #tpu.memory_space<vmem>>, vector<8x610xf32>
    %c0_164 = arith.constant 0 : index
    %c38_165 = arith.constant 38 : index
    %157 = vector.load %arg21[%c0_164, %c38_165] : memref<8x648xf32, #tpu.memory_space<vmem>>, vector<8x610xf32>
    %158 = tpu.concatenate %149, %150, %151, %152, %153, %154, %155, %156, %157 in 0 : vector<8x610xf32>, vector<8x610xf32>, vector<8x610xf32>, vector<8x610xf32>, vector<8x610xf32>, vector<8x610xf32>, vector<8x610xf32>, vector<8x610xf32>, vector<8x610xf32> -> vector<72x610xf32>
    %159 = arith.truncf %158 : vector<72x610xf32> to vector<72x610xbf16>
    %c0_166 = arith.constant 0 : index
    %c0_167 = arith.constant 0 : index
    %160 = vector.load %arg6[%c0_166, %c0_167] : memref<8x72xbf16, #tpu.memory_space<vmem>>, vector<8x72xbf16>
    %cst_168 = arith.constant dense<0.000000e+00> : vector<8x610xf32>
    %161 = tpu.matmul %160, %159, %cst_168 {dimension_numbers = #tpu.dot_dimension_numbers<[1], [0], [0], [1], [0, 0, 1, 1], [], []>} : vector<8x72xbf16>, vector<72x610xbf16>, vector<8x610xf32> -> vector<8x610xf32>
    %c0_169 = arith.constant 0 : index
    %c0_170 = arith.constant 0 : index
    %162 = vector.load %arg7[%c0_169, %c0_170] : memref<8x1xf32, #tpu.memory_space<vmem>>, vector<8x1xf32>
    %163 = vector.broadcast %162 : vector<8x1xf32> to vector<8x610xf32>
    %164 = arith.addf %161, %163 : vector<8x610xf32>
    %c0_171 = arith.constant 0 : index
    %c0_172 = arith.constant 0 : index
    %165 = vector.load %arg10[%c0_171, %c0_172] : memref<1x610xf32, #tpu.memory_space<vmem>>, vector<1x610xf32>
    %166 = vector.broadcast %165 : vector<1x610xf32> to vector<8x610xf32>
    %167 = arith.mulf %164, %166 : vector<8x610xf32>
    %cst_173 = arith.constant dense<0.000000e+00> : vector<8xf32>
    %168 = vector.multi_reduction <add>, %167, %cst_173 [1] : vector<8x610xf32> to vector<8xf32>
    %169 = vector.shape_cast %168 : vector<8xf32> to vector<8x1xf32>
    %cst_174 = arith.constant 5.120000e+02 : f32
    %170 = vector.broadcast %cst_174 : f32 to vector<8x1xf32>
    %171 = arith.divf %169, %170 : vector<8x1xf32>
    %172 = vector.broadcast %171 : vector<8x1xf32> to vector<8x610xf32>
    %173 = arith.subf %164, %172 : vector<8x610xf32>
    %174 = arith.mulf %173, %173 : vector<8x610xf32>
    %175 = vector.broadcast %165 : vector<1x610xf32> to vector<8x610xf32>
    %176 = arith.mulf %174, %175 : vector<8x610xf32>
    %cst_175 = arith.constant dense<0.000000e+00> : vector<8xf32>
    %177 = vector.multi_reduction <add>, %176, %cst_175 [1] : vector<8x610xf32> to vector<8xf32>
    %178 = vector.shape_cast %177 : vector<8xf32> to vector<8x1xf32>
    %cst_176 = arith.constant 5.120000e+02 : f32
    %179 = vector.broadcast %cst_176 : f32 to vector<8x1xf32>
    %180 = arith.divf %178, %179 : vector<8x1xf32>
    %c0_177 = arith.constant 0 : index
    %c0_178 = arith.constant 0 : index
    %181 = vector.load %arg8[%c0_177, %c0_178] : memref<8x1xf32, #tpu.memory_space<vmem>>, vector<8x1xf32>
    %cst_179 = arith.constant 9.99999974E-6 : f32
    %182 = vector.broadcast %cst_179 : f32 to vector<8x1xf32>
    %183 = arith.addf %180, %182 : vector<8x1xf32>
    %184 = math.rsqrt %183 : vector<8x1xf32>
    %185 = arith.mulf %181, %184 : vector<8x1xf32>
    %c0_180 = arith.constant 0 : index
    %c0_181 = arith.constant 0 : index
    %186 = vector.load %arg9[%c0_180, %c0_181] : memref<8x1xf32, #tpu.memory_space<vmem>>, vector<8x1xf32>
    %187 = arith.mulf %171, %185 : vector<8x1xf32>
    %188 = arith.subf %186, %187 : vector<8x1xf32>
    %189 = vector.broadcast %185 : vector<8x1xf32> to vector<8x610xf32>
    %190 = arith.mulf %164, %189 : vector<8x610xf32>
    %191 = vector.broadcast %188 : vector<8x1xf32> to vector<8x610xf32>
    %192 = arith.addf %190, %191 : vector<8x610xf32>
    %cst_182 = arith.constant 0.000000e+00 : f32
    %193 = vector.broadcast %cst_182 : f32 to vector<8x610xf32>
    %194 = arith.maximumf %192, %193 : vector<8x610xf32>
    %cst_183 = arith.constant 0.000000e+00 : f32
    %195 = vector.broadcast %cst_183 : f32 to vector<8x648xf32>
    %c0_184 = arith.constant 0 : index
    %c0_185 = arith.constant 0 : index
    %196 = vector.load %arg22[%c0_184, %c0_185] : memref<8x648xf32, #tpu.memory_space<vmem>>, vector<8x648xf32>
    tpu.vector_store %arg22[%c0_184, %c0_185], %195 {strides = array<i32>} : memref<8x648xf32, #tpu.memory_space<vmem>>, vector<8x648xf32>,
    %197 = vector.broadcast %165 : vector<1x610xf32> to vector<8x610xf32>
    %198 = arith.mulf %194, %197 : vector<8x610xf32>
    %c0_186 = arith.constant 0 : index
    %c19_187 = arith.constant 19 : index
    %199 = vector.load %arg22[%c0_186, %c19_187] : memref<8x648xf32, #tpu.memory_space<vmem>>, vector<8x610xf32>
    tpu.vector_store %arg22[%c0_186, %c19_187], %198 {strides = array<i32>} : memref<8x648xf32, #tpu.memory_space<vmem>>, vector<8x610xf32>,
    %c0_188 = arith.constant 0 : index
    %c0_189 = arith.constant 0 : index
    %200 = vector.load %arg22[%c0_188, %c0_189] : memref<8x648xf32, #tpu.memory_space<vmem>>, vector<8x610xf32>
    %c0_190 = arith.constant 0 : index
    %c1_191 = arith.constant 1 : index
    %201 = vector.load %arg22[%c0_190, %c1_191] : memref<8x648xf32, #tpu.memory_space<vmem>>, vector<8x610xf32>
    %c0_192 = arith.constant 0 : index
    %c2_193 = arith.constant 2 : index
    %202 = vector.load %arg22[%c0_192, %c2_193] : memref<8x648xf32, #tpu.memory_space<vmem>>, vector<8x610xf32>
    %c0_194 = arith.constant 0 : index
    %c18_195 = arith.constant 18 : index
    %203 = vector.load %arg22[%c0_194, %c18_195] : memref<8x648xf32, #tpu.memory_space<vmem>>, vector<8x610xf32>
    %c0_196 = arith.constant 0 : index
    %c19_197 = arith.constant 19 : index
    %204 = vector.load %arg22[%c0_196, %c19_197] : memref<8x648xf32, #tpu.memory_space<vmem>>, vector<8x610xf32>
    %c0_198 = arith.constant 0 : index
    %c20_199 = arith.constant 20 : index
    %205 = vector.load %arg22[%c0_198, %c20_199] : memref<8x648xf32, #tpu.memory_space<vmem>>, vector<8x610xf32>
    %c0_200 = arith.constant 0 : index
    %c36_201 = arith.constant 36 : index
    %206 = vector.load %arg22[%c0_200, %c36_201] : memref<8x648xf32, #tpu.memory_space<vmem>>, vector<8x610xf32>
    %c0_202 = arith.constant 0 : index
    %c37_203 = arith.constant 37 : index
    %207 = vector.load %arg22[%c0_202, %c37_203] : memref<8x648xf32, #tpu.memory_space<vmem>>, vector<8x610xf32>
    %c0_204 = arith.constant 0 : index
    %c38_205 = arith.constant 38 : index
    %208 = vector.load %arg22[%c0_204, %c38_205] : memref<8x648xf32, #tpu.memory_space<vmem>>, vector<8x610xf32>
    %209 = tpu.concatenate %200, %201, %202, %203, %204, %205, %206, %207, %208 in 0 : vector<8x610xf32>, vector<8x610xf32>, vector<8x610xf32>, vector<8x610xf32>, vector<8x610xf32>, vector<8x610xf32>, vector<8x610xf32>, vector<8x610xf32>, vector<8x610xf32> -> vector<72x610xf32>
    %210 = arith.truncf %209 : vector<72x610xf32> to vector<72x610xbf16>
    %c0_206 = arith.constant 0 : index
    %c0_207 = arith.constant 0 : index
    %211 = vector.load %arg11[%c0_206, %c0_207] : memref<8x72xbf16, #tpu.memory_space<vmem>>, vector<8x72xbf16>
    %cst_208 = arith.constant dense<0.000000e+00> : vector<8x610xf32>
    %212 = tpu.matmul %211, %210, %cst_208 {dimension_numbers = #tpu.dot_dimension_numbers<[1], [0], [0], [1], [0, 0, 1, 1], [], []>} : vector<8x72xbf16>, vector<72x610xbf16>, vector<8x610xf32> -> vector<8x610xf32>
    %c0_209 = arith.constant 0 : index
    %c0_210 = arith.constant 0 : index
    %213 = vector.load %arg12[%c0_209, %c0_210] : memref<8x1xf32, #tpu.memory_space<vmem>>, vector<8x1xf32>
    %214 = vector.broadcast %213 : vector<8x1xf32> to vector<8x610xf32>
    %215 = arith.addf %212, %214 : vector<8x610xf32>
    %c0_211 = arith.constant 0 : index
    %c0_212 = arith.constant 0 : index
    %216 = vector.load %arg15[%c0_211, %c0_212] : memref<1x610xf32, #tpu.memory_space<vmem>>, vector<1x610xf32>
    %217 = vector.broadcast %216 : vector<1x610xf32> to vector<8x610xf32>
    %218 = arith.mulf %215, %217 : vector<8x610xf32>
    %cst_213 = arith.constant dense<0.000000e+00> : vector<8xf32>
    %219 = vector.multi_reduction <add>, %218, %cst_213 [1] : vector<8x610xf32> to vector<8xf32>
    %220 = vector.shape_cast %219 : vector<8xf32> to vector<8x1xf32>
    %cst_214 = arith.constant 5.120000e+02 : f32
    %221 = vector.broadcast %cst_214 : f32 to vector<8x1xf32>
    %222 = arith.divf %220, %221 : vector<8x1xf32>
    %223 = vector.broadcast %222 : vector<8x1xf32> to vector<8x610xf32>
    %224 = arith.subf %215, %223 : vector<8x610xf32>
    %225 = arith.mulf %224, %224 : vector<8x610xf32>
    %226 = vector.broadcast %216 : vector<1x610xf32> to vector<8x610xf32>
    %227 = arith.mulf %225, %226 : vector<8x610xf32>
    %cst_215 = arith.constant dense<0.000000e+00> : vector<8xf32>
    %228 = vector.multi_reduction <add>, %227, %cst_215 [1] : vector<8x610xf32> to vector<8xf32>
    %229 = vector.shape_cast %228 : vector<8xf32> to vector<8x1xf32>
    %cst_216 = arith.constant 5.120000e+02 : f32
    %230 = vector.broadcast %cst_216 : f32 to vector<8x1xf32>
    %231 = arith.divf %229, %230 : vector<8x1xf32>
    %c0_217 = arith.constant 0 : index
    %c0_218 = arith.constant 0 : index
    %232 = vector.load %arg13[%c0_217, %c0_218] : memref<8x1xf32, #tpu.memory_space<vmem>>, vector<8x1xf32>
    %cst_219 = arith.constant 9.99999974E-6 : f32
    %233 = vector.broadcast %cst_219 : f32 to vector<8x1xf32>
    %234 = arith.addf %231, %233 : vector<8x1xf32>
    %235 = math.rsqrt %234 : vector<8x1xf32>
    %236 = arith.mulf %232, %235 : vector<8x1xf32>
    %c0_220 = arith.constant 0 : index
    %c0_221 = arith.constant 0 : index
    %237 = vector.load %arg14[%c0_220, %c0_221] : memref<8x1xf32, #tpu.memory_space<vmem>>, vector<8x1xf32>
    %238 = arith.mulf %222, %236 : vector<8x1xf32>
    %239 = arith.subf %237, %238 : vector<8x1xf32>
    %240 = vector.broadcast %236 : vector<8x1xf32> to vector<8x610xf32>
    %241 = arith.mulf %215, %240 : vector<8x610xf32>
    %242 = vector.broadcast %239 : vector<8x1xf32> to vector<8x610xf32>
    %243 = arith.addf %241, %242 : vector<8x610xf32>
    %cst_222 = arith.constant 0.000000e+00 : f32
    %244 = vector.broadcast %cst_222 : f32 to vector<8x610xf32>
    %245 = arith.maximumf %243, %244 : vector<8x610xf32>
    %cst_223 = arith.constant 0.000000e+00 : f32
    %246 = vector.broadcast %cst_223 : f32 to vector<8x648xf32>
    %c0_224 = arith.constant 0 : index
    %c0_225 = arith.constant 0 : index
    %247 = vector.load %arg23[%c0_224, %c0_225] : memref<8x648xf32, #tpu.memory_space<vmem>>, vector<8x648xf32>
    tpu.vector_store %arg23[%c0_224, %c0_225], %246 {strides = array<i32>} : memref<8x648xf32, #tpu.memory_space<vmem>>, vector<8x648xf32>,
    %248 = vector.broadcast %216 : vector<1x610xf32> to vector<8x610xf32>
    %249 = arith.mulf %245, %248 : vector<8x610xf32>
    %c0_226 = arith.constant 0 : index
    %c19_227 = arith.constant 19 : index
    %250 = vector.load %arg23[%c0_226, %c19_227] : memref<8x648xf32, #tpu.memory_space<vmem>>, vector<8x610xf32>
    tpu.vector_store %arg23[%c0_226, %c19_227], %249 {strides = array<i32>} : memref<8x648xf32, #tpu.memory_space<vmem>>, vector<8x610xf32>,
    %c0_228 = arith.constant 0 : index
    %c0_229 = arith.constant 0 : index
    %251 = vector.load %arg23[%c0_228, %c0_229] : memref<8x648xf32, #tpu.memory_space<vmem>>, vector<8x610xf32>
    %c0_230 = arith.constant 0 : index
    %c1_231 = arith.constant 1 : index
    %252 = vector.load %arg23[%c0_230, %c1_231] : memref<8x648xf32, #tpu.memory_space<vmem>>, vector<8x610xf32>
    %c0_232 = arith.constant 0 : index
    %c2_233 = arith.constant 2 : index
    %253 = vector.load %arg23[%c0_232, %c2_233] : memref<8x648xf32, #tpu.memory_space<vmem>>, vector<8x610xf32>
    %c0_234 = arith.constant 0 : index
    %c18_235 = arith.constant 18 : index
    %254 = vector.load %arg23[%c0_234, %c18_235] : memref<8x648xf32, #tpu.memory_space<vmem>>, vector<8x610xf32>
    %c0_236 = arith.constant 0 : index
    %c19_237 = arith.constant 19 : index
    %255 = vector.load %arg23[%c0_236, %c19_237] : memref<8x648xf32, #tpu.memory_space<vmem>>, vector<8x610xf32>
    %c0_238 = arith.constant 0 : index
    %c20_239 = arith.constant 20 : index
    %256 = vector.load %arg23[%c0_238, %c20_239] : memref<8x648xf32, #tpu.memory_space<vmem>>, vector<8x610xf32>
    %c0_240 = arith.constant 0 : index
    %c36_241 = arith.constant 36 : index
    %257 = vector.load %arg23[%c0_240, %c36_241] : memref<8x648xf32, #tpu.memory_space<vmem>>, vector<8x610xf32>
    %c0_242 = arith.constant 0 : index
    %c37_243 = arith.constant 37 : index
    %258 = vector.load %arg23[%c0_242, %c37_243] : memref<8x648xf32, #tpu.memory_space<vmem>>, vector<8x610xf32>
    %c0_244 = arith.constant 0 : index
    %c38_245 = arith.constant 38 : index
    %259 = vector.load %arg23[%c0_244, %c38_245] : memref<8x648xf32, #tpu.memory_space<vmem>>, vector<8x610xf32>
    %260 = tpu.concatenate %251, %252, %253, %254, %255, %256, %257, %258, %259 in 0 : vector<8x610xf32>, vector<8x610xf32>, vector<8x610xf32>, vector<8x610xf32>, vector<8x610xf32>, vector<8x610xf32>, vector<8x610xf32>, vector<8x610xf32>, vector<8x610xf32> -> vector<72x610xf32>
    %261 = arith.truncf %260 : vector<72x610xf32> to vector<72x610xbf16>
    %c0_246 = arith.constant 0 : index
    %c0_247 = arith.constant 0 : index
    %262 = vector.load %arg16[%c0_246, %c0_247] : memref<1x72xbf16, #tpu.memory_space<vmem>>, vector<1x72xbf16>
    %cst_248 = arith.constant dense<0.000000e+00> : vector<1x610xf32>
    %263 = tpu.matmul %262, %261, %cst_248 {dimension_numbers = #tpu.dot_dimension_numbers<[1], [0], [0], [1], [0, 0, 1, 1], [], []>} : vector<1x72xbf16>, vector<72x610xbf16>, vector<1x610xf32> -> vector<1x610xf32>
    %c0_249 = arith.constant 0 : index
    %c0_250 = arith.constant 0 : index
    %264 = vector.load %arg17[%c0_249, %c0_250] : memref<1x1xf32, #tpu.memory_space<vmem>>, vector<1x1xf32>
    %265 = vector.broadcast %264 : vector<1x1xf32> to vector<1x610xf32>
    %266 = arith.addf %263, %265 : vector<1x610xf32>
    %267 = arith.negf %266 : vector<1x610xf32>
    %268 = math.exp %267 : vector<1x610xf32>
    %cst_251 = arith.constant 1.000000e+00 : f32
    %269 = vector.broadcast %cst_251 : f32 to vector<1x610xf32>
    %270 = arith.addf %269, %268 : vector<1x610xf32>
    %271 = arith.divf %269, %270 : vector<1x610xf32>
    %272 = vector.extract_strided_slice %271 {offsets = [0, 0], sizes = [1, 16], strides = [1, 1]} : vector<1x610xf32> to vector<1x16xf32>
    %c0_252 = arith.constant 0 : index
    %c0_253 = arith.constant 0 : index
    %c0_254 = arith.constant 0 : index
    %273 = vector.load %arg19[%c0_252, %c0_253, %c0_254] : memref<2x1x256xf32, #tpu.memory_space<vmem>>, vector<1x1x16xf32>
    %274 = vector.shape_cast %273 : vector<1x1x16xf32> to vector<1x16xf32>
    %275 = vector.shape_cast %272 : vector<1x16xf32> to vector<1x1x16xf32>
    tpu.vector_store %arg19[%c0_252, %c0_253, %c0_254], %275 {strides = array<i32>} : memref<2x1x256xf32, #tpu.memory_space<vmem>>, vector<1x1x16xf32>,
    %276 = vector.extract_strided_slice %271 {offsets = [0, 18], sizes = [1, 16], strides = [1, 1]} : vector<1x610xf32> to vector<1x16xf32>
    %c0_255 = arith.constant 0 : index
    %c0_256 = arith.constant 0 : index
    %c16_257 = arith.constant 16 : index
    %277 = vector.load %arg19[%c0_255, %c0_256, %c16_257] : memref<2x1x256xf32, #tpu.memory_space<vmem>>, vector<1x1x16xf32>
    %278 = vector.shape_cast %277 : vector<1x1x16xf32> to vector<1x16xf32>
    %279 = vector.shape_cast %276 : vector<1x16xf32> to vector<1x1x16xf32>
    tpu.vector_store %arg19[%c0_255, %c0_256, %c16_257], %279 {strides = array<i32>} : memref<2x1x256xf32, #tpu.memory_space<vmem>>, vector<1x1x16xf32>,
    %280 = vector.extract_strided_slice %271 {offsets = [0, 36], sizes = [1, 16], strides = [1, 1]} : vector<1x610xf32> to vector<1x16xf32>
    %c0_258 = arith.constant 0 : index
    %c0_259 = arith.constant 0 : index
    %c32_260 = arith.constant 32 : index
    %281 = vector.load %arg19[%c0_258, %c0_259, %c32_260] : memref<2x1x256xf32, #tpu.memory_space<vmem>>, vector<1x1x16xf32>
    %282 = vector.shape_cast %281 : vector<1x1x16xf32> to vector<1x16xf32>
    %283 = vector.shape_cast %280 : vector<1x16xf32> to vector<1x1x16xf32>
    tpu.vector_store %arg19[%c0_258, %c0_259, %c32_260], %283 {strides = array<i32>} : memref<2x1x256xf32, #tpu.memory_space<vmem>>, vector<1x1x16xf32>,
    %284 = vector.extract_strided_slice %271 {offsets = [0, 54], sizes = [1, 16], strides = [1, 1]} : vector<1x610xf32> to vector<1x16xf32>
    %c0_261 = arith.constant 0 : index
    %c0_262 = arith.constant 0 : index
    %c48_263 = arith.constant 48 : index
    %285 = vector.load %arg19[%c0_261, %c0_262, %c48_263] : memref<2x1x256xf32, #tpu.memory_space<vmem>>, vector<1x1x16xf32>
    %286 = vector.shape_cast %285 : vector<1x1x16xf32> to vector<1x16xf32>
    %287 = vector.shape_cast %284 : vector<1x16xf32> to vector<1x1x16xf32>
    tpu.vector_store %arg19[%c0_261, %c0_262, %c48_263], %287 {strides = array<i32>} : memref<2x1x256xf32, #tpu.memory_space<vmem>>, vector<1x1x16xf32>,
    %288 = vector.extract_strided_slice %271 {offsets = [0, 72], sizes = [1, 16], strides = [1, 1]} : vector<1x610xf32> to vector<1x16xf32>
    %c0_264 = arith.constant 0 : index
    %c0_265 = arith.constant 0 : index
    %c64_266 = arith.constant 64 : index
    %289 = vector.load %arg19[%c0_264, %c0_265, %c64_266] : memref<2x1x256xf32, #tpu.memory_space<vmem>>, vector<1x1x16xf32>
    %290 = vector.shape_cast %289 : vector<1x1x16xf32> to vector<1x16xf32>
    %291 = vector.shape_cast %288 : vector<1x16xf32> to vector<1x1x16xf32>
    tpu.vector_store %arg19[%c0_264, %c0_265, %c64_266], %291 {strides = array<i32>} : memref<2x1x256xf32, #tpu.memory_space<vmem>>, vector<1x1x16xf32>,
    %292 = vector.extract_strided_slice %271 {offsets = [0, 90], sizes = [1, 16], strides = [1, 1]} : vector<1x610xf32> to vector<1x16xf32>
    %c0_267 = arith.constant 0 : index
    %c0_268 = arith.constant 0 : index
    %c80_269 = arith.constant 80 : index
    %293 = vector.load %arg19[%c0_267, %c0_268, %c80_269] : memref<2x1x256xf32, #tpu.memory_space<vmem>>, vector<1x1x16xf32>
    %294 = vector.shape_cast %293 : vector<1x1x16xf32> to vector<1x16xf32>
    %295 = vector.shape_cast %292 : vector<1x16xf32> to vector<1x1x16xf32>
    tpu.vector_store %arg19[%c0_267, %c0_268, %c80_269], %295 {strides = array<i32>} : memref<2x1x256xf32, #tpu.memory_space<vmem>>, vector<1x1x16xf32>,
    %296 = vector.extract_strided_slice %271 {offsets = [0, 108], sizes = [1, 16], strides = [1, 1]} : vector<1x610xf32> to vector<1x16xf32>
    %c0_270 = arith.constant 0 : index
    %c0_271 = arith.constant 0 : index
    %c96_272 = arith.constant 96 : index
    %297 = vector.load %arg19[%c0_270, %c0_271, %c96_272] : memref<2x1x256xf32, #tpu.memory_space<vmem>>, vector<1x1x16xf32>
    %298 = vector.shape_cast %297 : vector<1x1x16xf32> to vector<1x16xf32>
    %299 = vector.shape_cast %296 : vector<1x16xf32> to vector<1x1x16xf32>
    tpu.vector_store %arg19[%c0_270, %c0_271, %c96_272], %299 {strides = array<i32>} : memref<2x1x256xf32, #tpu.memory_space<vmem>>, vector<1x1x16xf32>,
    %300 = vector.extract_strided_slice %271 {offsets = [0, 126], sizes = [1, 16], strides = [1, 1]} : vector<1x610xf32> to vector<1x16xf32>
    %c0_273 = arith.constant 0 : index
    %c0_274 = arith.constant 0 : index
    %c112_275 = arith.constant 112 : index
    %301 = vector.load %arg19[%c0_273, %c0_274, %c112_275] : memref<2x1x256xf32, #tpu.memory_space<vmem>>, vector<1x1x16xf32>
    %302 = vector.shape_cast %301 : vector<1x1x16xf32> to vector<1x16xf32>
    %303 = vector.shape_cast %300 : vector<1x16xf32> to vector<1x1x16xf32>
    tpu.vector_store %arg19[%c0_273, %c0_274, %c112_275], %303 {strides = array<i32>} : memref<2x1x256xf32, #tpu.memory_space<vmem>>, vector<1x1x16xf32>,
    %304 = vector.extract_strided_slice %271 {offsets = [0, 144], sizes = [1, 16], strides = [1, 1]} : vector<1x610xf32> to vector<1x16xf32>
    %c0_276 = arith.constant 0 : index
    %c0_277 = arith.constant 0 : index
    %c128_278 = arith.constant 128 : index
    %305 = vector.load %arg19[%c0_276, %c0_277, %c128_278] : memref<2x1x256xf32, #tpu.memory_space<vmem>>, vector<1x1x16xf32>
    %306 = vector.shape_cast %305 : vector<1x1x16xf32> to vector<1x16xf32>
    %307 = vector.shape_cast %304 : vector<1x16xf32> to vector<1x1x16xf32>
    tpu.vector_store %arg19[%c0_276, %c0_277, %c128_278], %307 {strides = array<i32>} : memref<2x1x256xf32, #tpu.memory_space<vmem>>, vector<1x1x16xf32>,
    %308 = vector.extract_strided_slice %271 {offsets = [0, 162], sizes = [1, 16], strides = [1, 1]} : vector<1x610xf32> to vector<1x16xf32>
    %c0_279 = arith.constant 0 : index
    %c0_280 = arith.constant 0 : index
    %c144_281 = arith.constant 144 : index
    %309 = vector.load %arg19[%c0_279, %c0_280, %c144_281] : memref<2x1x256xf32, #tpu.memory_space<vmem>>, vector<1x1x16xf32>
    %310 = vector.shape_cast %309 : vector<1x1x16xf32> to vector<1x16xf32>
    %311 = vector.shape_cast %308 : vector<1x16xf32> to vector<1x1x16xf32>
    tpu.vector_store %arg19[%c0_279, %c0_280, %c144_281], %311 {strides = array<i32>} : memref<2x1x256xf32, #tpu.memory_space<vmem>>, vector<1x1x16xf32>,
    %312 = vector.extract_strided_slice %271 {offsets = [0, 180], sizes = [1, 16], strides = [1, 1]} : vector<1x610xf32> to vector<1x16xf32>
    %c0_282 = arith.constant 0 : index
    %c0_283 = arith.constant 0 : index
    %c160_284 = arith.constant 160 : index
    %313 = vector.load %arg19[%c0_282, %c0_283, %c160_284] : memref<2x1x256xf32, #tpu.memory_space<vmem>>, vector<1x1x16xf32>
    %314 = vector.shape_cast %313 : vector<1x1x16xf32> to vector<1x16xf32>
    %315 = vector.shape_cast %312 : vector<1x16xf32> to vector<1x1x16xf32>
    tpu.vector_store %arg19[%c0_282, %c0_283, %c160_284], %315 {strides = array<i32>} : memref<2x1x256xf32, #tpu.memory_space<vmem>>, vector<1x1x16xf32>,
    %316 = vector.extract_strided_slice %271 {offsets = [0, 198], sizes = [1, 16], strides = [1, 1]} : vector<1x610xf32> to vector<1x16xf32>
    %c0_285 = arith.constant 0 : index
    %c0_286 = arith.constant 0 : index
    %c176_287 = arith.constant 176 : index
    %317 = vector.load %arg19[%c0_285, %c0_286, %c176_287] : memref<2x1x256xf32, #tpu.memory_space<vmem>>, vector<1x1x16xf32>
    %318 = vector.shape_cast %317 : vector<1x1x16xf32> to vector<1x16xf32>
    %319 = vector.shape_cast %316 : vector<1x16xf32> to vector<1x1x16xf32>
    tpu.vector_store %arg19[%c0_285, %c0_286, %c176_287], %319 {strides = array<i32>} : memref<2x1x256xf32, #tpu.memory_space<vmem>>, vector<1x1x16xf32>,
    %320 = vector.extract_strided_slice %271 {offsets = [0, 216], sizes = [1, 16], strides = [1, 1]} : vector<1x610xf32> to vector<1x16xf32>
    %c0_288 = arith.constant 0 : index
    %c0_289 = arith.constant 0 : index
    %c192_290 = arith.constant 192 : index
    %321 = vector.load %arg19[%c0_288, %c0_289, %c192_290] : memref<2x1x256xf32, #tpu.memory_space<vmem>>, vector<1x1x16xf32>
    %322 = vector.shape_cast %321 : vector<1x1x16xf32> to vector<1x16xf32>
    %323 = vector.shape_cast %320 : vector<1x16xf32> to vector<1x1x16xf32>
    tpu.vector_store %arg19[%c0_288, %c0_289, %c192_290], %323 {strides = array<i32>} : memref<2x1x256xf32, #tpu.memory_space<vmem>>, vector<1x1x16xf32>,
    %324 = vector.extract_strided_slice %271 {offsets = [0, 234], sizes = [1, 16], strides = [1, 1]} : vector<1x610xf32> to vector<1x16xf32>
    %c0_291 = arith.constant 0 : index
    %c0_292 = arith.constant 0 : index
    %c208_293 = arith.constant 208 : index
    %325 = vector.load %arg19[%c0_291, %c0_292, %c208_293] : memref<2x1x256xf32, #tpu.memory_space<vmem>>, vector<1x1x16xf32>
    %326 = vector.shape_cast %325 : vector<1x1x16xf32> to vector<1x16xf32>
    %327 = vector.shape_cast %324 : vector<1x16xf32> to vector<1x1x16xf32>
    tpu.vector_store %arg19[%c0_291, %c0_292, %c208_293], %327 {strides = array<i32>} : memref<2x1x256xf32, #tpu.memory_space<vmem>>, vector<1x1x16xf32>,
    %328 = vector.extract_strided_slice %271 {offsets = [0, 252], sizes = [1, 16], strides = [1, 1]} : vector<1x610xf32> to vector<1x16xf32>
    %c0_294 = arith.constant 0 : index
    %c0_295 = arith.constant 0 : index
    %c224_296 = arith.constant 224 : index
    %329 = vector.load %arg19[%c0_294, %c0_295, %c224_296] : memref<2x1x256xf32, #tpu.memory_space<vmem>>, vector<1x1x16xf32>
    %330 = vector.shape_cast %329 : vector<1x1x16xf32> to vector<1x16xf32>
    %331 = vector.shape_cast %328 : vector<1x16xf32> to vector<1x1x16xf32>
    tpu.vector_store %arg19[%c0_294, %c0_295, %c224_296], %331 {strides = array<i32>} : memref<2x1x256xf32, #tpu.memory_space<vmem>>, vector<1x1x16xf32>,
    %332 = vector.extract_strided_slice %271 {offsets = [0, 270], sizes = [1, 16], strides = [1, 1]} : vector<1x610xf32> to vector<1x16xf32>
    %c0_297 = arith.constant 0 : index
    %c0_298 = arith.constant 0 : index
    %c240_299 = arith.constant 240 : index
    %333 = vector.load %arg19[%c0_297, %c0_298, %c240_299] : memref<2x1x256xf32, #tpu.memory_space<vmem>>, vector<1x1x16xf32>
    %334 = vector.shape_cast %333 : vector<1x1x16xf32> to vector<1x16xf32>
    %335 = vector.shape_cast %332 : vector<1x16xf32> to vector<1x1x16xf32>
    tpu.vector_store %arg19[%c0_297, %c0_298, %c240_299], %335 {strides = array<i32>} : memref<2x1x256xf32, #tpu.memory_space<vmem>>, vector<1x1x16xf32>,
    %336 = vector.extract_strided_slice %271 {offsets = [0, 324], sizes = [1, 16], strides = [1, 1]} : vector<1x610xf32> to vector<1x16xf32>
    %c1_300 = arith.constant 1 : index
    %c0_301 = arith.constant 0 : index
    %c0_302 = arith.constant 0 : index
    %337 = vector.load %arg19[%c1_300, %c0_301, %c0_302] : memref<2x1x256xf32, #tpu.memory_space<vmem>>, vector<1x1x16xf32>
    %338 = vector.shape_cast %337 : vector<1x1x16xf32> to vector<1x16xf32>
    %339 = vector.shape_cast %336 : vector<1x16xf32> to vector<1x1x16xf32>
    tpu.vector_store %arg19[%c1_300, %c0_301, %c0_302], %339 {strides = array<i32>} : memref<2x1x256xf32, #tpu.memory_space<vmem>>, vector<1x1x16xf32>,
    %340 = vector.extract_strided_slice %271 {offsets = [0, 342], sizes = [1, 16], strides = [1, 1]} : vector<1x610xf32> to vector<1x16xf32>
    %c1_303 = arith.constant 1 : index
    %c0_304 = arith.constant 0 : index
    %c16_305 = arith.constant 16 : index
    %341 = vector.load %arg19[%c1_303, %c0_304, %c16_305] : memref<2x1x256xf32, #tpu.memory_space<vmem>>, vector<1x1x16xf32>
    %342 = vector.shape_cast %341 : vector<1x1x16xf32> to vector<1x16xf32>
    %343 = vector.shape_cast %340 : vector<1x16xf32> to vector<1x1x16xf32>
    tpu.vector_store %arg19[%c1_303, %c0_304, %c16_305], %343 {strides = array<i32>} : memref<2x1x256xf32, #tpu.memory_space<vmem>>, vector<1x1x16xf32>,
    %344 = vector.extract_strided_slice %271 {offsets = [0, 360], sizes = [1, 16], strides = [1, 1]} : vector<1x610xf32> to vector<1x16xf32>
    %c1_306 = arith.constant 1 : index
    %c0_307 = arith.constant 0 : index
    %c32_308 = arith.constant 32 : index
    %345 = vector.load %arg19[%c1_306, %c0_307, %c32_308] : memref<2x1x256xf32, #tpu.memory_space<vmem>>, vector<1x1x16xf32>
    %346 = vector.shape_cast %345 : vector<1x1x16xf32> to vector<1x16xf32>
    %347 = vector.shape_cast %344 : vector<1x16xf32> to vector<1x1x16xf32>
    tpu.vector_store %arg19[%c1_306, %c0_307, %c32_308], %347 {strides = array<i32>} : memref<2x1x256xf32, #tpu.memory_space<vmem>>, vector<1x1x16xf32>,
    %348 = vector.extract_strided_slice %271 {offsets = [0, 378], sizes = [1, 16], strides = [1, 1]} : vector<1x610xf32> to vector<1x16xf32>
    %c1_309 = arith.constant 1 : index
    %c0_310 = arith.constant 0 : index
    %c48_311 = arith.constant 48 : index
    %349 = vector.load %arg19[%c1_309, %c0_310, %c48_311] : memref<2x1x256xf32, #tpu.memory_space<vmem>>, vector<1x1x16xf32>
    %350 = vector.shape_cast %349 : vector<1x1x16xf32> to vector<1x16xf32>
    %351 = vector.shape_cast %348 : vector<1x16xf32> to vector<1x1x16xf32>
    tpu.vector_store %arg19[%c1_309, %c0_310, %c48_311], %351 {strides = array<i32>} : memref<2x1x256xf32, #tpu.memory_space<vmem>>, vector<1x1x16xf32>,
    %352 = vector.extract_strided_slice %271 {offsets = [0, 396], sizes = [1, 16], strides = [1, 1]} : vector<1x610xf32> to vector<1x16xf32>
    %c1_312 = arith.constant 1 : index
    %c0_313 = arith.constant 0 : index
    %c64_314 = arith.constant 64 : index
    %353 = vector.load %arg19[%c1_312, %c0_313, %c64_314] : memref<2x1x256xf32, #tpu.memory_space<vmem>>, vector<1x1x16xf32>
    %354 = vector.shape_cast %353 : vector<1x1x16xf32> to vector<1x16xf32>
    %355 = vector.shape_cast %352 : vector<1x16xf32> to vector<1x1x16xf32>
    tpu.vector_store %arg19[%c1_312, %c0_313, %c64_314], %355 {strides = array<i32>} : memref<2x1x256xf32, #tpu.memory_space<vmem>>, vector<1x1x16xf32>,
    %356 = vector.extract_strided_slice %271 {offsets = [0, 414], sizes = [1, 16], strides = [1, 1]} : vector<1x610xf32> to vector<1x16xf32>
    %c1_315 = arith.constant 1 : index
    %c0_316 = arith.constant 0 : index
    %c80_317 = arith.constant 80 : index
    %357 = vector.load %arg19[%c1_315, %c0_316, %c80_317] : memref<2x1x256xf32, #tpu.memory_space<vmem>>, vector<1x1x16xf32>
    %358 = vector.shape_cast %357 : vector<1x1x16xf32> to vector<1x16xf32>
    %359 = vector.shape_cast %356 : vector<1x16xf32> to vector<1x1x16xf32>
    tpu.vector_store %arg19[%c1_315, %c0_316, %c80_317], %359 {strides = array<i32>} : memref<2x1x256xf32, #tpu.memory_space<vmem>>, vector<1x1x16xf32>,
    %360 = vector.extract_strided_slice %271 {offsets = [0, 432], sizes = [1, 16], strides = [1, 1]} : vector<1x610xf32> to vector<1x16xf32>
    %c1_318 = arith.constant 1 : index
    %c0_319 = arith.constant 0 : index
    %c96_320 = arith.constant 96 : index
    %361 = vector.load %arg19[%c1_318, %c0_319, %c96_320] : memref<2x1x256xf32, #tpu.memory_space<vmem>>, vector<1x1x16xf32>
    %362 = vector.shape_cast %361 : vector<1x1x16xf32> to vector<1x16xf32>
    %363 = vector.shape_cast %360 : vector<1x16xf32> to vector<1x1x16xf32>
    tpu.vector_store %arg19[%c1_318, %c0_319, %c96_320], %363 {strides = array<i32>} : memref<2x1x256xf32, #tpu.memory_space<vmem>>, vector<1x1x16xf32>,
    %364 = vector.extract_strided_slice %271 {offsets = [0, 450], sizes = [1, 16], strides = [1, 1]} : vector<1x610xf32> to vector<1x16xf32>
    %c1_321 = arith.constant 1 : index
    %c0_322 = arith.constant 0 : index
    %c112_323 = arith.constant 112 : index
    %365 = vector.load %arg19[%c1_321, %c0_322, %c112_323] : memref<2x1x256xf32, #tpu.memory_space<vmem>>, vector<1x1x16xf32>
    %366 = vector.shape_cast %365 : vector<1x1x16xf32> to vector<1x16xf32>
    %367 = vector.shape_cast %364 : vector<1x16xf32> to vector<1x1x16xf32>
    tpu.vector_store %arg19[%c1_321, %c0_322, %c112_323], %367 {strides = array<i32>} : memref<2x1x256xf32, #tpu.memory_space<vmem>>, vector<1x1x16xf32>,
    %368 = vector.extract_strided_slice %271 {offsets = [0, 468], sizes = [1, 16], strides = [1, 1]} : vector<1x610xf32> to vector<1x16xf32>
    %c1_324 = arith.constant 1 : index
    %c0_325 = arith.constant 0 : index
    %c128_326 = arith.constant 128 : index
    %369 = vector.load %arg19[%c1_324, %c0_325, %c128_326] : memref<2x1x256xf32, #tpu.memory_space<vmem>>, vector<1x1x16xf32>
    %370 = vector.shape_cast %369 : vector<1x1x16xf32> to vector<1x16xf32>
    %371 = vector.shape_cast %368 : vector<1x16xf32> to vector<1x1x16xf32>
    tpu.vector_store %arg19[%c1_324, %c0_325, %c128_326], %371 {strides = array<i32>} : memref<2x1x256xf32, #tpu.memory_space<vmem>>, vector<1x1x16xf32>,
    %372 = vector.extract_strided_slice %271 {offsets = [0, 486], sizes = [1, 16], strides = [1, 1]} : vector<1x610xf32> to vector<1x16xf32>
    %c1_327 = arith.constant 1 : index
    %c0_328 = arith.constant 0 : index
    %c144_329 = arith.constant 144 : index
    %373 = vector.load %arg19[%c1_327, %c0_328, %c144_329] : memref<2x1x256xf32, #tpu.memory_space<vmem>>, vector<1x1x16xf32>
    %374 = vector.shape_cast %373 : vector<1x1x16xf32> to vector<1x16xf32>
    %375 = vector.shape_cast %372 : vector<1x16xf32> to vector<1x1x16xf32>
    tpu.vector_store %arg19[%c1_327, %c0_328, %c144_329], %375 {strides = array<i32>} : memref<2x1x256xf32, #tpu.memory_space<vmem>>, vector<1x1x16xf32>,
    %376 = vector.extract_strided_slice %271 {offsets = [0, 504], sizes = [1, 16], strides = [1, 1]} : vector<1x610xf32> to vector<1x16xf32>
    %c1_330 = arith.constant 1 : index
    %c0_331 = arith.constant 0 : index
    %c160_332 = arith.constant 160 : index
    %377 = vector.load %arg19[%c1_330, %c0_331, %c160_332] : memref<2x1x256xf32, #tpu.memory_space<vmem>>, vector<1x1x16xf32>
    %378 = vector.shape_cast %377 : vector<1x1x16xf32> to vector<1x16xf32>
    %379 = vector.shape_cast %376 : vector<1x16xf32> to vector<1x1x16xf32>
    tpu.vector_store %arg19[%c1_330, %c0_331, %c160_332], %379 {strides = array<i32>} : memref<2x1x256xf32, #tpu.memory_space<vmem>>, vector<1x1x16xf32>,
    %380 = vector.extract_strided_slice %271 {offsets = [0, 522], sizes = [1, 16], strides = [1, 1]} : vector<1x610xf32> to vector<1x16xf32>
    %c1_333 = arith.constant 1 : index
    %c0_334 = arith.constant 0 : index
    %c176_335 = arith.constant 176 : index
    %381 = vector.load %arg19[%c1_333, %c0_334, %c176_335] : memref<2x1x256xf32, #tpu.memory_space<vmem>>, vector<1x1x16xf32>
    %382 = vector.shape_cast %381 : vector<1x1x16xf32> to vector<1x16xf32>
    %383 = vector.shape_cast %380 : vector<1x16xf32> to vector<1x1x16xf32>
    tpu.vector_store %arg19[%c1_333, %c0_334, %c176_335], %383 {strides = array<i32>} : memref<2x1x256xf32, #tpu.memory_space<vmem>>, vector<1x1x16xf32>,
    %384 = vector.extract_strided_slice %271 {offsets = [0, 540], sizes = [1, 16], strides = [1, 1]} : vector<1x610xf32> to vector<1x16xf32>
    %c1_336 = arith.constant 1 : index
    %c0_337 = arith.constant 0 : index
    %c192_338 = arith.constant 192 : index
    %385 = vector.load %arg19[%c1_336, %c0_337, %c192_338] : memref<2x1x256xf32, #tpu.memory_space<vmem>>, vector<1x1x16xf32>
    %386 = vector.shape_cast %385 : vector<1x1x16xf32> to vector<1x16xf32>
    %387 = vector.shape_cast %384 : vector<1x16xf32> to vector<1x1x16xf32>
    tpu.vector_store %arg19[%c1_336, %c0_337, %c192_338], %387 {strides = array<i32>} : memref<2x1x256xf32, #tpu.memory_space<vmem>>, vector<1x1x16xf32>,
    %388 = vector.extract_strided_slice %271 {offsets = [0, 558], sizes = [1, 16], strides = [1, 1]} : vector<1x610xf32> to vector<1x16xf32>
    %c1_339 = arith.constant 1 : index
    %c0_340 = arith.constant 0 : index
    %c208_341 = arith.constant 208 : index
    %389 = vector.load %arg19[%c1_339, %c0_340, %c208_341] : memref<2x1x256xf32, #tpu.memory_space<vmem>>, vector<1x1x16xf32>
    %390 = vector.shape_cast %389 : vector<1x1x16xf32> to vector<1x16xf32>
    %391 = vector.shape_cast %388 : vector<1x16xf32> to vector<1x1x16xf32>
    tpu.vector_store %arg19[%c1_339, %c0_340, %c208_341], %391 {strides = array<i32>} : memref<2x1x256xf32, #tpu.memory_space<vmem>>, vector<1x1x16xf32>,
    %392 = vector.extract_strided_slice %271 {offsets = [0, 576], sizes = [1, 16], strides = [1, 1]} : vector<1x610xf32> to vector<1x16xf32>
    %c1_342 = arith.constant 1 : index
    %c0_343 = arith.constant 0 : index
    %c224_344 = arith.constant 224 : index
    %393 = vector.load %arg19[%c1_342, %c0_343, %c224_344] : memref<2x1x256xf32, #tpu.memory_space<vmem>>, vector<1x1x16xf32>
    %394 = vector.shape_cast %393 : vector<1x1x16xf32> to vector<1x16xf32>
    %395 = vector.shape_cast %392 : vector<1x16xf32> to vector<1x1x16xf32>
    tpu.vector_store %arg19[%c1_342, %c0_343, %c224_344], %395 {strides = array<i32>} : memref<2x1x256xf32, #tpu.memory_space<vmem>>, vector<1x1x16xf32>,
    %396 = vector.extract_strided_slice %271 {offsets = [0, 594], sizes = [1, 16], strides = [1, 1]} : vector<1x610xf32> to vector<1x16xf32>
    %c1_345 = arith.constant 1 : index
    %c0_346 = arith.constant 0 : index
    %c240_347 = arith.constant 240 : index
    %397 = vector.load %arg19[%c1_345, %c0_346, %c240_347] : memref<2x1x256xf32, #tpu.memory_space<vmem>>, vector<1x1x16xf32>
    %398 = vector.shape_cast %397 : vector<1x1x16xf32> to vector<1x16xf32>
    %399 = vector.shape_cast %396 : vector<1x16xf32> to vector<1x1x16xf32>
    tpu.vector_store %arg19[%c1_345, %c0_346, %c240_347], %399 {strides = array<i32>} : memref<2x1x256xf32, #tpu.memory_space<vmem>>, vector<1x1x16xf32>,
    return
  }
}

</mosaic_0001>

<llo_original>
// kernel: tpu_custom_call.1
$region0: #{tpu_custom_call.1}
  #allocation0 [shape = 'u32[]', space=smem, size = 0x4, offset = 0x4, fixed_abs, tag = 'smem constant byte address 0x4 - core index']
  #allocation1 [shape = 'u32[144,128]{1,0:T(1,128)}', space=vmem, size = 0x12000, scoped, tag = 'internal scratch']
  #allocation2 [shape = 'f32[4,648]{1,0:T(4,128)}', space=vmem, size = 0x3000, scoped, tag = 'scratch operand']
  #allocation3 [shape = 'f32[8,648]{1,0:T(8,128)}', space=vmem, size = 0x6000, scoped, tag = 'scratch operand']
  #allocation4 [shape = 'f32[8,648]{1,0:T(8,128)}', space=vmem, size = 0x6000, scoped, tag = 'scratch operand']
  #allocation5 [shape = 'f32[8,648]{1,0:T(8,128)}', space=vmem, size = 0x6000, scoped, tag = 'scratch operand']
  #allocation6 [shape = 'f32[1,1]{1,0:T(1,128)S(1)}', space=vmem, size = 0x200, scoped, tag = 'scoped memory for tpu_custom_call.1']
  %s0 = inlined_call_operand.vmem [shape: f32[2,4,256], index: 0, kind: input, shape index: {}]
  %s1 = inlined_call_operand.vmem [shape: bf16[8,36], index: 1, kind: input, shape index: {}]
  %s2 = inlined_call_operand.vmem [shape: f32[8,1], index: 2, kind: input, shape index: {}]
  %s3 = inlined_call_operand.vmem [shape: f32[8,1], index: 3, kind: input, shape index: {}]
  %s4 = inlined_call_operand.vmem [shape: f32[8,1], index: 4, kind: input, shape index: {}]
  %s5 = inlined_call_operand.vmem [shape: f32[1,610], index: 5, kind: input, shape index: {}]
  %s6 = inlined_call_operand.vmem [shape: bf16[8,72], index: 6, kind: input, shape index: {}]
  %s7 = inlined_call_operand.vmem [shape: f32[8,1], index: 7, kind: input, shape index: {}]
  %s8 = inlined_call_operand.vmem [shape: f32[8,1], index: 8, kind: input, shape index: {}]
  %s9 = inlined_call_operand.vmem [shape: f32[8,1], index: 9, kind: input, shape index: {}]
  %s10 = inlined_call_operand.vmem [shape: f32[1,610], index: 10, kind: input, shape index: {}]
  %s11 = inlined_call_operand.vmem [shape: bf16[8,72], index: 11, kind: input, shape index: {}]
  %s12 = inlined_call_operand.vmem [shape: f32[8,1], index: 12, kind: input, shape index: {}]
  %s13 = inlined_call_operand.vmem [shape: f32[8,1], index: 13, kind: input, shape index: {}]
  %s14 = inlined_call_operand.vmem [shape: f32[8,1], index: 14, kind: input, shape index: {}]
  %s15 = inlined_call_operand.vmem [shape: f32[1,610], index: 15, kind: input, shape index: {}]
  %s16 = inlined_call_operand.vmem [shape: bf16[1,72], index: 16, kind: input, shape index: {}]
  %s17 = inlined_call_operand.<no memory space> [shape: f32[1,1], index: 17, kind: input, shape index: {}]
  %s18 = inlined_call_operand.vmem [shape: f32[1,610], index: 18, kind: input, shape index: {}]
  %s19 = inlined_call_operand.hbm [shape: f32[2,1,256], index: 19, kind: output, shape index: {}]
  %s20 = sld [smem:[#allocation0]]
  $region86: #{tpu_custom_call.1} parent=0
    _
  %s22 = ssub.s32 1, %s20
  %s23 = scalar_select 0, %s22, %s20
  %v24 = vstv %s17
  %25 = vst [vmem:[#allocation6] sm:$0x1] %v24
  $region1: #{tpu_custom_call.1} parent=0
    #allocation7 [shape = 'u8[2048]{0}', space=vmem, size = 0x800, scoped, tag = 'output window, operand 0, single buffered']
    #allocation8 [shape = 's32[1]{0}', space=sflag, size = 0x4, scoped, tag = 'scoped memory for tpu_custom_call.1']
    %26 = vsyncpa [#allocation8], 0
    // Predicated region
    $region2: #{tpu_custom_call.1} parent=1 // pred_check
      _
    $region3: #{tpu_custom_call.1} parent=1 // pred_check_branch
      %28 = sbr.rel (0) target = $region5
    $region4: #{tpu_custom_call.1} parent=1 // pred_region
      _
    $region5: #{tpu_custom_call.1} parent=1 // pred_fallthru
      _
    // Predicated region
    $region6: #{tpu_custom_call.1} parent=1 // pred_check
      _
    $region7: #{tpu_custom_call.1} parent=1 // pred_check_branch
      %30 = sbr.rel (0) target = $region9
    $region8: #{tpu_custom_call.1} parent=1 // pred_region
      _
    $region9: #{tpu_custom_call.1} parent=1 // pred_fallthru
      _
    // Predicated region
    $region10: #{tpu_custom_call.1} parent=1 // pred_check
      _
    $region11: #{tpu_custom_call.1} parent=1 // pred_check_branch
      %32 = sbr.rel (0) target = $region13
    $region12: #{tpu_custom_call.1} parent=1 // pred_region
      _
    $region13: #{tpu_custom_call.1} parent=1 // pred_fallthru
      _
    // Predicated region
    $region14: #{tpu_custom_call.1} parent=1 // pred_check
      _
    $region15: #{tpu_custom_call.1} parent=1 // pred_check_branch
      %34 = sbr.rel (0) target = $region17
    $region16: #{tpu_custom_call.1} parent=1 // pred_region
      _
    $region17: #{tpu_custom_call.1} parent=1 // pred_fallthru
      _
    // Predicated region
    $region18: #{tpu_custom_call.1} parent=1 // pred_check
      _
    $region19: #{tpu_custom_call.1} parent=1 // pred_check_branch
      %36 = sbr.rel (0) target = $region21
    $region20: #{tpu_custom_call.1} parent=1 // pred_region
      _
    $region21: #{tpu_custom_call.1} parent=1 // pred_fallthru
      _
    // Predicated region
    $region22: #{tpu_custom_call.1} parent=1 // pred_check
      _
    $region23: #{tpu_custom_call.1} parent=1 // pred_check_branch
      %38 = sbr.rel (0) target = $region25
    $region24: #{tpu_custom_call.1} parent=1 // pred_region
      _
    $region25: #{tpu_custom_call.1} parent=1 // pred_fallthru
      _
    // Predicated region
    $region26: #{tpu_custom_call.1} parent=1 // pred_check
      _
    $region27: #{tpu_custom_call.1} parent=1 // pred_check_branch
      %40 = sbr.rel (0) target = $region29
    $region28: #{tpu_custom_call.1} parent=1 // pred_region
      _
    $region29: #{tpu_custom_call.1} parent=1 // pred_fallthru
      _
    // Predicated region
    $region30: #{tpu_custom_call.1} parent=1 // pred_check
      _
    $region31: #{tpu_custom_call.1} parent=1 // pred_check_branch
      %42 = sbr.rel (0) target = $region33
    $region32: #{tpu_custom_call.1} parent=1 // pred_region
      _
    $region33: #{tpu_custom_call.1} parent=1 // pred_fallthru
      _
    // Predicated region
    $region34: #{tpu_custom_call.1} parent=1 // pred_check
      _
    $region35: #{tpu_custom_call.1} parent=1 // pred_check_branch
      %44 = sbr.rel (0) target = $region37
    $region36: #{tpu_custom_call.1} parent=1 // pred_region
      _
    $region37: #{tpu_custom_call.1} parent=1 // pred_fallthru
      _
    // Predicated region
    $region38: #{tpu_custom_call.1} parent=1 // pred_check
      _
    $region39: #{tpu_custom_call.1} parent=1 // pred_check_branch
      %46 = sbr.rel (0) target = $region41
    $region40: #{tpu_custom_call.1} parent=1 // pred_region
      _
    $region41: #{tpu_custom_call.1} parent=1 // pred_fallthru
      _
    // Predicated region
    $region42: #{tpu_custom_call.1} parent=1 // pred_check
      _
    $region43: #{tpu_custom_call.1} parent=1 // pred_check_branch
      %48 = sbr.rel (0) target = $region45
    $region44: #{tpu_custom_call.1} parent=1 // pred_region
      _
    $region45: #{tpu_custom_call.1} parent=1 // pred_fallthru
      _
    // Predicated region
    $region46: #{tpu_custom_call.1} parent=1 // pred_check
      _
    $region47: #{tpu_custom_call.1} parent=1 // pred_check_branch
      %50 = sbr.rel (0) target = $region49
    $region48: #{tpu_custom_call.1} parent=1 // pred_region
      _
    $region49: #{tpu_custom_call.1} parent=1 // pred_fallthru
      _
    // Predicated region
    $region50: #{tpu_custom_call.1} parent=1 // pred_check
      _
    $region51: #{tpu_custom_call.1} parent=1 // pred_check_branch
      %52 = sbr.rel (0) target = $region53
    $region52: #{tpu_custom_call.1} parent=1 // pred_region
      _
    $region53: #{tpu_custom_call.1} parent=1 // pred_fallthru
      _
    // Predicated region
    $region54: #{tpu_custom_call.1} parent=1 // pred_check
      _
    $region55: #{tpu_custom_call.1} parent=1 // pred_check_branch
      %54 = sbr.rel (0) target = $region57
    $region56: #{tpu_custom_call.1} parent=1 // pred_region
      _
    $region57: #{tpu_custom_call.1} parent=1 // pred_fallthru
      _
    // Predicated region
    $region58: #{tpu_custom_call.1} parent=1 // pred_check
      _
    $region59: #{tpu_custom_call.1} parent=1 // pred_check_branch
      %56 = sbr.rel (0) target = $region61
    $region60: #{tpu_custom_call.1} parent=1 // pred_region
      _
    $region61: #{tpu_custom_call.1} parent=1 // pred_fallthru
      _
    // Predicated region
    $region62: #{tpu_custom_call.1} parent=1 // pred_check
      _
    $region63: #{tpu_custom_call.1} parent=1 // pred_check_branch
      %58 = sbr.rel (0) target = $region65
    $region64: #{tpu_custom_call.1} parent=1 // pred_region
      _
    $region65: #{tpu_custom_call.1} parent=1 // pred_fallthru
      _
    // Predicated region
    $region66: #{tpu_custom_call.1} parent=1 // pred_check
      _
    $region67: #{tpu_custom_call.1} parent=1 // pred_check_branch
      %60 = sbr.rel (0) target = $region69
    $region68: #{tpu_custom_call.1} parent=1 // pred_region
      _
    $region69: #{tpu_custom_call.1} parent=1 // pred_fallthru
      _
    // Predicated region
    $region70: #{tpu_custom_call.1} parent=1 // pred_check
      _
    $region71: #{tpu_custom_call.1} parent=1 // pred_check_branch
      %62 = sbr.rel (0) target = $region73
    $region72: #{tpu_custom_call.1} parent=1 // pred_region
      _
    $region73: #{tpu_custom_call.1} parent=1 // pred_fallthru
      _
    // Predicated region
    $region74: #{tpu_custom_call.1} parent=1 // pred_check
      _
    $region75: #{tpu_custom_call.1} parent=1 // pred_check_branch
      %64 = sbr.rel (0) target = $region77
    $region76: #{tpu_custom_call.1} parent=1 // pred_region
      _
    $region77: #{tpu_custom_call.1} parent=1 // pred_fallthru
      _
    %66 = vst [vmem:[#allocation2] sm:$0xff] 0.0
    %67 = vst [vmem:[#allocation2 + $0x8] sm:$0xff] 0.0
    %vm68 = vcmask 1043456
    %vm69 = vcmask 64516
    %vm70 = vmor %vm69, %vm68
    %71 = vst.msk [vmem:[#allocation2 + $0x10] sm:$0xff] %vm70, 0.0
    %v72 = vld [vmem:[%s0] sm:$0xf]
    %74 = vrot.lane.b32.xlu0 %v72, 19
    %v75 = vpop.permute.xlu0 %74
    %vm77 = vcmask 281752
    %78 = vst.msk [vmem:[#allocation2] sm:$0xf] %vm77, %v75
    %v79 = vld [vmem:[%s0] sm:$0xf]
    %81 = vrot.lane.b32.xlu0 %v79, 21
    %v82 = vpop.permute.xlu0 %81
    %vm84 = vcmask 429352
    %85 = vst.msk [vmem:[#allocation2] sm:$0xf] %vm84, %v82
    %v86 = vld [vmem:[%s0] sm:$0xf]
    %88 = vrot.lane.b32.xlu0 %v86, 23
    %v89 = vpop.permute.xlu0 %88
    %vm91 = vcmask 576952
    %92 = vst.msk [vmem:[#allocation2] sm:$0xf] %vm91, %v89
    %v93 = vld [vmem:[%s0] sm:$0xf]
    %95 = vrot.lane.b32.xlu0 %v93, 25
    %v96 = vpop.permute.xlu0 %95
    %vm98 = vcmask 724552
    %99 = vst.msk [vmem:[#allocation2] sm:$0xf] %vm98, %v96
    %v100 = vld [vmem:[%s0] sm:$0xf]
    %102 = vrot.lane.b32.xlu0 %v100, 27
    %v103 = vpop.permute.xlu0 %102
    %vm105 = vcmask 872152
    %106 = vst.msk [vmem:[#allocation2] sm:$0xf] %vm105, %v103
    %v107 = vld [vmem:[%s0] sm:$0xf]
    %109 = vrot.lane.b32.xlu0 %v107, 29
    %v110 = vpop.permute.xlu0 %109
    %vm112 = vcmask 1019752
    %113 = vst.msk [vmem:[#allocation2] sm:$0xf] %vm112, %v110
    %v114 = vld [vmem:[%s0] sm:$0xf]
    %116 = vrot.lane.b32.xlu0 %v114, 31
    %v117 = vpop.permute.xlu0 %116
    %v118 = vrot.slane %v117, 4
    %vm119 = vcmask 252928
    %v120 = vsel %vm119, %v118, %v117
    %vm122 = vcmask 1044472
    %vm123 = vcmask 121860
    %vm124 = vmor %vm123, %vm122
    %125 = vst.msk [vmem:[#allocation2] sm:$0xff] %vm124, %v120
    %v126 = vld [vmem:[%s0] sm:$0xf]
    %128 = vrot.lane.b32.xlu0 %v126, 33
    %v129 = vpop.permute.xlu0 %128
    %vm131 = vcmask 265352
    %132 = vst.msk [vmem:[#allocation2 + $0x4] sm:$0xf] %vm131, %v129
    %v133 = vld [vmem:[%s0 + $0x4] sm:$0xf]
    %135 = vrot.lane.b32.xlu0 %v133, 35
    %v136 = vpop.permute.xlu0 %135
    %vm138 = vcmask 412952
    %139 = vst.msk [vmem:[#allocation2 + $0x4] sm:$0xf] %vm138, %v136
    %v140 = vld [vmem:[%s0 + $0x4] sm:$0xf]
    %142 = vrot.lane.b32.xlu0 %v140, 37
    %v143 = vpop.permute.xlu0 %142
    %vm145 = vcmask 560552
    %146 = vst.msk [vmem:[#allocation2 + $0x4] sm:$0xf] %vm145, %v143
    %v147 = vld [vmem:[%s0 + $0x4] sm:$0xf]
    %149 = vrot.lane.b32.xlu0 %v147, 39
    %v150 = vpop.permute.xlu0 %149
    %vm152 = vcmask 708152
    %153 = vst.msk [vmem:[#allocation2 + $0x4] sm:$0xf] %vm152, %v150
    %v154 = vld [vmem:[%s0 + $0x4] sm:$0xf]
    %156 = vrot.lane.b32.xlu0 %v154, 41
    %v157 = vpop.permute.xlu0 %156
    %vm159 = vcmask 855752
    %160 = vst.msk [vmem:[#allocation2 + $0x4] sm:$0xf] %vm159, %v157
    %v161 = vld [vmem:[%s0 + $0x4] sm:$0xf]
    %163 = vrot.lane.b32.xlu0 %v161, 43
    %v164 = vpop.permute.xlu0 %163
    %vm166 = vcmask 1003352
    %167 = vst.msk [vmem:[#allocation2 + $0x4] sm:$0xf] %vm166, %v164
    %v168 = vld [vmem:[%s0 + $0x4] sm:$0xf]
    %170 = vrot.lane.b32.xlu0 %v168, 45
    %v171 = vpop.permute.xlu0 %170
    %v172 = vrot.slane %v171, 4
    %vm173 = vcmask 367616
    %v174 = vsel %vm173, %v172, %v171
    %vm176 = vcmask 1044456
    %vm177 = vcmask 105476
    %vm178 = vmor %vm177, %vm176
    %179 = vst.msk [vmem:[#allocation2 + $0x4] sm:$0xff] %vm178, %v174
    %v180 = vld [vmem:[%s0 + $0x4] sm:$0xf]
    %182 = vrot.lane.b32.xlu0 %v180, 47
    %v183 = vpop.permute.xlu0 %182
    %vm185 = vcmask 248952
    %186 = vst.msk [vmem:[#allocation2 + $0x8] sm:$0xf] %vm185, %v183
    %v187 = vld [vmem:[%s0 + $0x4] sm:$0xf]
    %189 = vrot.lane.b32.xlu0 %v187, 49
    %v190 = vpop.permute.xlu0 %189
    %vm192 = vcmask 396552
    %193 = vst.msk [vmem:[#allocation2 + $0x8] sm:$0xf] %vm192, %v190
    %s194 = scalar_lea.vmem %s0, 8
    %v195 = vld [vmem:[%s194] sm:$0xf]
    %197 = vrot.lane.b32.xlu0 %v195, 87
    %v198 = vpop.permute.xlu0 %197
    %vm200 = vcmask 839352
    %201 = vst.msk [vmem:[#allocation2 + $0x8] sm:$0xf] %vm200, %v198
    %v202 = vld [vmem:[%s194] sm:$0xf]
    %204 = vrot.lane.b32.xlu0 %v202, 89
    %v205 = vpop.permute.xlu0 %204
    %vm207 = vcmask 986952
    %208 = vst.msk [vmem:[#allocation2 + $0x8] sm:$0xf] %vm207, %v205
    %v209 = vld [vmem:[%s194] sm:$0xf]
    %211 = vrot.lane.b32.xlu0 %v209, 91
    %v212 = vpop.permute.xlu0 %211
    %v213 = vrot.slane %v212, 4
    %vm214 = vcmask 744448
    %v215 = vsel %vm214, %v213, %v212
    %vm217 = vcmask 1044440
    %vm218 = vcmask 89092
    %vm219 = vmor %vm218, %vm217
    %220 = vst.msk [vmem:[#allocation2 + $0x8] sm:$0xff] %vm219, %v215
    %v221 = vld [vmem:[%s194] sm:$0xf]
    %223 = vrot.lane.b32.xlu0 %v221, 93
    %v224 = vpop.permute.xlu0 %223
    %vm226 = vcmask 232552
    %227 = vst.msk [vmem:[#allocation2 + $0xc] sm:$0xf] %vm226, %v224
    %v228 = vld [vmem:[%s194] sm:$0xf]
    %230 = vrot.lane.b32.xlu0 %v228, 95
    %v231 = vpop.permute.xlu0 %230
    %vm233 = vcmask 380152
    %234 = vst.msk [vmem:[#allocation2 + $0xc] sm:$0xf] %vm233, %v231
    %v235 = vld [vmem:[%s194] sm:$0xf]
    %237 = vrot.lane.b32.xlu0 %v235, 97
    %v238 = vpop.permute.xlu0 %237
    %vm240 = vcmask 527752
    %241 = vst.msk [vmem:[#allocation2 + $0xc] sm:$0xf] %vm240, %v238
    %v242 = vld [vmem:[%s194] sm:$0xf]
    %244 = vrot.lane.b32.xlu0 %v242, 99
    %v245 = vpop.permute.xlu0 %244
    %vm247 = vcmask 675352
    %248 = vst.msk [vmem:[#allocation2 + $0xc] sm:$0xf] %vm247, %v245
    %v249 = vld [vmem:[%s194] sm:$0xf]
    %251 = vrot.lane.b32.xlu0 %v249, 101
    %v252 = vpop.permute.xlu0 %251
    %vm254 = vcmask 822952
    %255 = vst.msk [vmem:[#allocation2 + $0xc] sm:$0xf] %vm254, %v252
    %v256 = vld [vmem:[%s194 + $0x4] sm:$0xf]
    %258 = vrot.lane.b32.xlu0 %v256, 103
    %v259 = vpop.permute.xlu0 %258
    %vm261 = vcmask 970552
    %262 = vst.msk [vmem:[#allocation2 + $0xc] sm:$0xf] %vm261, %v259
    %v263 = vld [vmem:[%s194 + $0x4] sm:$0xf]
    %265 = vrot.lane.b32.xlu0 %v263, 105
    %v266 = vpop.permute.xlu0 %265
    %v267 = vrot.slane %v266, 4
    %vm268 = vcmask 859136
    %v269 = vsel %vm268, %v267, %v266
    %vm271 = vcmask 1044424
    %vm272 = vcmask 72708
    %vm273 = vmor %vm272, %vm271
    %274 = vst.msk [vmem:[#allocation2 + $0xc] sm:$0xff] %vm273, %v269
    %v275 = vld [vmem:[%s194 + $0x4] sm:$0xf]
    %277 = vrot.lane.b32.xlu0 %v275, 107
    %v278 = vpop.permute.xlu0 %277
    %vm280 = vcmask 216152
    %281 = vst.msk [vmem:[#allocation2 + $0x10] sm:$0xf] %vm280, %v278
    %v282 = vld [vmem:[%s194 + $0x4] sm:$0xf]
    %284 = vrot.lane.b32.xlu0 %v282, 109
    %v285 = vpop.permute.xlu0 %284
    %vm287 = vcmask 363752
    %288 = vst.msk [vmem:[#allocation2 + $0x10] sm:$0xf] %vm287, %v285
    %v289 = vld [vmem:[%s194 + $0x4] sm:$0xf]
    %291 = vrot.lane.b32.xlu0 %v289, 111
    %v292 = vpop.permute.xlu0 %291
    %vm294 = vcmask 511352
    %295 = vst.msk [vmem:[#allocation2 + $0x10] sm:$0xf] %vm294, %v292
    %v296 = vld [vmem:[%s194 + $0x4] sm:$0xf]
    %298 = vrot.lane.b32.xlu0 %v296, 113
    %v299 = vpop.permute.xlu0 %298
    %vm301 = vcmask 658952
    %302 = vst.msk [vmem:[#allocation2 + $0x10] sm:$0xf] %vm301, %v299
    %v303 = vld [vmem:[%s194 + $0x4] sm:$0xf]
    %305 = vrot.lane.b32.xlu0 %v303, 115
    %v306 = vpop.permute.xlu0 %305
    %vm308 = vcmask 806552
    %309 = vst.msk [vmem:[#allocation2 + $0x10] sm:$0xf] %vm308, %v306
    %v310 = vld [vmem:[%s194 + $0x4] sm:$0xf]
    %312 = vrot.lane.b32.xlu0 %v310, 117
    %v313 = vpop.permute.xlu0 %312
    %vm315 = vcmask 954152
    %316 = vst.msk [vmem:[#allocation2 + $0x10] sm:$0xf] %vm315, %v313
    %v317 = vld [vmem:[#allocation2] sm:$0xff]
    %v318 = vld [vmem:[#allocation2 + $0x8] sm:$0xff]
    %v319 = vld [vmem:[#allocation2 + $0x10] sm:$0xf]
    %v320 = vld [vmem:[#allocation2 + $0x10] sm:$0xff]
    %v324 = vcombine.high %v317, %v317
    %v325 = vcombine.high %v318, %v318
    %v328 = vcombine.low %v317, %v317
    %v329 = vcombine.low %v318, %v318
    %v330 = vcombine.low %v319, %v319
    %331 = vrot.lane.b32.xlu0 %v328, 127
    %v332 = vpop.permute.xlu0 %331
    %333 = vrot.lane.b32.xlu0 %v317, 127
    %v334 = vpop.permute.xlu0 %333
    %335 = vrot.lane.b32.xlu0 %v329, 127
    %v336 = vpop.permute.xlu0 %335
    %337 = vrot.lane.b32.xlu0 %v318, 127
    %v338 = vpop.permute.xlu0 %337
    %339 = vrot.lane.b32.xlu0 %v330, 127
    %v340 = vpop.permute.xlu0 %339
    %vm341 = vcmask 1039360
    %v342 = vsel %vm341, %v332, %v334
    %v343 = vsel %vm341, %v334, %v336
    %v344 = vsel %vm341, %v336, %v338
    %v345 = vsel %vm341, %v338, %v340
    %351 = vrot.lane.b32.xlu0 %v317, 126
    %v352 = vpop.permute.xlu0 %351
    %353 = vrot.lane.b32.xlu0 %v324, 126
    %v354 = vpop.permute.xlu0 %353
    %355 = vrot.lane.b32.xlu0 %v318, 126
    %v356 = vpop.permute.xlu0 %355
    %357 = vrot.lane.b32.xlu0 %v325, 126
    %v358 = vpop.permute.xlu0 %357
    %359 = vrot.lane.b32.xlu0 %v319, 126
    %v360 = vpop.permute.xlu0 %359
    %vm361 = vcmask 1031168
    %v362 = vsel %vm361, %v352, %v354
    %v363 = vsel %vm361, %v354, %v356
    %v364 = vsel %vm361, %v356, %v358
    %v365 = vsel %vm361, %v358, %v360
    %371 = vrot.lane.b32.xlu0 %v328, 110
    %v372 = vpop.permute.xlu0 %371
    %373 = vrot.lane.b32.xlu0 %v317, 110
    %v374 = vpop.permute.xlu0 %373
    %375 = vrot.lane.b32.xlu0 %v329, 110
    %v376 = vpop.permute.xlu0 %375
    %377 = vrot.lane.b32.xlu0 %v318, 110
    %v378 = vpop.permute.xlu0 %377
    %379 = vrot.lane.b32.xlu0 %v330, 110
    %v380 = vpop.permute.xlu0 %379
    %vm381 = vcmask 900096
    %v382 = vsel %vm381, %v372, %v374
    %v383 = vsel %vm381, %v374, %v376
    %v384 = vsel %vm381, %v376, %v378
    %v385 = vsel %vm381, %v378, %v380
    %391 = vrot.lane.b32.xlu0 %v317, 109
    %v392 = vpop.permute.xlu0 %391
    %393 = vrot.lane.b32.xlu0 %v324, 109
    %v394 = vpop.permute.xlu0 %393
    %395 = vrot.lane.b32.xlu0 %v318, 109
    %v396 = vpop.permute.xlu0 %395
    %397 = vrot.lane.b32.xlu0 %v325, 109
    %v398 = vpop.permute.xlu0 %397
    %399 = vrot.lane.b32.xlu0 %v319, 109
    %v400 = vpop.permute.xlu0 %399
    %vm401 = vcmask 891904
    %v402 = vsel %vm401, %v392, %v394
    %v403 = vsel %vm401, %v394, %v396
    %v404 = vsel %vm401, %v396, %v398
    %v405 = vsel %vm401, %v398, %v400
    %411 = vrot.lane.b32.xlu0 %v328, 108
    %v412 = vpop.permute.xlu0 %411
    %413 = vrot.lane.b32.xlu0 %v317, 108
    %v414 = vpop.permute.xlu0 %413
    %415 = vrot.lane.b32.xlu0 %v329, 108
    %v416 = vpop.permute.xlu0 %415
    %417 = vrot.lane.b32.xlu0 %v318, 108
    %v418 = vpop.permute.xlu0 %417
    %419 = vrot.lane.b32.xlu0 %v330, 108
    %v420 = vpop.permute.xlu0 %419
    %vm421 = vcmask 883712
    %v422 = vsel %vm421, %v412, %v414
    %v423 = vsel %vm421, %v414, %v416
    %v424 = vsel %vm421, %v416, %v418
    %v425 = vsel %vm421, %v418, %v420
    %v432 = vcombine.high %v320, %v320
    %433 = vrot.lane.b32.xlu0 %v317, 92
    %v434 = vpop.permute.xlu0 %433
    %435 = vrot.lane.b32.xlu0 %v324, 92
    %v436 = vpop.permute.xlu0 %435
    %437 = vrot.lane.b32.xlu0 %v318, 92
    %v438 = vpop.permute.xlu0 %437
    %439 = vrot.lane.b32.xlu0 %v325, 92
    %v440 = vpop.permute.xlu0 %439
    %441 = vrot.lane.b32.xlu0 %v320, 92
    %v442 = vpop.permute.xlu0 %441
    %443 = vrot.lane.b32.xlu0 %v432, 92
    %v444 = vpop.permute.xlu0 %443
    %vm445 = vcmask 752640
    %v446 = vsel %vm445, %v434, %v436
    %v447 = vsel %vm445, %v436, %v438
    %v448 = vsel %vm445, %v438, %v440
    %v449 = vsel %vm445, %v440, %v442
    %v450 = vsel %vm445, %v442, %v444
    %v456 = vcombine.low %v320, %v320
    %457 = vrot.lane.b32.xlu0 %v328, 91
    %v458 = vpop.permute.xlu0 %457
    %459 = vrot.lane.b32.xlu0 %v317, 91
    %v460 = vpop.permute.xlu0 %459
    %461 = vrot.lane.b32.xlu0 %v329, 91
    %v462 = vpop.permute.xlu0 %461
    %463 = vrot.lane.b32.xlu0 %v318, 91
    %v464 = vpop.permute.xlu0 %463
    %465 = vrot.lane.b32.xlu0 %v456, 91
    %v466 = vpop.permute.xlu0 %465
    %467 = vrot.lane.b32.xlu0 %v320, 91
    %v468 = vpop.permute.xlu0 %467
    %v469 = vsel %vm214, %v458, %v460
    %v470 = vsel %vm214, %v460, %v462
    %v471 = vsel %vm214, %v462, %v464
    %v472 = vsel %vm214, %v464, %v466
    %v473 = vsel %vm214, %v466, %v468
    %479 = vrot.lane.b32.xlu0 %v317, 90
    %v480 = vpop.permute.xlu0 %479
    %481 = vrot.lane.b32.xlu0 %v324, 90
    %v482 = vpop.permute.xlu0 %481
    %483 = vrot.lane.b32.xlu0 %v318, 90
    %v484 = vpop.permute.xlu0 %483
    %485 = vrot.lane.b32.xlu0 %v325, 90
    %v486 = vpop.permute.xlu0 %485
    %487 = vrot.lane.b32.xlu0 %v320, 90
    %v488 = vpop.permute.xlu0 %487
    %489 = vrot.lane.b32.xlu0 %v432, 90
    %v490 = vpop.permute.xlu0 %489
    %vm491 = vcmask 736256
    %v492 = vsel %vm491, %v480, %v482
    %v493 = vsel %vm491, %v482, %v484
    %v494 = vsel %vm491, %v484, %v486
    %v495 = vsel %vm491, %v486, %v488
    %v496 = vsel %vm491, %v488, %v490
    %v502 = vsel %vm68, %v317, %v342
    %v503 = vsel %vm68, %v324, %v343
    %v504 = vsel %vm68, %v318, %v344
    %v505 = vsel %vm68, %v325, %v345
    %v506 = vsel %vm68, %v319, %v340
    %v507 = vsel %vm68, %v362, %v382
    %v508 = vsel %vm68, %v363, %v383
    %v509 = vsel %vm68, %v364, %v384
    %v510 = vsel %vm68, %v365, %v385
    %v511 = vsel %vm68, %v360, %v380
    %v512 = vsel %vm68, %v402, %v422
    %v513 = vsel %vm68, %v403, %v423
    %v514 = vsel %vm68, %v404, %v424
    %v515 = vsel %vm68, %v405, %v425
    %v516 = vsel %vm68, %v400, %v420
    %v517 = vsel %vm68, %v446, %v469
    %v518 = vsel %vm68, %v447, %v470
    %v519 = vsel %vm68, %v448, %v471
    %v520 = vsel %vm68, %v449, %v472
    %v521 = vsel %vm68, %v450, %v473
    %v522 = vpack.c.bf16 %v507, %v502
    %v523 = vpack.c.bf16 %v508, %v503
    %v524 = vpack.c.bf16 %v509, %v504
    %v525 = vpack.c.bf16 %v510, %v505
    %v526 = vpack.c.bf16 %v511, %v506
    %v527 = vpack.c.bf16 %v517, %v512
    %v528 = vpack.c.bf16 %v518, %v513
    %v529 = vpack.c.bf16 %v519, %v514
    %v530 = vpack.c.bf16 %v520, %v515
    %v531 = vpack.c.bf16 %v521, %v516
    %v532 = vpack.c.bf16 %v492, %v492
    %v533 = vpack.c.bf16 %v493, %v493
    %v534 = vpack.c.bf16 %v494, %v494
    %v535 = vpack.c.bf16 %v495, %v495
    %v536 = vpack.c.bf16 %v496, %v496
    %v537 = vld [vmem:[%s1] sm:$0xf]
    %v538 = vld [vmem:[%s2] sm:$0xff]
    %540 = vset.pattern.permute.xlu0 0
    %541 = vperm.xlu0 %540, %v538
    %v542 = vpop.permute.xlu0 %541
    %vm544 = vcmask 293888
    %v546 = vsel %vm544, %v537, 0
    %vm548 = vcmask 1041408
    %v550 = vsel %vm548, %v532, 0
    %v553 = vsel %vm548, %v533, 0
    %v556 = vsel %vm548, %v534, 0
    %v559 = vsel %vm548, %v535, 0
    %v562 = vsel %vm548, %v536, 0
    %564 = vmatprep.subr.bf16.mxu0 %v523
    %565 = vmatpush1.bf16.msra.mxu0 %v522
    %566 = vmatprep.subr.bf16.mxu0 %v528
    %567 = vmatpush1.bf16.msra.mxu0 %v527
    %568 = vmatprep.subr.bf16.mxu0 %v553
    %569 = vmatpush1.bf16.msra.mxu0 %v550
    %570 = vmatprep.subr.bf16.mxu0 0
    %571 = vmatpush1.bf16.msra.mxu0 0
    %572 = vmatprep.subr.bf16.mxu0 0
    %573 = vmatpush1.bf16.msra.mxu0 0
    %574 = vmatprep.subr.bf16.mxu0 0
    %575 = vmatpush1.bf16.msra.mxu0 0
    %576 = vmatprep.subr.bf16.mxu0 0
    %577 = vmatpush1.bf16.msra.mxu0 0
    %578 = vmatprep.subr.bf16.mxu0 0
    %579 = vmatpush1.bf16.msra.mxu0 0
    %580 = vmatprep.subr.bf16.mxu0 0
    %581 = vmatpush1.bf16.msra.mxu0 0
    %582 = vmatprep.subr.bf16.mxu0 0
    %583 = vmatpush1.bf16.msra.mxu0 0
    %584 = vmatprep.subr.bf16.mxu0 0
    %585 = vmatpush1.bf16.msra.mxu0 0
    %586 = vmatprep.subr.bf16.mxu0 0
    %587 = vmatpush1.bf16.msra.mxu0 0
    %588 = vmatprep.subr.bf16.mxu0 0
    %589 = vmatpush1.bf16.msra.mxu0 0
    %590 = vmatprep.subr.bf16.mxu0 0
    %591 = vmatpush1.bf16.msra.mxu0 0
    %592 = vmatprep.subr.bf16.mxu0 0
    %593 = vmatpush1.bf16.msra.mxu0 0
    %594 = vmatprep.subr.bf16.mxu0 0
    %595 = vmatpush1.bf16.msra.mxu0 0
    %596 = vmatprep.mubr.bf16.mxu0 0
    %597 = vmatmul.mubr.bf16.gmra.mrb[0].mxu0 %v546
    %v598 = vpop.f32.mrb[0].mxu0
    %v599 = vadd.f32 %v542, %v598
    %v600 = vpop.f32.mrb[0].mxu0
    %v601 = vadd.f32 %v542, %v600
    %v602 = vpop.f32.mrb[0].mxu0
    %v603 = vpop.f32.mrb[0].mxu0
    %604 = vdwg.mxu0
    %605 = vmatprep.subr.bf16.mxu0 %v525
    %606 = vmatpush1.bf16.msra.mxu0 %v524
    %607 = vmatprep.subr.bf16.mxu0 %v530
    %608 = vmatpush1.bf16.msra.mxu0 %v529
    %609 = vmatprep.subr.bf16.mxu0 %v559
    %610 = vmatpush1.bf16.msra.mxu0 %v556
    %611 = vmatprep.subr.bf16.mxu0 0
    %612 = vmatpush1.bf16.msra.mxu0 0
    %613 = vmatprep.subr.bf16.mxu0 0
    %614 = vmatpush1.bf16.msra.mxu0 0
    %615 = vmatprep.subr.bf16.mxu0 0
    %616 = vmatpush1.bf16.msra.mxu0 0
    %617 = vmatprep.subr.bf16.mxu0 0
    %618 = vmatpush1.bf16.msra.mxu0 0
    %619 = vmatprep.subr.bf16.mxu0 0
    %620 = vmatpush1.bf16.msra.mxu0 0
    %621 = vmatprep.subr.bf16.mxu0 0
    %622 = vmatpush1.bf16.msra.mxu0 0
    %623 = vmatprep.subr.bf16.mxu0 0
    %624 = vmatpush1.bf16.msra.mxu0 0
    %625 = vmatprep.subr.bf16.mxu0 0
    %626 = vmatpush1.bf16.msra.mxu0 0
    %627 = vmatprep.subr.bf16.mxu0 0
    %628 = vmatpush1.bf16.msra.mxu0 0
    %629 = vmatprep.subr.bf16.mxu0 0
    %630 = vmatpush1.bf16.msra.mxu0 0
    %631 = vmatprep.subr.bf16.mxu0 0
    %632 = vmatpush1.bf16.msra.mxu0 0
    %633 = vmatprep.subr.bf16.mxu0 0
    %634 = vmatpush1.bf16.msra.mxu0 0
    %635 = vmatprep.subr.bf16.mxu0 0
    %636 = vmatpush1.bf16.msra.mxu0 0
    %637 = vmatprep.mubr.bf16.mxu0 0
    %638 = vmatmul.mubr.bf16.gmra.mrb[0].mxu0 %v546
    %v639 = vpop.f32.mrb[0].mxu0
    %v640 = vadd.f32 %v542, %v639
    %v641 = vpop.f32.mrb[0].mxu0
    %v642 = vadd.f32 %v542, %v641
    %v643 = vpop.f32.mrb[0].mxu0
    %v644 = vpop.f32.mrb[0].mxu0
    %645 = vdwg.mxu0
    %646 = vmatprep.subr.bf16.mxu0 0
    %647 = vmatpush1.bf16.msra.mxu0 %v526
    %648 = vmatprep.subr.bf16.mxu0 0
    %649 = vmatpush1.bf16.msra.mxu0 %v531
    %650 = vmatprep.subr.bf16.mxu0 0
    %651 = vmatpush1.bf16.msra.mxu0 %v562
    %652 = vmatprep.subr.bf16.mxu0 0
    %653 = vmatpush1.bf16.msra.mxu0 0
    %654 = vmatprep.subr.bf16.mxu0 0
    %655 = vmatpush1.bf16.msra.mxu0 0
    %656 = vmatprep.subr.bf16.mxu0 0
    %657 = vmatpush1.bf16.msra.mxu0 0
    %658 = vmatprep.subr.bf16.mxu0 0
    %659 = vmatpush1.bf16.msra.mxu0 0
    %660 = vmatprep.subr.bf16.mxu0 0
    %661 = vmatpush1.bf16.msra.mxu0 0
    %662 = vmatprep.subr.bf16.mxu0 0
    %663 = vmatpush1.bf16.msra.mxu0 0
    %664 = vmatprep.subr.bf16.mxu0 0
    %665 = vmatpush1.bf16.msra.mxu0 0
    %666 = vmatprep.subr.bf16.mxu0 0
    %667 = vmatpush1.bf16.msra.mxu0 0
    %668 = vmatprep.subr.bf16.mxu0 0
    %669 = vmatpush1.bf16.msra.mxu0 0
    %670 = vmatprep.subr.bf16.mxu0 0
    %671 = vmatpush1.bf16.msra.mxu0 0
    %672 = vmatprep.subr.bf16.mxu0 0
    %673 = vmatpush1.bf16.msra.mxu0 0
    %674 = vmatprep.subr.bf16.mxu0 0
    %675 = vmatpush1.bf16.msra.mxu0 0
    %676 = vmatprep.subr.bf16.mxu0 0
    %677 = vmatpush1.bf16.msra.mxu0 0
    %678 = vmatprep.mubr.bf16.mxu0 0
    %679 = vmatmul.mubr.bf16.gmra.mrb[0].mxu0 %v546
    %v680 = vpop.f32.mrb[0].mxu0
    %v681 = vadd.f32 %v542, %v680
    %v682 = vpop.f32.mrb[0].mxu0
    %v683 = vpop.f32.mrb[0].mxu0
    %v684 = vpop.f32.mrb[0].mxu0
    %685 = vdwg.mxu0
    %v686 = vld [vmem:[%s5] sm:$0x1f]
    %v688 = vlaneseq
    %v689 = vshrl.u32 %v688, 7
    %v690 = vsub.s32 0, %v689
    %v691 = vrot.slane %v686, %v690
    %v692 = vlaneseq
    %v693 = vshrl.u32 %v692, 7
    %v694 = vsub.s32 1, %v693
    %v695 = vrot.slane %v686, %v694
    %v696 = vlaneseq
    %v697 = vshrl.u32 %v696, 7
    %v698 = vsub.s32 2, %v697
    %v699 = vrot.slane %v686, %v698
    %v700 = vlaneseq
    %v701 = vshrl.u32 %v700, 7
    %v702 = vsub.s32 3, %v701
    %v703 = vrot.slane %v686, %v702
    %v704 = vlaneseq
    %v705 = vshrl.u32 %v704, 7
    %v706 = vsub.s32 4, %v705
    %v707 = vrot.slane %v686, %v706
    %v713 = vmul.f32 %v599, %v691
    %v714 = vmul.f32 %v601, %v695
    %v715 = vmul.f32 %v640, %v699
    %v716 = vmul.f32 %v642, %v703
    %v717 = vmul.f32 %v681, %v707
    %v718 = vadd.f32 %v713, %v714
    %v719 = vadd.f32 %v718, %v715
    %v720 = vadd.f32 %v719, %v716
    %vm721 = vcmask 801792
    %v722 = vsel %vm721, %v717, 0.0
    %v723 = vadd.f32 %v720, %v722
    %724 = vadd.xlane.f32.xlu0 %v723
    %v725 = vpop.xlane.xlu0 %724
    %v726 = vrcp.pop 512.0
    %v727 = vmul.f32 %v725, %v726
    %v728 = vsub.f32 %v599, %v727
    %v729 = vsub.f32 %v601, %v727
    %v730 = vsub.f32 %v640, %v727
    %v731 = vsub.f32 %v642, %v727
    %v732 = vsub.f32 %v681, %v727
    %v733 = vmul.f32 %v728, %v728
    %v734 = vmul.f32 %v729, %v729
    %v735 = vmul.f32 %v730, %v730
    %v736 = vmul.f32 %v731, %v731
    %v737 = vmul.f32 %v732, %v732
    %v738 = vmul.f32 %v733, %v691
    %v739 = vmul.f32 %v734, %v695
    %v740 = vmul.f32 %v735, %v699
    %v741 = vmul.f32 %v736, %v703
    %v742 = vmul.f32 %v737, %v707
    %v743 = vadd.f32 %v738, %v739
    %v744 = vadd.f32 %v743, %v740
    %v745 = vadd.f32 %v744, %v741
    %v746 = vsel %vm721, %v742, 0.0
    %v747 = vadd.f32 %v745, %v746
    %748 = vadd.xlane.f32.xlu0 %v747
    %v749 = vpop.xlane.xlu0 %748
    %v750 = vmul.f32 %v749, %v726
    %v751 = vld [vmem:[%s3] sm:$0xff]
    %v752 = vadd.f32 %v750, 1e-05
    %v753 = vrsqrt.pop %v752
    %v754 = vmul.f32 %v751, %v753
    %v755 = vld [vmem:[%s4] sm:$0xff]
    %v756 = vmul.f32 %v727, %v754
    %v757 = vsub.f32 %v755, %v756
    %759 = vset.pattern.permute.xlu0 0
    %760 = vperm.xlu0 %759, %v754
    %v761 = vpop.permute.xlu0 %760
    %v763 = vmul.f32 %v599, %v761
    %v764 = vmul.f32 %v601, %v761
    %v765 = vmul.f32 %v640, %v761
    %v766 = vmul.f32 %v642, %v761
    %v767 = vmul.f32 %v681, %v761
    %769 = vset.pattern.permute.xlu0 0
    %770 = vperm.xlu0 %769, %v757
    %v771 = vpop.permute.xlu0 %770
    %v773 = vadd.f32 %v763, %v771
    %v774 = vadd.f32 %v764, %v771
    %v775 = vadd.f32 %v765, %v771
    %v776 = vadd.f32 %v766, %v771
    %v777 = vadd.f32 %v767, %v771
    %v778 = vmax.f32 %v773, 0.0
    %v779 = vmax.f32 %v774, 0.0
    %v780 = vmax.f32 %v775, 0.0
    %v781 = vmax.f32 %v776, 0.0
    %v782 = vmax.f32 %v777, 0.0
    %783 = vst [vmem:[#allocation3] sm:$0xff] 0.0
    %784 = vst [vmem:[#allocation3 + $0x8] sm:$0xff] 0.0
    %785 = vst [vmem:[#allocation3 + $0x10] sm:$0xff] 0.0
    %786 = vst [vmem:[#allocation3 + $0x18] sm:$0xff] 0.0
    %787 = vst [vmem:[#allocation3 + $0x20] sm:$0xff] 0.0
    %vm788 = vcmask 64512
    %789 = vst.msk [vmem:[#allocation3 + $0x28] sm:$0xff] %vm788, 0.0
    %v790 = vmul.f32 %v778, %v691
    %v791 = vmul.f32 %v779, %v695
    %v792 = vmul.f32 %v780, %v699
    %v793 = vmul.f32 %v781, %v703
    %v794 = vmul.f32 %v782, %v707
    %800 = vrot.lane.b32.xlu0 %v790, 19
    %v801 = vpop.permute.xlu0 %800
    %802 = vrot.lane.b32.xlu0 %v791, 19
    %v803 = vpop.permute.xlu0 %802
    %804 = vrot.lane.b32.xlu0 %v792, 19
    %v805 = vpop.permute.xlu0 %804
    %806 = vrot.lane.b32.xlu0 %v793, 19
    %v807 = vpop.permute.xlu0 %806
    %808 = vrot.lane.b32.xlu0 %v794, 19
    %v809 = vpop.permute.xlu0 %808
    %vm810 = vcmask 154624
    %v811 = vsel %vm810, %v801, %v803
    %v812 = vsel %vm810, %v803, %v805
    %v813 = vsel %vm810, %v805, %v807
    %v814 = vsel %vm810, %v807, %v809
    %vm820 = vcmask 1047704
    %821 = vst.msk [vmem:[#allocation3] sm:$0xff] %vm820, %v801
    %822 = vst [vmem:[#allocation3 + $0x8] sm:$0xff] %v811
    %823 = vst [vmem:[#allocation3 + $0x10] sm:$0xff] %v812
    %824 = vst [vmem:[#allocation3 + $0x18] sm:$0xff] %v813
    %vm825 = vcmask 957440
    %826 = vst.msk [vmem:[#allocation3 + $0x20] sm:$0xff] %vm825, %v814
    %v827 = vld [vmem:[#allocation3] sm:$0xff]
    %v828 = vld [vmem:[#allocation3 + $0x8] sm:$0xff]
    %v829 = vld [vmem:[#allocation3 + $0x10] sm:$0xff]
    %v830 = vld [vmem:[#allocation3 + $0x18] sm:$0xff]
    %v831 = vld [vmem:[#allocation3 + $0x20] sm:$0xff]
    %v832 = vld [vmem:[#allocation3 + $0x28] sm:$0xff]
    %838 = vrot.lane.b32.xlu0 %v827, 127
    %v839 = vpop.permute.xlu0 %838
    %840 = vrot.lane.b32.xlu0 %v828, 127
    %v841 = vpop.permute.xlu0 %840
    %842 = vrot.lane.b32.xlu0 %v829, 127
    %v843 = vpop.permute.xlu0 %842
    %844 = vrot.lane.b32.xlu0 %v830, 127
    %v845 = vpop.permute.xlu0 %844
    %846 = vrot.lane.b32.xlu0 %v831, 127
    %v847 = vpop.permute.xlu0 %846
    %v848 = vsel %vm341, %v839, %v841
    %v849 = vsel %vm341, %v841, %v843
    %v850 = vsel %vm341, %v843, %v845
    %v851 = vsel %vm341, %v845, %v847
    %857 = vrot.lane.b32.xlu0 %v827, 126
    %v858 = vpop.permute.xlu0 %857
    %859 = vrot.lane.b32.xlu0 %v828, 126
    %v860 = vpop.permute.xlu0 %859
    %861 = vrot.lane.b32.xlu0 %v829, 126
    %v862 = vpop.permute.xlu0 %861
    %863 = vrot.lane.b32.xlu0 %v830, 126
    %v864 = vpop.permute.xlu0 %863
    %865 = vrot.lane.b32.xlu0 %v831, 126
    %v866 = vpop.permute.xlu0 %865
    %v867 = vsel %vm361, %v858, %v860
    %v868 = vsel %vm361, %v860, %v862
    %v869 = vsel %vm361, %v862, %v864
    %v870 = vsel %vm361, %v864, %v866
    %876 = vrot.lane.b32.xlu0 %v827, 110
    %v877 = vpop.permute.xlu0 %876
    %878 = vrot.lane.b32.xlu0 %v828, 110
    %v879 = vpop.permute.xlu0 %878
    %880 = vrot.lane.b32.xlu0 %v829, 110
    %v881 = vpop.permute.xlu0 %880
    %882 = vrot.lane.b32.xlu0 %v830, 110
    %v883 = vpop.permute.xlu0 %882
    %884 = vrot.lane.b32.xlu0 %v831, 110
    %v885 = vpop.permute.xlu0 %884
    %v886 = vsel %vm381, %v877, %v879
    %v887 = vsel %vm381, %v879, %v881
    %v888 = vsel %vm381, %v881, %v883
    %v889 = vsel %vm381, %v883, %v885
    %895 = vrot.lane.b32.xlu0 %v827, 109
    %v896 = vpop.permute.xlu0 %895
    %897 = vrot.lane.b32.xlu0 %v828, 109
    %v898 = vpop.permute.xlu0 %897
    %899 = vrot.lane.b32.xlu0 %v829, 109
    %v900 = vpop.permute.xlu0 %899
    %901 = vrot.lane.b32.xlu0 %v830, 109
    %v902 = vpop.permute.xlu0 %901
    %903 = vrot.lane.b32.xlu0 %v831, 109
    %v904 = vpop.permute.xlu0 %903
    %v905 = vsel %vm401, %v896, %v898
    %v906 = vsel %vm401, %v898, %v900
    %v907 = vsel %vm401, %v900, %v902
    %v908 = vsel %vm401, %v902, %v904
    %914 = vrot.lane.b32.xlu0 %v827, 108
    %v915 = vpop.permute.xlu0 %914
    %916 = vrot.lane.b32.xlu0 %v828, 108
    %v917 = vpop.permute.xlu0 %916
    %918 = vrot.lane.b32.xlu0 %v829, 108
    %v919 = vpop.permute.xlu0 %918
    %920 = vrot.lane.b32.xlu0 %v830, 108
    %v921 = vpop.permute.xlu0 %920
    %922 = vrot.lane.b32.xlu0 %v831, 108
    %v923 = vpop.permute.xlu0 %922
    %v924 = vsel %vm421, %v915, %v917
    %v925 = vsel %vm421, %v917, %v919
    %v926 = vsel %vm421, %v919, %v921
    %v927 = vsel %vm421, %v921, %v923
    %934 = vrot.lane.b32.xlu0 %v827, 92
    %v935 = vpop.permute.xlu0 %934
    %936 = vrot.lane.b32.xlu0 %v828, 92
    %v937 = vpop.permute.xlu0 %936
    %938 = vrot.lane.b32.xlu0 %v829, 92
    %v939 = vpop.permute.xlu0 %938
    %940 = vrot.lane.b32.xlu0 %v830, 92
    %v941 = vpop.permute.xlu0 %940
    %942 = vrot.lane.b32.xlu0 %v831, 92
    %v943 = vpop.permute.xlu0 %942
    %944 = vrot.lane.b32.xlu0 %v832, 92
    %v945 = vpop.permute.xlu0 %944
    %v946 = vsel %vm445, %v935, %v937
    %v947 = vsel %vm445, %v937, %v939
    %v948 = vsel %vm445, %v939, %v941
    %v949 = vsel %vm445, %v941, %v943
    %v950 = vsel %vm445, %v943, %v945
    %956 = vrot.lane.b32.xlu0 %v827, 91
    %v957 = vpop.permute.xlu0 %956
    %958 = vrot.lane.b32.xlu0 %v828, 91
    %v959 = vpop.permute.xlu0 %958
    %960 = vrot.lane.b32.xlu0 %v829, 91
    %v961 = vpop.permute.xlu0 %960
    %962 = vrot.lane.b32.xlu0 %v830, 91
    %v963 = vpop.permute.xlu0 %962
    %964 = vrot.lane.b32.xlu0 %v831, 91
    %v965 = vpop.permute.xlu0 %964
    %966 = vrot.lane.b32.xlu0 %v832, 91
    %v967 = vpop.permute.xlu0 %966
    %v968 = vsel %vm214, %v957, %v959
    %v969 = vsel %vm214, %v959, %v961
    %v970 = vsel %vm214, %v961, %v963
    %v971 = vsel %vm214, %v963, %v965
    %v972 = vsel %vm214, %v965, %v967
    %978 = vrot.lane.b32.xlu0 %v827, 90
    %v979 = vpop.permute.xlu0 %978
    %980 = vrot.lane.b32.xlu0 %v828, 90
    %v981 = vpop.permute.xlu0 %980
    %982 = vrot.lane.b32.xlu0 %v829, 90
    %v983 = vpop.permute.xlu0 %982
    %984 = vrot.lane.b32.xlu0 %v830, 90
    %v985 = vpop.permute.xlu0 %984
    %986 = vrot.lane.b32.xlu0 %v831, 90
    %v987 = vpop.permute.xlu0 %986
    %988 = vrot.lane.b32.xlu0 %v832, 90
    %v989 = vpop.permute.xlu0 %988
    %v990 = vsel %vm491, %v979, %v981
    %v991 = vsel %vm491, %v981, %v983
    %v992 = vsel %vm491, %v983, %v985
    %v993 = vsel %vm491, %v985, %v987
    %v994 = vsel %vm491, %v987, %v989
    %v1000 = vpack.c.bf16 %v848, %v827
    %v1001 = vpack.c.bf16 %v849, %v828
    %v1002 = vpack.c.bf16 %v850, %v829
    %v1003 = vpack.c.bf16 %v851, %v830
    %v1004 = vpack.c.bf16 %v847, %v831
    %v1005 = vpack.c.bf16 %v886, %v867
    %v1006 = vpack.c.bf16 %v887, %v868
    %v1007 = vpack.c.bf16 %v888, %v869
    %v1008 = vpack.c.bf16 %v889, %v870
    %v1009 = vpack.c.bf16 %v885, %v866
    %v1010 = vpack.c.bf16 %v924, %v905
    %v1011 = vpack.c.bf16 %v925, %v906
    %v1012 = vpack.c.bf16 %v926, %v907
    %v1013 = vpack.c.bf16 %v927, %v908
    %v1014 = vpack.c.bf16 %v923, %v904
    %v1015 = vpack.c.bf16 %v968, %v946
    %v1016 = vpack.c.bf16 %v969, %v947
    %v1017 = vpack.c.bf16 %v970, %v948
    %v1018 = vpack.c.bf16 %v971, %v949
    %v1019 = vpack.c.bf16 %v972, %v950
    %v1020 = vpack.c.bf16 %v990, %v990
    %v1021 = vpack.c.bf16 %v991, %v991
    %v1022 = vpack.c.bf16 %v992, %v992
    %v1023 = vpack.c.bf16 %v993, %v993
    %v1024 = vpack.c.bf16 %v994, %v994
    %v1025 = vld [vmem:[%s6] sm:$0xf]
    %v1026 = vld [vmem:[%s7] sm:$0xff]
    %1028 = vset.pattern.permute.xlu0 0
    %1029 = vperm.xlu0 %1028, %v1026
    %v1030 = vpop.permute.xlu0 %1029
    %vm1032 = vcmask 588800
    %v1034 = vsel %vm1032, %v1025, 0
    %v1037 = vsel %vm68, %v1020, 0
    %v1040 = vsel %vm68, %v1021, 0
    %v1043 = vsel %vm68, %v1022, 0
    %v1046 = vsel %vm68, %v1023, 0
    %v1049 = vsel %vm68, %v1024, 0
    %1051 = vmatprep.subr.bf16.mxu0 %v1001
    %1052 = vmatpush1.bf16.msra.mxu0 %v1000
    %1053 = vmatprep.subr.bf16.mxu0 %v1006
    %1054 = vmatpush1.bf16.msra.mxu0 %v1005
    %1055 = vmatprep.subr.bf16.mxu0 %v1011
    %1056 = vmatpush1.bf16.msra.mxu0 %v1010
    %1057 = vmatprep.subr.bf16.mxu0 %v1016
    %1058 = vmatpush1.bf16.msra.mxu0 %v1015
    %1059 = vmatprep.subr.bf16.mxu0 %v1040
    %1060 = vmatpush1.bf16.msra.mxu0 %v1037
    %1061 = vmatprep.subr.bf16.mxu0 0
    %1062 = vmatpush1.bf16.msra.mxu0 0
    %1063 = vmatprep.subr.bf16.mxu0 0
    %1064 = vmatpush1.bf16.msra.mxu0 0
    %1065 = vmatprep.subr.bf16.mxu0 0
    %1066 = vmatpush1.bf16.msra.mxu0 0
    %1067 = vmatprep.subr.bf16.mxu0 0
    %1068 = vmatpush1.bf16.msra.mxu0 0
    %1069 = vmatprep.subr.bf16.mxu0 0
    %1070 = vmatpush1.bf16.msra.mxu0 0
    %1071 = vmatprep.subr.bf16.mxu0 0
    %1072 = vmatpush1.bf16.msra.mxu0 0
    %1073 = vmatprep.subr.bf16.mxu0 0
    %1074 = vmatpush1.bf16.msra.mxu0 0
    %1075 = vmatprep.subr.bf16.mxu0 0
    %1076 = vmatpush1.bf16.msra.mxu0 0
    %1077 = vmatprep.subr.bf16.mxu0 0
    %1078 = vmatpush1.bf16.msra.mxu0 0
    %1079 = vmatprep.subr.bf16.mxu0 0
    %1080 = vmatpush1.bf16.msra.mxu0 0
    %1081 = vmatprep.subr.bf16.mxu0 0
    %1082 = vmatpush1.bf16.msra.mxu0 0
    %1083 = vmatprep.mubr.bf16.mxu0 0
    %1084 = vmatmul.mubr.bf16.gmra.mrb[0].mxu0 %v1034
    %v1085 = vpop.f32.mrb[0].mxu0
    %v1086 = vadd.f32 %v1030, %v1085
    %v1087 = vpop.f32.mrb[0].mxu0
    %v1088 = vadd.f32 %v1030, %v1087
    %v1089 = vpop.f32.mrb[0].mxu0
    %v1090 = vpop.f32.mrb[0].mxu0
    %1091 = vdwg.mxu0
    %1092 = vmatprep.subr.bf16.mxu0 %v1003
    %1093 = vmatpush1.bf16.msra.mxu0 %v1002
    %1094 = vmatprep.subr.bf16.mxu0 %v1008
    %1095 = vmatpush1.bf16.msra.mxu0 %v1007
    %1096 = vmatprep.subr.bf16.mxu0 %v1013
    %1097 = vmatpush1.bf16.msra.mxu0 %v1012
    %1098 = vmatprep.subr.bf16.mxu0 %v1018
    %1099 = vmatpush1.bf16.msra.mxu0 %v1017
    %1100 = vmatprep.subr.bf16.mxu0 %v1046
    %1101 = vmatpush1.bf16.msra.mxu0 %v1043
    %1102 = vmatprep.subr.bf16.mxu0 0
    %1103 = vmatpush1.bf16.msra.mxu0 0
    %1104 = vmatprep.subr.bf16.mxu0 0
    %1105 = vmatpush1.bf16.msra.mxu0 0
    %1106 = vmatprep.subr.bf16.mxu0 0
    %1107 = vmatpush1.bf16.msra.mxu0 0
    %1108 = vmatprep.subr.bf16.mxu0 0
    %1109 = vmatpush1.bf16.msra.mxu0 0
    %1110 = vmatprep.subr.bf16.mxu0 0
    %1111 = vmatpush1.bf16.msra.mxu0 0
    %1112 = vmatprep.subr.bf16.mxu0 0
    %1113 = vmatpush1.bf16.msra.mxu0 0
    %1114 = vmatprep.subr.bf16.mxu0 0
    %1115 = vmatpush1.bf16.msra.mxu0 0
    %1116 = vmatprep.subr.bf16.mxu0 0
    %1117 = vmatpush1.bf16.msra.mxu0 0
    %1118 = vmatprep.subr.bf16.mxu0 0
    %1119 = vmatpush1.bf16.msra.mxu0 0
    %1120 = vmatprep.subr.bf16.mxu0 0
    %1121 = vmatpush1.bf16.msra.mxu0 0
    %1122 = vmatprep.subr.bf16.mxu0 0
    %1123 = vmatpush1.bf16.msra.mxu0 0
    %1124 = vmatprep.mubr.bf16.mxu0 0
    %1125 = vmatmul.mubr.bf16.gmra.mrb[0].mxu0 %v1034
    %v1126 = vpop.f32.mrb[0].mxu0
    %v1127 = vadd.f32 %v1030, %v1126
    %v1128 = vpop.f32.mrb[0].mxu0
    %v1129 = vadd.f32 %v1030, %v1128
    %v1130 = vpop.f32.mrb[0].mxu0
    %v1131 = vpop.f32.mrb[0].mxu0
    %1132 = vdwg.mxu0
    %1133 = vmatprep.subr.bf16.mxu0 0
    %1134 = vmatpush1.bf16.msra.mxu0 %v1004
    %1135 = vmatprep.subr.bf16.mxu0 0
    %1136 = vmatpush1.bf16.msra.mxu0 %v1009
    %1137 = vmatprep.subr.bf16.mxu0 0
    %1138 = vmatpush1.bf16.msra.mxu0 %v1014
    %1139 = vmatprep.subr.bf16.mxu0 0
    %1140 = vmatpush1.bf16.msra.mxu0 %v1019
    %1141 = vmatprep.subr.bf16.mxu0 0
    %1142 = vmatpush1.bf16.msra.mxu0 %v1049
    %1143 = vmatprep.subr.bf16.mxu0 0
    %1144 = vmatpush1.bf16.msra.mxu0 0
    %1145 = vmatprep.subr.bf16.mxu0 0
    %1146 = vmatpush1.bf16.msra.mxu0 0
    %1147 = vmatprep.subr.bf16.mxu0 0
    %1148 = vmatpush1.bf16.msra.mxu0 0
    %1149 = vmatprep.subr.bf16.mxu0 0
    %1150 = vmatpush1.bf16.msra.mxu0 0
    %1151 = vmatprep.subr.bf16.mxu0 0
    %1152 = vmatpush1.bf16.msra.mxu0 0
    %1153 = vmatprep.subr.bf16.mxu0 0
    %1154 = vmatpush1.bf16.msra.mxu0 0
    %1155 = vmatprep.subr.bf16.mxu0 0
    %1156 = vmatpush1.bf16.msra.mxu0 0
    %1157 = vmatprep.subr.bf16.mxu0 0
    %1158 = vmatpush1.bf16.msra.mxu0 0
    %1159 = vmatprep.subr.bf16.mxu0 0
    %1160 = vmatpush1.bf16.msra.mxu0 0
    %1161 = vmatprep.subr.bf16.mxu0 0
    %1162 = vmatpush1.bf16.msra.mxu0 0
    %1163 = vmatprep.subr.bf16.mxu0 0
    %1164 = vmatpush1.bf16.msra.mxu0 0
    %1165 = vmatprep.mubr.bf16.mxu0 0
    %1166 = vmatmul.mubr.bf16.gmra.mrb[0].mxu0 %v1034
    %v1167 = vpop.f32.mrb[0].mxu0
    %v1168 = vadd.f32 %v1030, %v1167
    %v1169 = vpop.f32.mrb[0].mxu0
    %v1170 = vpop.f32.mrb[0].mxu0
    %v1171 = vpop.f32.mrb[0].mxu0
    %1172 = vdwg.mxu0
    %v1173 = vld [vmem:[%s10] sm:$0x1f]
    %v1175 = vlaneseq
    %v1176 = vshrl.u32 %v1175, 7
    %v1177 = vsub.s32 0, %v1176
    %v1178 = vrot.slane %v1173, %v1177
    %v1179 = vlaneseq
    %v1180 = vshrl.u32 %v1179, 7
    %v1181 = vsub.s32 1, %v1180
    %v1182 = vrot.slane %v1173, %v1181
    %v1183 = vlaneseq
    %v1184 = vshrl.u32 %v1183, 7
    %v1185 = vsub.s32 2, %v1184
    %v1186 = vrot.slane %v1173, %v1185
    %v1187 = vlaneseq
    %v1188 = vshrl.u32 %v1187, 7
    %v1189 = vsub.s32 3, %v1188
    %v1190 = vrot.slane %v1173, %v1189
    %v1191 = vlaneseq
    %v1192 = vshrl.u32 %v1191, 7
    %v1193 = vsub.s32 4, %v1192
    %v1194 = vrot.slane %v1173, %v1193
    %v1200 = vmul.f32 %v1086, %v1178
    %v1201 = vmul.f32 %v1088, %v1182
    %v1202 = vmul.f32 %v1127, %v1186
    %v1203 = vmul.f32 %v1129, %v1190
    %v1204 = vmul.f32 %v1168, %v1194
    %v1205 = vadd.f32 %v1200, %v1201
    %v1206 = vadd.f32 %v1205, %v1202
    %v1207 = vadd.f32 %v1206, %v1203
    %v1208 = vsel %vm721, %v1204, 0.0
    %v1209 = vadd.f32 %v1207, %v1208
    %1210 = vadd.xlane.f32.xlu0 %v1209
    %v1211 = vpop.xlane.xlu0 %1210
    %v1212 = vmul.f32 %v1211, %v726
    %v1213 = vsub.f32 %v1086, %v1212
    %v1214 = vsub.f32 %v1088, %v1212
    %v1215 = vsub.f32 %v1127, %v1212
    %v1216 = vsub.f32 %v1129, %v1212
    %v1217 = vsub.f32 %v1168, %v1212
    %v1218 = vmul.f32 %v1213, %v1213
    %v1219 = vmul.f32 %v1214, %v1214
    %v1220 = vmul.f32 %v1215, %v1215
    %v1221 = vmul.f32 %v1216, %v1216
    %v1222 = vmul.f32 %v1217, %v1217
    %v1223 = vmul.f32 %v1218, %v1178
    %v1224 = vmul.f32 %v1219, %v1182
    %v1225 = vmul.f32 %v1220, %v1186
    %v1226 = vmul.f32 %v1221, %v1190
    %v1227 = vmul.f32 %v1222, %v1194
    %v1228 = vadd.f32 %v1223, %v1224
    %v1229 = vadd.f32 %v1228, %v1225
    %v1230 = vadd.f32 %v1229, %v1226
    %v1231 = vsel %vm721, %v1227, 0.0
    %v1232 = vadd.f32 %v1230, %v1231
    %1233 = vadd.xlane.f32.xlu0 %v1232
    %v1234 = vpop.xlane.xlu0 %1233
    %v1235 = vmul.f32 %v1234, %v726
    %v1236 = vld [vmem:[%s8] sm:$0xff]
    %v1237 = vadd.f32 %v1235, 1e-05
    %v1238 = vrsqrt.pop %v1237
    %v1239 = vmul.f32 %v1236, %v1238
    %v1240 = vld [vmem:[%s9] sm:$0xff]
    %v1241 = vmul.f32 %v1212, %v1239
    %v1242 = vsub.f32 %v1240, %v1241
    %1244 = vset.pattern.permute.xlu0 0
    %1245 = vperm.xlu0 %1244, %v1239
    %v1246 = vpop.permute.xlu0 %1245
    %v1248 = vmul.f32 %v1086, %v1246
    %v1249 = vmul.f32 %v1088, %v1246
    %v1250 = vmul.f32 %v1127, %v1246
    %v1251 = vmul.f32 %v1129, %v1246
    %v1252 = vmul.f32 %v1168, %v1246
    %1254 = vset.pattern.permute.xlu0 0
    %1255 = vperm.xlu0 %1254, %v1242
    %v1256 = vpop.permute.xlu0 %1255
    %v1258 = vadd.f32 %v1248, %v1256
    %v1259 = vadd.f32 %v1249, %v1256
    %v1260 = vadd.f32 %v1250, %v1256
    %v1261 = vadd.f32 %v1251, %v1256
    %v1262 = vadd.f32 %v1252, %v1256
    %v1263 = vmax.f32 %v1258, 0.0
    %v1264 = vmax.f32 %v1259, 0.0
    %v1265 = vmax.f32 %v1260, 0.0
    %v1266 = vmax.f32 %v1261, 0.0
    %v1267 = vmax.f32 %v1262, 0.0
    %1268 = vst [vmem:[#allocation4] sm:$0xff] 0.0
    %1269 = vst [vmem:[#allocation4 + $0x8] sm:$0xff] 0.0
    %1270 = vst [vmem:[#allocation4 + $0x10] sm:$0xff] 0.0
    %1271 = vst [vmem:[#allocation4 + $0x18] sm:$0xff] 0.0
    %1272 = vst [vmem:[#allocation4 + $0x20] sm:$0xff] 0.0
    %1273 = vst.msk [vmem:[#allocation4 + $0x28] sm:$0xff] %vm788, 0.0
    %v1274 = vmul.f32 %v1263, %v1178
    %v1275 = vmul.f32 %v1264, %v1182
    %v1276 = vmul.f32 %v1265, %v1186
    %v1277 = vmul.f32 %v1266, %v1190
    %v1278 = vmul.f32 %v1267, %v1194
    %1284 = vrot.lane.b32.xlu0 %v1274, 19
    %v1285 = vpop.permute.xlu0 %1284
    %1286 = vrot.lane.b32.xlu0 %v1275, 19
    %v1287 = vpop.permute.xlu0 %1286
    %1288 = vrot.lane.b32.xlu0 %v1276, 19
    %v1289 = vpop.permute.xlu0 %1288
    %1290 = vrot.lane.b32.xlu0 %v1277, 19
    %v1291 = vpop.permute.xlu0 %1290
    %1292 = vrot.lane.b32.xlu0 %v1278, 19
    %v1293 = vpop.permute.xlu0 %1292
    %v1294 = vsel %vm810, %v1285, %v1287
    %v1295 = vsel %vm810, %v1287, %v1289
    %v1296 = vsel %vm810, %v1289, %v1291
    %v1297 = vsel %vm810, %v1291, %v1293
    %1303 = vst.msk [vmem:[#allocation4] sm:$0xff] %vm820, %v1285
    %1304 = vst [vmem:[#allocation4 + $0x8] sm:$0xff] %v1294
    %1305 = vst [vmem:[#allocation4 + $0x10] sm:$0xff] %v1295
    %1306 = vst [vmem:[#allocation4 + $0x18] sm:$0xff] %v1296
    %1307 = vst.msk [vmem:[#allocation4 + $0x20] sm:$0xff] %vm825, %v1297
    %v1308 = vld [vmem:[#allocation4] sm:$0xff]
    %v1309 = vld [vmem:[#allocation4 + $0x8] sm:$0xff]
    %v1310 = vld [vmem:[#allocation4 + $0x10] sm:$0xff]
    %v1311 = vld [vmem:[#allocation4 + $0x18] sm:$0xff]
    %v1312 = vld [vmem:[#allocation4 + $0x20] sm:$0xff]
    %v1313 = vld [vmem:[#allocation4 + $0x28] sm:$0xff]
    %1319 = vrot.lane.b32.xlu0 %v1308, 127
    %v1320 = vpop.permute.xlu0 %1319
    %1321 = vrot.lane.b32.xlu0 %v1309, 127
    %v1322 = vpop.permute.xlu0 %1321
    %1323 = vrot.lane.b32.xlu0 %v1310, 127
    %v1324 = vpop.permute.xlu0 %1323
    %1325 = vrot.lane.b32.xlu0 %v1311, 127
    %v1326 = vpop.permute.xlu0 %1325
    %1327 = vrot.lane.b32.xlu0 %v1312, 127
    %v1328 = vpop.permute.xlu0 %1327
    %v1329 = vsel %vm341, %v1320, %v1322
    %v1330 = vsel %vm341, %v1322, %v1324
    %v1331 = vsel %vm341, %v1324, %v1326
    %v1332 = vsel %vm341, %v1326, %v1328
    %1338 = vrot.lane.b32.xlu0 %v1308, 126
    %v1339 = vpop.permute.xlu0 %1338
    %1340 = vrot.lane.b32.xlu0 %v1309, 126
    %v1341 = vpop.permute.xlu0 %1340
    %1342 = vrot.lane.b32.xlu0 %v1310, 126
    %v1343 = vpop.permute.xlu0 %1342
    %1344 = vrot.lane.b32.xlu0 %v1311, 126
    %v1345 = vpop.permute.xlu0 %1344
    %1346 = vrot.lane.b32.xlu0 %v1312, 126
    %v1347 = vpop.permute.xlu0 %1346
    %v1348 = vsel %vm361, %v1339, %v1341
    %v1349 = vsel %vm361, %v1341, %v1343
    %v1350 = vsel %vm361, %v1343, %v1345
    %v1351 = vsel %vm361, %v1345, %v1347
    %1357 = vrot.lane.b32.xlu0 %v1308, 110
    %v1358 = vpop.permute.xlu0 %1357
    %1359 = vrot.lane.b32.xlu0 %v1309, 110
    %v1360 = vpop.permute.xlu0 %1359
    %1361 = vrot.lane.b32.xlu0 %v1310, 110
    %v1362 = vpop.permute.xlu0 %1361
    %1363 = vrot.lane.b32.xlu0 %v1311, 110
    %v1364 = vpop.permute.xlu0 %1363
    %1365 = vrot.lane.b32.xlu0 %v1312, 110
    %v1366 = vpop.permute.xlu0 %1365
    %v1367 = vsel %vm381, %v1358, %v1360
    %v1368 = vsel %vm381, %v1360, %v1362
    %v1369 = vsel %vm381, %v1362, %v1364
    %v1370 = vsel %vm381, %v1364, %v1366
    %1376 = vrot.lane.b32.xlu0 %v1308, 109
    %v1377 = vpop.permute.xlu0 %1376
    %1378 = vrot.lane.b32.xlu0 %v1309, 109
    %v1379 = vpop.permute.xlu0 %1378
    %1380 = vrot.lane.b32.xlu0 %v1310, 109
    %v1381 = vpop.permute.xlu0 %1380
    %1382 = vrot.lane.b32.xlu0 %v1311, 109
    %v1383 = vpop.permute.xlu0 %1382
    %1384 = vrot.lane.b32.xlu0 %v1312, 109
    %v1385 = vpop.permute.xlu0 %1384
    %v1386 = vsel %vm401, %v1377, %v1379
    %v1387 = vsel %vm401, %v1379, %v1381
    %v1388 = vsel %vm401, %v1381, %v1383
    %v1389 = vsel %vm401, %v1383, %v1385
    %1395 = vrot.lane.b32.xlu0 %v1308, 108
    %v1396 = vpop.permute.xlu0 %1395
    %1397 = vrot.lane.b32.xlu0 %v1309, 108
    %v1398 = vpop.permute.xlu0 %1397
    %1399 = vrot.lane.b32.xlu0 %v1310, 108
    %v1400 = vpop.permute.xlu0 %1399
    %1401 = vrot.lane.b32.xlu0 %v1311, 108
    %v1402 = vpop.permute.xlu0 %1401
    %1403 = vrot.lane.b32.xlu0 %v1312, 108
    %v1404 = vpop.permute.xlu0 %1403
    %v1405 = vsel %vm421, %v1396, %v1398
    %v1406 = vsel %vm421, %v1398, %v1400
    %v1407 = vsel %vm421, %v1400, %v1402
    %v1408 = vsel %vm421, %v1402, %v1404
    %1415 = vrot.lane.b32.xlu0 %v1308, 92
    %v1416 = vpop.permute.xlu0 %1415
    %1417 = vrot.lane.b32.xlu0 %v1309, 92
    %v1418 = vpop.permute.xlu0 %1417
    %1419 = vrot.lane.b32.xlu0 %v1310, 92
    %v1420 = vpop.permute.xlu0 %1419
    %1421 = vrot.lane.b32.xlu0 %v1311, 92
    %v1422 = vpop.permute.xlu0 %1421
    %1423 = vrot.lane.b32.xlu0 %v1312, 92
    %v1424 = vpop.permute.xlu0 %1423
    %1425 = vrot.lane.b32.xlu0 %v1313, 92
    %v1426 = vpop.permute.xlu0 %1425
    %v1427 = vsel %vm445, %v1416, %v1418
    %v1428 = vsel %vm445, %v1418, %v1420
    %v1429 = vsel %vm445, %v1420, %v1422
    %v1430 = vsel %vm445, %v1422, %v1424
    %v1431 = vsel %vm445, %v1424, %v1426
    %1437 = vrot.lane.b32.xlu0 %v1308, 91
    %v1438 = vpop.permute.xlu0 %1437
    %1439 = vrot.lane.b32.xlu0 %v1309, 91
    %v1440 = vpop.permute.xlu0 %1439
    %1441 = vrot.lane.b32.xlu0 %v1310, 91
    %v1442 = vpop.permute.xlu0 %1441
    %1443 = vrot.lane.b32.xlu0 %v1311, 91
    %v1444 = vpop.permute.xlu0 %1443
    %1445 = vrot.lane.b32.xlu0 %v1312, 91
    %v1446 = vpop.permute.xlu0 %1445
    %1447 = vrot.lane.b32.xlu0 %v1313, 91
    %v1448 = vpop.permute.xlu0 %1447
    %v1449 = vsel %vm214, %v1438, %v1440
    %v1450 = vsel %vm214, %v1440, %v1442
    %v1451 = vsel %vm214, %v1442, %v1444
    %v1452 = vsel %vm214, %v1444, %v1446
    %v1453 = vsel %vm214, %v1446, %v1448
    %1459 = vrot.lane.b32.xlu0 %v1308, 90
    %v1460 = vpop.permute.xlu0 %1459
    %1461 = vrot.lane.b32.xlu0 %v1309, 90
    %v1462 = vpop.permute.xlu0 %1461
    %1463 = vrot.lane.b32.xlu0 %v1310, 90
    %v1464 = vpop.permute.xlu0 %1463
    %1465 = vrot.lane.b32.xlu0 %v1311, 90
    %v1466 = vpop.permute.xlu0 %1465
    %1467 = vrot.lane.b32.xlu0 %v1312, 90
    %v1468 = vpop.permute.xlu0 %1467
    %1469 = vrot.lane.b32.xlu0 %v1313, 90
    %v1470 = vpop.permute.xlu0 %1469
    %v1471 = vsel %vm491, %v1460, %v1462
    %v1472 = vsel %vm491, %v1462, %v1464
    %v1473 = vsel %vm491, %v1464, %v1466
    %v1474 = vsel %vm491, %v1466, %v1468
    %v1475 = vsel %vm491, %v1468, %v1470
    %v1481 = vpack.c.bf16 %v1329, %v1308
    %v1482 = vpack.c.bf16 %v1330, %v1309
    %v1483 = vpack.c.bf16 %v1331, %v1310
    %v1484 = vpack.c.bf16 %v1332, %v1311
    %v1485 = vpack.c.bf16 %v1328, %v1312
    %v1486 = vpack.c.bf16 %v1367, %v1348
    %v1487 = vpack.c.bf16 %v1368, %v1349
    %v1488 = vpack.c.bf16 %v1369, %v1350
    %v1489 = vpack.c.bf16 %v1370, %v1351
    %v1490 = vpack.c.bf16 %v1366, %v1347
    %v1491 = vpack.c.bf16 %v1405, %v1386
    %v1492 = vpack.c.bf16 %v1406, %v1387
    %v1493 = vpack.c.bf16 %v1407, %v1388
    %v1494 = vpack.c.bf16 %v1408, %v1389
    %v1495 = vpack.c.bf16 %v1404, %v1385
    %v1496 = vpack.c.bf16 %v1449, %v1427
    %v1497 = vpack.c.bf16 %v1450, %v1428
    %v1498 = vpack.c.bf16 %v1451, %v1429
    %v1499 = vpack.c.bf16 %v1452, %v1430
    %v1500 = vpack.c.bf16 %v1453, %v1431
    %v1501 = vpack.c.bf16 %v1471, %v1471
    %v1502 = vpack.c.bf16 %v1472, %v1472
    %v1503 = vpack.c.bf16 %v1473, %v1473
    %v1504 = vpack.c.bf16 %v1474, %v1474
    %v1505 = vpack.c.bf16 %v1475, %v1475
    %v1506 = vld [vmem:[%s11] sm:$0xf]
    %v1507 = vld [vmem:[%s12] sm:$0xff]
    %1509 = vset.pattern.permute.xlu0 0
    %1510 = vperm.xlu0 %1509, %v1507
    %v1511 = vpop.permute.xlu0 %1510
    %v1514 = vsel %vm1032, %v1506, 0
    %v1517 = vsel %vm68, %v1501, 0
    %v1520 = vsel %vm68, %v1502, 0
    %v1523 = vsel %vm68, %v1503, 0
    %v1526 = vsel %vm68, %v1504, 0
    %v1529 = vsel %vm68, %v1505, 0
    %1531 = vmatprep.subr.bf16.mxu0 %v1482
    %1532 = vmatpush1.bf16.msra.mxu0 %v1481
    %1533 = vmatprep.subr.bf16.mxu0 %v1487
    %1534 = vmatpush1.bf16.msra.mxu0 %v1486
    %1535 = vmatprep.subr.bf16.mxu0 %v1492
    %1536 = vmatpush1.bf16.msra.mxu0 %v1491
    %1537 = vmatprep.subr.bf16.mxu0 %v1497
    %1538 = vmatpush1.bf16.msra.mxu0 %v1496
    %1539 = vmatprep.subr.bf16.mxu0 %v1520
    %1540 = vmatpush1.bf16.msra.mxu0 %v1517
    %1541 = vmatprep.subr.bf16.mxu0 0
    %1542 = vmatpush1.bf16.msra.mxu0 0
    %1543 = vmatprep.subr.bf16.mxu0 0
    %1544 = vmatpush1.bf16.msra.mxu0 0
    %1545 = vmatprep.subr.bf16.mxu0 0
    %1546 = vmatpush1.bf16.msra.mxu0 0
    %1547 = vmatprep.subr.bf16.mxu0 0
    %1548 = vmatpush1.bf16.msra.mxu0 0
    %1549 = vmatprep.subr.bf16.mxu0 0
    %1550 = vmatpush1.bf16.msra.mxu0 0
    %1551 = vmatprep.subr.bf16.mxu0 0
    %1552 = vmatpush1.bf16.msra.mxu0 0
    %1553 = vmatprep.subr.bf16.mxu0 0
    %1554 = vmatpush1.bf16.msra.mxu0 0
    %1555 = vmatprep.subr.bf16.mxu0 0
    %1556 = vmatpush1.bf16.msra.mxu0 0
    %1557 = vmatprep.subr.bf16.mxu0 0
    %1558 = vmatpush1.bf16.msra.mxu0 0
    %1559 = vmatprep.subr.bf16.mxu0 0
    %1560 = vmatpush1.bf16.msra.mxu0 0
    %1561 = vmatprep.subr.bf16.mxu0 0
    %1562 = vmatpush1.bf16.msra.mxu0 0
    %1563 = vmatprep.mubr.bf16.mxu0 0
    %1564 = vmatmul.mubr.bf16.gmra.mrb[0].mxu0 %v1514
    %v1565 = vpop.f32.mrb[0].mxu0
    %v1566 = vadd.f32 %v1511, %v1565
    %v1567 = vpop.f32.mrb[0].mxu0
    %v1568 = vadd.f32 %v1511, %v1567
    %v1569 = vpop.f32.mrb[0].mxu0
    %v1570 = vpop.f32.mrb[0].mxu0
    %1571 = vdwg.mxu0
    %1572 = vmatprep.subr.bf16.mxu0 %v1484
    %1573 = vmatpush1.bf16.msra.mxu0 %v1483
    %1574 = vmatprep.subr.bf16.mxu0 %v1489
    %1575 = vmatpush1.bf16.msra.mxu0 %v1488
    %1576 = vmatprep.subr.bf16.mxu0 %v1494
    %1577 = vmatpush1.bf16.msra.mxu0 %v1493
    %1578 = vmatprep.subr.bf16.mxu0 %v1499
    %1579 = vmatpush1.bf16.msra.mxu0 %v1498
    %1580 = vmatprep.subr.bf16.mxu0 %v1526
    %1581 = vmatpush1.bf16.msra.mxu0 %v1523
    %1582 = vmatprep.subr.bf16.mxu0 0
    %1583 = vmatpush1.bf16.msra.mxu0 0
    %1584 = vmatprep.subr.bf16.mxu0 0
    %1585 = vmatpush1.bf16.msra.mxu0 0
    %1586 = vmatprep.subr.bf16.mxu0 0
    %1587 = vmatpush1.bf16.msra.mxu0 0
    %1588 = vmatprep.subr.bf16.mxu0 0
    %1589 = vmatpush1.bf16.msra.mxu0 0
    %1590 = vmatprep.subr.bf16.mxu0 0
    %1591 = vmatpush1.bf16.msra.mxu0 0
    %1592 = vmatprep.subr.bf16.mxu0 0
    %1593 = vmatpush1.bf16.msra.mxu0 0
    %1594 = vmatprep.subr.bf16.mxu0 0
    %1595 = vmatpush1.bf16.msra.mxu0 0
    %1596 = vmatprep.subr.bf16.mxu0 0
    %1597 = vmatpush1.bf16.msra.mxu0 0
    %1598 = vmatprep.subr.bf16.mxu0 0
    %1599 = vmatpush1.bf16.msra.mxu0 0
    %1600 = vmatprep.subr.bf16.mxu0 0
    %1601 = vmatpush1.bf16.msra.mxu0 0
    %1602 = vmatprep.subr.bf16.mxu0 0
    %1603 = vmatpush1.bf16.msra.mxu0 0
    %1604 = vmatprep.mubr.bf16.mxu0 0
    %1605 = vmatmul.mubr.bf16.gmra.mrb[0].mxu0 %v1514
    %v1606 = vpop.f32.mrb[0].mxu0
    %v1607 = vadd.f32 %v1511, %v1606
    %v1608 = vpop.f32.mrb[0].mxu0
    %v1609 = vadd.f32 %v1511, %v1608
    %v1610 = vpop.f32.mrb[0].mxu0
    %v1611 = vpop.f32.mrb[0].mxu0
    %1612 = vdwg.mxu0
    %1613 = vmatprep.subr.bf16.mxu0 0
    %1614 = vmatpush1.bf16.msra.mxu0 %v1485
    %1615 = vmatprep.subr.bf16.mxu0 0
    %1616 = vmatpush1.bf16.msra.mxu0 %v1490
    %1617 = vmatprep.subr.bf16.mxu0 0
    %1618 = vmatpush1.bf16.msra.mxu0 %v1495
    %1619 = vmatprep.subr.bf16.mxu0 0
    %1620 = vmatpush1.bf16.msra.mxu0 %v1500
    %1621 = vmatprep.subr.bf16.mxu0 0
    %1622 = vmatpush1.bf16.msra.mxu0 %v1529
    %1623 = vmatprep.subr.bf16.mxu0 0
    %1624 = vmatpush1.bf16.msra.mxu0 0
    %1625 = vmatprep.subr.bf16.mxu0 0
    %1626 = vmatpush1.bf16.msra.mxu0 0
    %1627 = vmatprep.subr.bf16.mxu0 0
    %1628 = vmatpush1.bf16.msra.mxu0 0
    %1629 = vmatprep.subr.bf16.mxu0 0
    %1630 = vmatpush1.bf16.msra.mxu0 0
    %1631 = vmatprep.subr.bf16.mxu0 0
    %1632 = vmatpush1.bf16.msra.mxu0 0
    %1633 = vmatprep.subr.bf16.mxu0 0
    %1634 = vmatpush1.bf16.msra.mxu0 0
    %1635 = vmatprep.subr.bf16.mxu0 0
    %1636 = vmatpush1.bf16.msra.mxu0 0
    %1637 = vmatprep.subr.bf16.mxu0 0
    %1638 = vmatpush1.bf16.msra.mxu0 0
    %1639 = vmatprep.subr.bf16.mxu0 0
    %1640 = vmatpush1.bf16.msra.mxu0 0
    %1641 = vmatprep.subr.bf16.mxu0 0
    %1642 = vmatpush1.bf16.msra.mxu0 0
    %1643 = vmatprep.subr.bf16.mxu0 0
    %1644 = vmatpush1.bf16.msra.mxu0 0
    %1645 = vmatprep.mubr.bf16.mxu0 0
    %1646 = vmatmul.mubr.bf16.gmra.mrb[0].mxu0 %v1514
    %v1647 = vpop.f32.mrb[0].mxu0
    %v1648 = vadd.f32 %v1511, %v1647
    %v1649 = vpop.f32.mrb[0].mxu0
    %v1650 = vpop.f32.mrb[0].mxu0
    %v1651 = vpop.f32.mrb[0].mxu0
    %1652 = vdwg.mxu0
    %v1653 = vld [vmem:[%s15] sm:$0x1f]
    %v1655 = vlaneseq
    %v1656 = vshrl.u32 %v1655, 7
    %v1657 = vsub.s32 0, %v1656
    %v1658 = vrot.slane %v1653, %v1657
    %v1659 = vlaneseq
    %v1660 = vshrl.u32 %v1659, 7
    %v1661 = vsub.s32 1, %v1660
    %v1662 = vrot.slane %v1653, %v1661
    %v1663 = vlaneseq
    %v1664 = vshrl.u32 %v1663, 7
    %v1665 = vsub.s32 2, %v1664
    %v1666 = vrot.slane %v1653, %v1665
    %v1667 = vlaneseq
    %v1668 = vshrl.u32 %v1667, 7
    %v1669 = vsub.s32 3, %v1668
    %v1670 = vrot.slane %v1653, %v1669
    %v1671 = vlaneseq
    %v1672 = vshrl.u32 %v1671, 7
    %v1673 = vsub.s32 4, %v1672
    %v1674 = vrot.slane %v1653, %v1673
    %v1680 = vmul.f32 %v1566, %v1658
    %v1681 = vmul.f32 %v1568, %v1662
    %v1682 = vmul.f32 %v1607, %v1666
    %v1683 = vmul.f32 %v1609, %v1670
    %v1684 = vmul.f32 %v1648, %v1674
    %v1685 = vadd.f32 %v1680, %v1681
    %v1686 = vadd.f32 %v1685, %v1682
    %v1687 = vadd.f32 %v1686, %v1683
    %v1688 = vsel %vm721, %v1684, 0.0
    %v1689 = vadd.f32 %v1687, %v1688
    %1690 = vadd.xlane.f32.xlu0 %v1689
    %v1691 = vpop.xlane.xlu0 %1690
    %v1692 = vmul.f32 %v1691, %v726
    %v1693 = vsub.f32 %v1566, %v1692
    %v1694 = vsub.f32 %v1568, %v1692
    %v1695 = vsub.f32 %v1607, %v1692
    %v1696 = vsub.f32 %v1609, %v1692
    %v1697 = vsub.f32 %v1648, %v1692
    %v1698 = vmul.f32 %v1693, %v1693
    %v1699 = vmul.f32 %v1694, %v1694
    %v1700 = vmul.f32 %v1695, %v1695
    %v1701 = vmul.f32 %v1696, %v1696
    %v1702 = vmul.f32 %v1697, %v1697
    %v1703 = vmul.f32 %v1698, %v1658
    %v1704 = vmul.f32 %v1699, %v1662
    %v1705 = vmul.f32 %v1700, %v1666
    %v1706 = vmul.f32 %v1701, %v1670
    %v1707 = vmul.f32 %v1702, %v1674
    %v1708 = vadd.f32 %v1703, %v1704
    %v1709 = vadd.f32 %v1708, %v1705
    %v1710 = vadd.f32 %v1709, %v1706
    %v1711 = vsel %vm721, %v1707, 0.0
    %v1712 = vadd.f32 %v1710, %v1711
    %1713 = vadd.xlane.f32.xlu0 %v1712
    %v1714 = vpop.xlane.xlu0 %1713
    %v1715 = vmul.f32 %v1714, %v726
    %v1716 = vld [vmem:[%s13] sm:$0xff]
    %v1717 = vadd.f32 %v1715, 1e-05
    %v1718 = vrsqrt.pop %v1717
    %v1719 = vmul.f32 %v1716, %v1718
    %v1720 = vld [vmem:[%s14] sm:$0xff]
    %v1721 = vmul.f32 %v1692, %v1719
    %v1722 = vsub.f32 %v1720, %v1721
    %1724 = vset.pattern.permute.xlu0 0
    %1725 = vperm.xlu0 %1724, %v1719
    %v1726 = vpop.permute.xlu0 %1725
    %v1728 = vmul.f32 %v1566, %v1726
    %v1729 = vmul.f32 %v1568, %v1726
    %v1730 = vmul.f32 %v1607, %v1726
    %v1731 = vmul.f32 %v1609, %v1726
    %v1732 = vmul.f32 %v1648, %v1726
    %1734 = vset.pattern.permute.xlu0 0
    %1735 = vperm.xlu0 %1734, %v1722
    %v1736 = vpop.permute.xlu0 %1735
    %v1738 = vadd.f32 %v1728, %v1736
    %v1739 = vadd.f32 %v1729, %v1736
    %v1740 = vadd.f32 %v1730, %v1736
    %v1741 = vadd.f32 %v1731, %v1736
    %v1742 = vadd.f32 %v1732, %v1736
    %v1743 = vmax.f32 %v1738, 0.0
    %v1744 = vmax.f32 %v1739, 0.0
    %v1745 = vmax.f32 %v1740, 0.0
    %v1746 = vmax.f32 %v1741, 0.0
    %v1747 = vmax.f32 %v1742, 0.0
    %1748 = vst [vmem:[#allocation5] sm:$0xff] 0.0
    %1749 = vst [vmem:[#allocation5 + $0x8] sm:$0xff] 0.0
    %1750 = vst [vmem:[#allocation5 + $0x10] sm:$0xff] 0.0
    %1751 = vst [vmem:[#allocation5 + $0x18] sm:$0xff] 0.0
    %1752 = vst [vmem:[#allocation5 + $0x20] sm:$0xff] 0.0
    %1753 = vst.msk [vmem:[#allocation5 + $0x28] sm:$0xff] %vm788, 0.0
    %v1754 = vmul.f32 %v1743, %v1658
    %v1755 = vmul.f32 %v1744, %v1662
    %v1756 = vmul.f32 %v1745, %v1666
    %v1757 = vmul.f32 %v1746, %v1670
    %v1758 = vmul.f32 %v1747, %v1674
    %1764 = vrot.lane.b32.xlu0 %v1754, 19
    %v1765 = vpop.permute.xlu0 %1764
    %1766 = vrot.lane.b32.xlu0 %v1755, 19
    %v1767 = vpop.permute.xlu0 %1766
    %1768 = vrot.lane.b32.xlu0 %v1756, 19
    %v1769 = vpop.permute.xlu0 %1768
    %1770 = vrot.lane.b32.xlu0 %v1757, 19
    %v1771 = vpop.permute.xlu0 %1770
    %1772 = vrot.lane.b32.xlu0 %v1758, 19
    %v1773 = vpop.permute.xlu0 %1772
    %v1774 = vsel %vm810, %v1765, %v1767
    %v1775 = vsel %vm810, %v1767, %v1769
    %v1776 = vsel %vm810, %v1769, %v1771
    %v1777 = vsel %vm810, %v1771, %v1773
    %1783 = vst.msk [vmem:[#allocation5] sm:$0xff] %vm820, %v1765
    %1784 = vst [vmem:[#allocation5 + $0x8] sm:$0xff] %v1774
    %1785 = vst [vmem:[#allocation5 + $0x10] sm:$0xff] %v1775
    %1786 = vst [vmem:[#allocation5 + $0x18] sm:$0xff] %v1776
    %1787 = vst.msk [vmem:[#allocation5 + $0x20] sm:$0xff] %vm825, %v1777
    %v1788 = vld [vmem:[#allocation5] sm:$0xff]
    %v1789 = vld [vmem:[#allocation5 + $0x8] sm:$0xff]
    %v1790 = vld [vmem:[#allocation5 + $0x10] sm:$0xff]
    %v1791 = vld [vmem:[#allocation5 + $0x18] sm:$0xff]
    %v1792 = vld [vmem:[#allocation5 + $0x20] sm:$0xff]
    %v1793 = vld [vmem:[#allocation5 + $0x28] sm:$0xff]
    %1799 = vrot.lane.b32.xlu0 %v1788, 127
    %v1800 = vpop.permute.xlu0 %1799
    %1801 = vrot.lane.b32.xlu0 %v1789, 127
    %v1802 = vpop.permute.xlu0 %1801
    %1803 = vrot.lane.b32.xlu0 %v1790, 127
    %v1804 = vpop.permute.xlu0 %1803
    %1805 = vrot.lane.b32.xlu0 %v1791, 127
    %v1806 = vpop.permute.xlu0 %1805
    %1807 = vrot.lane.b32.xlu0 %v1792, 127
    %v1808 = vpop.permute.xlu0 %1807
    %v1809 = vsel %vm341, %v1800, %v1802
    %v1810 = vsel %vm341, %v1802, %v1804
    %v1811 = vsel %vm341, %v1804, %v1806
    %v1812 = vsel %vm341, %v1806, %v1808
    %1818 = vrot.lane.b32.xlu0 %v1788, 126
    %v1819 = vpop.permute.xlu0 %1818
    %1820 = vrot.lane.b32.xlu0 %v1789, 126
    %v1821 = vpop.permute.xlu0 %1820
    %1822 = vrot.lane.b32.xlu0 %v1790, 126
    %v1823 = vpop.permute.xlu0 %1822
    %1824 = vrot.lane.b32.xlu0 %v1791, 126
    %v1825 = vpop.permute.xlu0 %1824
    %1826 = vrot.lane.b32.xlu0 %v1792, 126
    %v1827 = vpop.permute.xlu0 %1826
    %v1828 = vsel %vm361, %v1819, %v1821
    %v1829 = vsel %vm361, %v1821, %v1823
    %v1830 = vsel %vm361, %v1823, %v1825
    %v1831 = vsel %vm361, %v1825, %v1827
    %1837 = vrot.lane.b32.xlu0 %v1788, 110
    %v1838 = vpop.permute.xlu0 %1837
    %1839 = vrot.lane.b32.xlu0 %v1789, 110
    %v1840 = vpop.permute.xlu0 %1839
    %1841 = vrot.lane.b32.xlu0 %v1790, 110
    %v1842 = vpop.permute.xlu0 %1841
    %1843 = vrot.lane.b32.xlu0 %v1791, 110
    %v1844 = vpop.permute.xlu0 %1843
    %1845 = vrot.lane.b32.xlu0 %v1792, 110
    %v1846 = vpop.permute.xlu0 %1845
    %v1847 = vsel %vm381, %v1838, %v1840
    %v1848 = vsel %vm381, %v1840, %v1842
    %v1849 = vsel %vm381, %v1842, %v1844
    %v1850 = vsel %vm381, %v1844, %v1846
    %1856 = vrot.lane.b32.xlu0 %v1788, 109
    %v1857 = vpop.permute.xlu0 %1856
    %1858 = vrot.lane.b32.xlu0 %v1789, 109
    %v1859 = vpop.permute.xlu0 %1858
    %1860 = vrot.lane.b32.xlu0 %v1790, 109
    %v1861 = vpop.permute.xlu0 %1860
    %1862 = vrot.lane.b32.xlu0 %v1791, 109
    %v1863 = vpop.permute.xlu0 %1862
    %1864 = vrot.lane.b32.xlu0 %v1792, 109
    %v1865 = vpop.permute.xlu0 %1864
    %v1866 = vsel %vm401, %v1857, %v1859
    %v1867 = vsel %vm401, %v1859, %v1861
    %v1868 = vsel %vm401, %v1861, %v1863
    %v1869 = vsel %vm401, %v1863, %v1865
    %1875 = vrot.lane.b32.xlu0 %v1788, 108
    %v1876 = vpop.permute.xlu0 %1875
    %1877 = vrot.lane.b32.xlu0 %v1789, 108
    %v1878 = vpop.permute.xlu0 %1877
    %1879 = vrot.lane.b32.xlu0 %v1790, 108
    %v1880 = vpop.permute.xlu0 %1879
    %1881 = vrot.lane.b32.xlu0 %v1791, 108
    %v1882 = vpop.permute.xlu0 %1881
    %1883 = vrot.lane.b32.xlu0 %v1792, 108
    %v1884 = vpop.permute.xlu0 %1883
    %v1885 = vsel %vm421, %v1876, %v1878
    %v1886 = vsel %vm421, %v1878, %v1880
    %v1887 = vsel %vm421, %v1880, %v1882
    %v1888 = vsel %vm421, %v1882, %v1884
    %1895 = vrot.lane.b32.xlu0 %v1788, 92
    %v1896 = vpop.permute.xlu0 %1895
    %1897 = vrot.lane.b32.xlu0 %v1789, 92
    %v1898 = vpop.permute.xlu0 %1897
    %1899 = vrot.lane.b32.xlu0 %v1790, 92
    %v1900 = vpop.permute.xlu0 %1899
    %1901 = vrot.lane.b32.xlu0 %v1791, 92
    %v1902 = vpop.permute.xlu0 %1901
    %1903 = vrot.lane.b32.xlu0 %v1792, 92
    %v1904 = vpop.permute.xlu0 %1903
    %1905 = vrot.lane.b32.xlu0 %v1793, 92
    %v1906 = vpop.permute.xlu0 %1905
    %v1907 = vsel %vm445, %v1896, %v1898
    %v1908 = vsel %vm445, %v1898, %v1900
    %v1909 = vsel %vm445, %v1900, %v1902
    %v1910 = vsel %vm445, %v1902, %v1904
    %v1911 = vsel %vm445, %v1904, %v1906
    %1917 = vrot.lane.b32.xlu0 %v1788, 91
    %v1918 = vpop.permute.xlu0 %1917
    %1919 = vrot.lane.b32.xlu0 %v1789, 91
    %v1920 = vpop.permute.xlu0 %1919
    %1921 = vrot.lane.b32.xlu0 %v1790, 91
    %v1922 = vpop.permute.xlu0 %1921
    %1923 = vrot.lane.b32.xlu0 %v1791, 91
    %v1924 = vpop.permute.xlu0 %1923
    %1925 = vrot.lane.b32.xlu0 %v1792, 91
    %v1926 = vpop.permute.xlu0 %1925
    %1927 = vrot.lane.b32.xlu0 %v1793, 91
    %v1928 = vpop.permute.xlu0 %1927
    %v1929 = vsel %vm214, %v1918, %v1920
    %v1930 = vsel %vm214, %v1920, %v1922
    %v1931 = vsel %vm214, %v1922, %v1924
    %v1932 = vsel %vm214, %v1924, %v1926
    %v1933 = vsel %vm214, %v1926, %v1928
    %1939 = vrot.lane.b32.xlu0 %v1788, 90
    %v1940 = vpop.permute.xlu0 %1939
    %1941 = vrot.lane.b32.xlu0 %v1789, 90
    %v1942 = vpop.permute.xlu0 %1941
    %1943 = vrot.lane.b32.xlu0 %v1790, 90
    %v1944 = vpop.permute.xlu0 %1943
    %1945 = vrot.lane.b32.xlu0 %v1791, 90
    %v1946 = vpop.permute.xlu0 %1945
    %1947 = vrot.lane.b32.xlu0 %v1792, 90
    %v1948 = vpop.permute.xlu0 %1947
    %1949 = vrot.lane.b32.xlu0 %v1793, 90
    %v1950 = vpop.permute.xlu0 %1949
    %v1951 = vsel %vm491, %v1940, %v1942
    %v1952 = vsel %vm491, %v1942, %v1944
    %v1953 = vsel %vm491, %v1944, %v1946
    %v1954 = vsel %vm491, %v1946, %v1948
    %v1955 = vsel %vm491, %v1948, %v1950
    %v1961 = vpack.c.bf16 %v1809, %v1788
    %v1962 = vpack.c.bf16 %v1810, %v1789
    %v1963 = vpack.c.bf16 %v1811, %v1790
    %v1964 = vpack.c.bf16 %v1812, %v1791
    %v1965 = vpack.c.bf16 %v1808, %v1792
    %v1966 = vpack.c.bf16 %v1847, %v1828
    %v1967 = vpack.c.bf16 %v1848, %v1829
    %v1968 = vpack.c.bf16 %v1849, %v1830
    %v1969 = vpack.c.bf16 %v1850, %v1831
    %v1970 = vpack.c.bf16 %v1846, %v1827
    %v1971 = vpack.c.bf16 %v1885, %v1866
    %v1972 = vpack.c.bf16 %v1886, %v1867
    %v1973 = vpack.c.bf16 %v1887, %v1868
    %v1974 = vpack.c.bf16 %v1888, %v1869
    %v1975 = vpack.c.bf16 %v1884, %v1865
    %v1976 = vpack.c.bf16 %v1929, %v1907
    %v1977 = vpack.c.bf16 %v1930, %v1908
    %v1978 = vpack.c.bf16 %v1931, %v1909
    %v1979 = vpack.c.bf16 %v1932, %v1910
    %v1980 = vpack.c.bf16 %v1933, %v1911
    %v1981 = vpack.c.bf16 %v1951, %v1951
    %v1982 = vpack.c.bf16 %v1952, %v1952
    %v1983 = vpack.c.bf16 %v1953, %v1953
    %v1984 = vpack.c.bf16 %v1954, %v1954
    %v1985 = vpack.c.bf16 %v1955, %v1955
    %v1986 = vld [vmem:[%s16] sm:$0x1]
    %v1987 = vld [vmem:[#allocation6] sm:$0x1]
    %1989 = vset.pattern.permute.xlu0 0
    %1990 = vperm.xlu0 %1989, %v1987
    %v1991 = vpop.permute.xlu0 %1990
    %v1993 = vlaneseq
    %v1994 = vshrl.u32 %v1993, 7
    %v1995 = vsub.s32 0, %v1994
    %v1996 = vrot.slane %v1991, %v1995
    %v1998 = vsel %vm1032, %v1986, 0
    %v2001 = vsel %vm68, %v1981, 0
    %v2004 = vsel %vm68, %v1982, 0
    %v2007 = vsel %vm68, %v1983, 0
    %v2010 = vsel %vm68, %v1984, 0
    %v2013 = vsel %vm68, %v1985, 0
    %2015 = vmatprep.subr.bf16.mxu0 %v1962
    %2016 = vmatpush1.bf16.msra.mxu0 %v1961
    %2017 = vmatprep.subr.bf16.mxu0 %v1967
    %2018 = vmatpush1.bf16.msra.mxu0 %v1966
    %2019 = vmatprep.subr.bf16.mxu0 %v1972
    %2020 = vmatpush1.bf16.msra.mxu0 %v1971
    %2021 = vmatprep.subr.bf16.mxu0 %v1977
    %2022 = vmatpush1.bf16.msra.mxu0 %v1976
    %2023 = vmatprep.subr.bf16.mxu0 %v2004
    %2024 = vmatpush1.bf16.msra.mxu0 %v2001
    %2025 = vmatprep.subr.bf16.mxu0 0
    %2026 = vmatpush1.bf16.msra.mxu0 0
    %2027 = vmatprep.subr.bf16.mxu0 0
    %2028 = vmatpush1.bf16.msra.mxu0 0
    %2029 = vmatprep.subr.bf16.mxu0 0
    %2030 = vmatpush1.bf16.msra.mxu0 0
    %2031 = vmatprep.subr.bf16.mxu0 0
    %2032 = vmatpush1.bf16.msra.mxu0 0
    %2033 = vmatprep.subr.bf16.mxu0 0
    %2034 = vmatpush1.bf16.msra.mxu0 0
    %2035 = vmatprep.subr.bf16.mxu0 0
    %2036 = vmatpush1.bf16.msra.mxu0 0
    %2037 = vmatprep.subr.bf16.mxu0 0
    %2038 = vmatpush1.bf16.msra.mxu0 0
    %2039 = vmatprep.subr.bf16.mxu0 0
    %2040 = vmatpush1.bf16.msra.mxu0 0
    %2041 = vmatprep.subr.bf16.mxu0 0
    %2042 = vmatpush1.bf16.msra.mxu0 0
    %2043 = vmatprep.subr.bf16.mxu0 0
    %2044 = vmatpush1.bf16.msra.mxu0 0
    %2045 = vmatprep.subr.bf16.mxu0 0
    %2046 = vmatpush1.bf16.msra.mxu0 0
    %2047 = vmatprep.mubr.bf16.mxu0 0
    %2048 = vmatmul.mubr.bf16.gmra.mrb[0].mxu0 %v1998
    %v2049 = vpop.f32.mrb[0].mxu0
    %v2050 = vadd.f32 %v1996, %v2049
    %v2051 = vpop.f32.mrb[0].mxu0
    %v2052 = vadd.f32 %v1996, %v2051
    %v2053 = vpop.f32.mrb[0].mxu0
    %v2054 = vpop.f32.mrb[0].mxu0
    %2055 = vdwg.mxu0
    %2056 = vmatprep.subr.bf16.mxu0 %v1964
    %2057 = vmatpush1.bf16.msra.mxu0 %v1963
    %2058 = vmatprep.subr.bf16.mxu0 %v1969
    %2059 = vmatpush1.bf16.msra.mxu0 %v1968
    %2060 = vmatprep.subr.bf16.mxu0 %v1974
    %2061 = vmatpush1.bf16.msra.mxu0 %v1973
    %2062 = vmatprep.subr.bf16.mxu0 %v1979
    %2063 = vmatpush1.bf16.msra.mxu0 %v1978
    %2064 = vmatprep.subr.bf16.mxu0 %v2010
    %2065 = vmatpush1.bf16.msra.mxu0 %v2007
    %2066 = vmatprep.subr.bf16.mxu0 0
    %2067 = vmatpush1.bf16.msra.mxu0 0
    %2068 = vmatprep.subr.bf16.mxu0 0
    %2069 = vmatpush1.bf16.msra.mxu0 0
    %2070 = vmatprep.subr.bf16.mxu0 0
    %2071 = vmatpush1.bf16.msra.mxu0 0
    %2072 = vmatprep.subr.bf16.mxu0 0
    %2073 = vmatpush1.bf16.msra.mxu0 0
    %2074 = vmatprep.subr.bf16.mxu0 0
    %2075 = vmatpush1.bf16.msra.mxu0 0
    %2076 = vmatprep.subr.bf16.mxu0 0
    %2077 = vmatpush1.bf16.msra.mxu0 0
    %2078 = vmatprep.subr.bf16.mxu0 0
    %2079 = vmatpush1.bf16.msra.mxu0 0
    %2080 = vmatprep.subr.bf16.mxu0 0
    %2081 = vmatpush1.bf16.msra.mxu0 0
    %2082 = vmatprep.subr.bf16.mxu0 0
    %2083 = vmatpush1.bf16.msra.mxu0 0
    %2084 = vmatprep.subr.bf16.mxu0 0
    %2085 = vmatpush1.bf16.msra.mxu0 0
    %2086 = vmatprep.subr.bf16.mxu0 0
    %2087 = vmatpush1.bf16.msra.mxu0 0
    %2088 = vmatprep.mubr.bf16.mxu0 0
    %2089 = vmatmul.mubr.bf16.gmra.mrb[0].mxu0 %v1998
    %v2090 = vpop.f32.mrb[0].mxu0
    %v2091 = vadd.f32 %v1996, %v2090
    %v2092 = vpop.f32.mrb[0].mxu0
    %v2093 = vadd.f32 %v1996, %v2092
    %v2094 = vpop.f32.mrb[0].mxu0
    %v2095 = vpop.f32.mrb[0].mxu0
    %2096 = vdwg.mxu0
    %2097 = vmatprep.subr.bf16.mxu0 0
    %2098 = vmatpush1.bf16.msra.mxu0 %v1965
    %2099 = vmatprep.subr.bf16.mxu0 0
    %2100 = vmatpush1.bf16.msra.mxu0 %v1970
    %2101 = vmatprep.subr.bf16.mxu0 0
    %2102 = vmatpush1.bf16.msra.mxu0 %v1975
    %2103 = vmatprep.subr.bf16.mxu0 0
    %2104 = vmatpush1.bf16.msra.mxu0 %v1980
    %2105 = vmatprep.subr.bf16.mxu0 0
    %2106 = vmatpush1.bf16.msra.mxu0 %v2013
    %2107 = vmatprep.subr.bf16.mxu0 0
    %2108 = vmatpush1.bf16.msra.mxu0 0
    %2109 = vmatprep.subr.bf16.mxu0 0
    %2110 = vmatpush1.bf16.msra.mxu0 0
    %2111 = vmatprep.subr.bf16.mxu0 0
    %2112 = vmatpush1.bf16.msra.mxu0 0
    %2113 = vmatprep.subr.bf16.mxu0 0
    %2114 = vmatpush1.bf16.msra.mxu0 0
    %2115 = vmatprep.subr.bf16.mxu0 0
    %2116 = vmatpush1.bf16.msra.mxu0 0
    %2117 = vmatprep.subr.bf16.mxu0 0
    %2118 = vmatpush1.bf16.msra.mxu0 0
    %2119 = vmatprep.subr.bf16.mxu0 0
    %2120 = vmatpush1.bf16.msra.mxu0 0
    %2121 = vmatprep.subr.bf16.mxu0 0
    %2122 = vmatpush1.bf16.msra.mxu0 0
    %2123 = vmatprep.subr.bf16.mxu0 0
    %2124 = vmatpush1.bf16.msra.mxu0 0
    %2125 = vmatprep.subr.bf16.mxu0 0
    %2126 = vmatpush1.bf16.msra.mxu0 0
    %2127 = vmatprep.subr.bf16.mxu0 0
    %2128 = vmatpush1.bf16.msra.mxu0 0
    %2129 = vmatprep.mubr.bf16.mxu0 0
    %2130 = vmatmul.mubr.bf16.gmra.mrb[0].mxu0 %v1998
    %v2131 = vpop.f32.mrb[0].mxu0
    %v2132 = vadd.f32 %v1996, %v2131
    %v2133 = vpop.f32.mrb[0].mxu0
    %v2134 = vpop.f32.mrb[0].mxu0
    %v2135 = vpop.f32.mrb[0].mxu0
    %2136 = vdwg.mxu0
    %v2137 = vxor.u32 %v2050, 2147483648
    %v2138 = vxor.u32 %v2052, 2147483648
    %v2139 = vxor.u32 %v2091, 2147483648
    %v2140 = vxor.u32 %v2093, 2147483648
    %v2141 = vxor.u32 %v2132, 2147483648
    %v2142 = vmul.f32 %v2137, 1.442695
    %v2143 = vpow.pop %v2142
    %v2144 = vmul.f32 %v2138, 1.442695
    %v2145 = vpow.pop %v2144
    %v2146 = vmul.f32 %v2139, 1.442695
    %v2147 = vpow.pop %v2146
    %v2148 = vmul.f32 %v2140, 1.442695
    %v2149 = vpow.pop %v2148
    %v2150 = vmul.f32 %v2141, 1.442695
    %v2151 = vpow.pop %v2150
    %v2152 = vadd.f32 %v2143, 1.0
    %v2153 = vadd.f32 %v2145, 1.0
    %v2154 = vadd.f32 %v2147, 1.0
    %v2155 = vadd.f32 %v2149, 1.0
    %v2156 = vadd.f32 %v2151, 1.0
    %v2157 = vrcp.pop %v2152
    %v2158 = vmul.f32 1.0, %v2157
    %v2159 = vrcp.pop %v2153
    %v2160 = vmul.f32 1.0, %v2159
    %v2161 = vrcp.pop %v2154
    %v2162 = vmul.f32 1.0, %v2161
    %v2163 = vrcp.pop %v2155
    %v2164 = vmul.f32 1.0, %v2163
    %v2165 = vrcp.pop %v2156
    %v2166 = vmul.f32 1.0, %v2165
    %v2167 = vlaneseq
    %vm2168 = vcmp.ge.s32.totalorder %v2167, 0
    %vm2169 = vcmp.lt.s32.totalorder %v2167, 16
    %vm2170 = vmand %vm2168, %vm2169
    %2171 = vst.msk [vmem:[#allocation7] sm:$0x1] %vm2170, %v2158
    %v2174 = vunpack.c.l.s4 1966171168
    %v2175 = vunpack.c.0.s8 %v2174
    %v2176 = vlaneseq
    %v2177 = vshrl.u32 %v2176, 7
    %v2178 = vsub.s32 %v2175, %v2177
    %v2179 = vrot.slane %v2158, %v2178
    %v2181 = vunpack.c.l.s4 1966171168
    %v2182 = vunpack.c.0.s8 %v2181
    %v2183 = vlaneseq
    %v2184 = vshrl.u32 %v2183, 7
    %v2185 = vsub.s32 %v2182, %v2184
    %v2186 = vrot.slane %v2179, %v2185
    %2187 = vrot.lane.b32.xlu0 %v2186, 126
    %v2188 = vpop.permute.xlu0 %2187
    %vm2190 = vcmp.ge.s32.totalorder %v2167, 16
    %vm2191 = vcmp.lt.s32.totalorder %v2167, 32
    %vm2192 = vmand %vm2190, %vm2191
    %2193 = vst.msk [vmem:[#allocation7] sm:$0x1] %vm2192, %v2188
    %2194 = vrot.lane.b32.xlu0 %v2186, 124
    %v2195 = vpop.permute.xlu0 %2194
    %vm2197 = vcmp.ge.s32.totalorder %v2167, 32
    %vm2198 = vcmp.lt.s32.totalorder %v2167, 48
    %vm2199 = vmand %vm2197, %vm2198
    %2200 = vst.msk [vmem:[#allocation7] sm:$0x1] %vm2199, %v2195
    %2201 = vrot.lane.b32.xlu0 %v2186, 122
    %v2202 = vpop.permute.xlu0 %2201
    %vm2204 = vcmp.ge.s32.totalorder %v2167, 48
    %vm2205 = vcmp.lt.s32.totalorder %v2167, 64
    %vm2206 = vmand %vm2204, %vm2205
    %2207 = vst.msk [vmem:[#allocation7] sm:$0x1] %vm2206, %v2202
    %2208 = vrot.lane.b32.xlu0 %v2186, 120
    %v2209 = vpop.permute.xlu0 %2208
    %vm2211 = vcmp.ge.s32.totalorder %v2167, 64
    %vm2212 = vcmp.lt.s32.totalorder %v2167, 80
    %vm2213 = vmand %vm2211, %vm2212
    %2214 = vst.msk [vmem:[#allocation7] sm:$0x1] %vm2213, %v2209
    %2215 = vrot.lane.b32.xlu0 %v2186, 118
    %v2216 = vpop.permute.xlu0 %2215
    %vm2218 = vcmp.ge.s32.totalorder %v2167, 80
    %vm2219 = vcmp.lt.s32.totalorder %v2167, 96
    %vm2220 = vmand %vm2218, %vm2219
    %2221 = vst.msk [vmem:[#allocation7] sm:$0x1] %vm2220, %v2216
    %2222 = vrot.lane.b32.xlu0 %v2186, 116
    %v2223 = vpop.permute.xlu0 %2222
    %vm2225 = vcmp.ge.s32.totalorder %v2167, 96
    %vm2226 = vcmp.lt.s32.totalorder %v2167, 112
    %vm2227 = vmand %vm2225, %vm2226
    %2228 = vst.msk [vmem:[#allocation7] sm:$0x1] %vm2227, %v2223
    %v2230 = vcombine.low %v2158, %v2160
    %v2232 = vunpack.c.l.s4 1966171168
    %v2233 = vunpack.c.0.s8 %v2232
    %v2234 = vlaneseq
    %v2235 = vshrl.u32 %v2234, 7
    %v2236 = vsub.s32 %v2233, %v2235
    %v2237 = vrot.slane %v2230, %v2236
    %v2239 = vunpack.c.l.s4 1966171168
    %v2240 = vunpack.c.0.s8 %v2239
    %v2241 = vlaneseq
    %v2242 = vshrl.u32 %v2241, 7
    %v2243 = vsub.s32 %v2240, %v2242
    %v2244 = vrot.slane %v2237, %v2243
    %2245 = vrot.lane.b32.xlu0 %v2244, 114
    %v2246 = vpop.permute.xlu0 %2245
    %v2247 = vrot.slane %v2246, 1
    %vm2248 = vcmask 932864
    %v2249 = vsel %vm2248, %v2246, %v2247
    %vm2251 = vcmp.ge.s32.totalorder %v2167, 112
    %vm2252 = vcmp.lt.s32.totalorder %v2167, 128
    %vm2253 = vmand %vm2251, %vm2252
    %2254 = vst.msk [vmem:[#allocation7] sm:$0x1] %vm2253, %v2249
    %v2256 = vunpack.c.l.s4 1966171168
    %v2257 = vunpack.c.0.s8 %v2256
    %v2258 = vlaneseq
    %v2259 = vshrl.u32 %v2258, 7
    %v2260 = vsub.s32 %v2257, %v2259
    %v2261 = vrot.slane %v2160, %v2260
    %v2263 = vunpack.c.l.s4 1966171168
    %v2264 = vunpack.c.0.s8 %v2263
    %v2265 = vlaneseq
    %v2266 = vshrl.u32 %v2265, 7
    %v2267 = vsub.s32 %v2264, %v2266
    %v2268 = vrot.slane %v2261, %v2267
    %2269 = vrot.lane.b32.xlu0 %v2268, 112
    %v2270 = vpop.permute.xlu0 %2269
    %2272 = vst.msk [vmem:[#allocation7 + $0x1] sm:$0x1] %vm2170, %v2270
    %2273 = vrot.lane.b32.xlu0 %v2268, 110
    %v2274 = vpop.permute.xlu0 %2273
    %2276 = vst.msk [vmem:[#allocation7 + $0x1] sm:$0x1] %vm2192, %v2274
    %2277 = vrot.lane.b32.xlu0 %v2268, 108
    %v2278 = vpop.permute.xlu0 %2277
    %2280 = vst.msk [vmem:[#allocation7 + $0x1] sm:$0x1] %vm2199, %v2278
    %2281 = vrot.lane.b32.xlu0 %v2268, 106
    %v2282 = vpop.permute.xlu0 %2281
    %2284 = vst.msk [vmem:[#allocation7 + $0x1] sm:$0x1] %vm2206, %v2282
    %2285 = vrot.lane.b32.xlu0 %v2268, 104
    %v2286 = vpop.permute.xlu0 %2285
    %2288 = vst.msk [vmem:[#allocation7 + $0x1] sm:$0x1] %vm2213, %v2286
    %2289 = vrot.lane.b32.xlu0 %v2268, 102
    %v2290 = vpop.permute.xlu0 %2289
    %2292 = vst.msk [vmem:[#allocation7 + $0x1] sm:$0x1] %vm2220, %v2290
    %v2294 = vcombine.low %v2160, %v2162
    %v2296 = vunpack.c.l.s4 1966171168
    %v2297 = vunpack.c.0.s8 %v2296
    %v2298 = vlaneseq
    %v2299 = vshrl.u32 %v2298, 7
    %v2300 = vsub.s32 %v2297, %v2299
    %v2301 = vrot.slane %v2294, %v2300
    %v2303 = vunpack.c.l.s4 1966171168
    %v2304 = vunpack.c.0.s8 %v2303
    %v2305 = vlaneseq
    %v2306 = vshrl.u32 %v2305, 7
    %v2307 = vsub.s32 %v2304, %v2306
    %v2308 = vrot.slane %v2301, %v2307
    %2309 = vrot.lane.b32.xlu0 %v2308, 100
    %v2310 = vpop.permute.xlu0 %2309
    %v2311 = vrot.slane %v2310, 1
    %vm2312 = vcmask 818176
    %v2313 = vsel %vm2312, %v2310, %v2311
    %2315 = vst.msk [vmem:[#allocation7 + $0x1] sm:$0x1] %vm2227, %v2313
    %v2317 = vunpack.c.l.s4 1966171168
    %v2318 = vunpack.c.0.s8 %v2317
    %v2319 = vlaneseq
    %v2320 = vshrl.u32 %v2319, 7
    %v2321 = vsub.s32 %v2318, %v2320
    %v2322 = vrot.slane %v2162, %v2321
    %v2324 = vunpack.c.l.s4 1966171168
    %v2325 = vunpack.c.0.s8 %v2324
    %v2326 = vlaneseq
    %v2327 = vshrl.u32 %v2326, 7
    %v2328 = vsub.s32 %v2325, %v2327
    %v2329 = vrot.slane %v2322, %v2328
    %2330 = vrot.lane.b32.xlu0 %v2329, 98
    %v2331 = vpop.permute.xlu0 %2330
    %2333 = vst.msk [vmem:[#allocation7 + $0x1] sm:$0x1] %vm2253, %v2331
    %2334 = vrot.lane.b32.xlu0 %v2329, 60
    %v2335 = vpop.permute.xlu0 %2334
    %s2337 = scalar_lea.vmem [#allocation7], 2
    %2338 = vst.msk [vmem:[%s2337] sm:$0x1] %vm2170, %v2335
    %2339 = vrot.lane.b32.xlu0 %v2329, 58
    %v2340 = vpop.permute.xlu0 %2339
    %2342 = vst.msk [vmem:[%s2337] sm:$0x1] %vm2192, %v2340
    %2343 = vrot.lane.b32.xlu0 %v2329, 56
    %v2344 = vpop.permute.xlu0 %2343
    %2346 = vst.msk [vmem:[%s2337] sm:$0x1] %vm2199, %v2344
    %v2348 = vcombine.low %v2162, %v2164
    %v2350 = vunpack.c.l.s4 1966171168
    %v2351 = vunpack.c.0.s8 %v2350
    %v2352 = vlaneseq
    %v2353 = vshrl.u32 %v2352, 7
    %v2354 = vsub.s32 %v2351, %v2353
    %v2355 = vrot.slane %v2348, %v2354
    %v2357 = vunpack.c.l.s4 1966171168
    %v2358 = vunpack.c.0.s8 %v2357
    %v2359 = vlaneseq
    %v2360 = vshrl.u32 %v2359, 7
    %v2361 = vsub.s32 %v2358, %v2360
    %v2362 = vrot.slane %v2355, %v2361
    %2363 = vrot.lane.b32.xlu0 %v2362, 54
    %v2364 = vpop.permute.xlu0 %2363
    %v2365 = vrot.slane %v2364, 1
    %vm2366 = vcmask 441344
    %v2367 = vsel %vm2366, %v2364, %v2365
    %2369 = vst.msk [vmem:[%s2337] sm:$0x1] %vm2206, %v2367
    %v2371 = vunpack.c.l.s4 1966171168
    %v2372 = vunpack.c.0.s8 %v2371
    %v2373 = vlaneseq
    %v2374 = vshrl.u32 %v2373, 7
    %v2375 = vsub.s32 %v2372, %v2374
    %v2376 = vrot.slane %v2164, %v2375
    %v2378 = vunpack.c.l.s4 1966171168
    %v2379 = vunpack.c.0.s8 %v2378
    %v2380 = vlaneseq
    %v2381 = vshrl.u32 %v2380, 7
    %v2382 = vsub.s32 %v2379, %v2381
    %v2383 = vrot.slane %v2376, %v2382
    %2384 = vrot.lane.b32.xlu0 %v2383, 52
    %v2385 = vpop.permute.xlu0 %2384
    %2387 = vst.msk [vmem:[%s2337] sm:$0x1] %vm2213, %v2385
    %2388 = vrot.lane.b32.xlu0 %v2383, 50
    %v2389 = vpop.permute.xlu0 %2388
    %2391 = vst.msk [vmem:[%s2337] sm:$0x1] %vm2220, %v2389
    %2392 = vrot.lane.b32.xlu0 %v2383, 48
    %v2393 = vpop.permute.xlu0 %2392
    %2395 = vst.msk [vmem:[%s2337] sm:$0x1] %vm2227, %v2393
    %2396 = vrot.lane.b32.xlu0 %v2383, 46
    %v2397 = vpop.permute.xlu0 %2396
    %2399 = vst.msk [vmem:[%s2337] sm:$0x1] %vm2253, %v2397
    %2400 = vrot.lane.b32.xlu0 %v2383, 44
    %v2401 = vpop.permute.xlu0 %2400
    %2403 = vst.msk [vmem:[%s2337 + $0x1] sm:$0x1] %vm2170, %v2401
    %2404 = vrot.lane.b32.xlu0 %v2383, 42
    %v2405 = vpop.permute.xlu0 %2404
    %2407 = vst.msk [vmem:[%s2337 + $0x1] sm:$0x1] %vm2192, %v2405
    %v2409 = vcombine.low %v2164, %v2166
    %v2411 = vunpack.c.l.s4 1966171168
    %v2412 = vunpack.c.0.s8 %v2411
    %v2413 = vlaneseq
    %v2414 = vshrl.u32 %v2413, 7
    %v2415 = vsub.s32 %v2412, %v2414
    %v2416 = vrot.slane %v2409, %v2415
    %v2418 = vunpack.c.l.s4 1966171168
    %v2419 = vunpack.c.0.s8 %v2418
    %v2420 = vlaneseq
    %v2421 = vshrl.u32 %v2420, 7
    %v2422 = vsub.s32 %v2419, %v2421
    %v2423 = vrot.slane %v2416, %v2422
    %2424 = vrot.lane.b32.xlu0 %v2423, 40
    %v2425 = vpop.permute.xlu0 %2424
    %v2426 = vrot.slane %v2425, 1
    %vm2427 = vcmask 326656
    %v2428 = vsel %vm2427, %v2425, %v2426
    %2430 = vst.msk [vmem:[%s2337 + $0x1] sm:$0x1] %vm2199, %v2428
    %v2432 = vunpack.c.l.s4 1966171168
    %v2433 = vunpack.c.0.s8 %v2432
    %v2434 = vlaneseq
    %v2435 = vshrl.u32 %v2434, 7
    %v2436 = vsub.s32 %v2433, %v2435
    %v2437 = vrot.slane %v2166, %v2436
    %v2439 = vunpack.c.l.s4 1966171168
    %v2440 = vunpack.c.0.s8 %v2439
    %v2441 = vlaneseq
    %v2442 = vshrl.u32 %v2441, 7
    %v2443 = vsub.s32 %v2440, %v2442
    %v2444 = vrot.slane %v2437, %v2443
    %2445 = vrot.lane.b32.xlu0 %v2444, 38
    %v2446 = vpop.permute.xlu0 %2445
    %2448 = vst.msk [vmem:[%s2337 + $0x1] sm:$0x1] %vm2206, %v2446
    %2449 = vrot.lane.b32.xlu0 %v2444, 36
    %v2450 = vpop.permute.xlu0 %2449
    %2452 = vst.msk [vmem:[%s2337 + $0x1] sm:$0x1] %vm2213, %v2450
    %2453 = vrot.lane.b32.xlu0 %v2444, 34
    %v2454 = vpop.permute.xlu0 %2453
    %2456 = vst.msk [vmem:[%s2337 + $0x1] sm:$0x1] %vm2220, %v2454
    %2457 = vrot.lane.b32.xlu0 %v2444, 32
    %v2458 = vpop.permute.xlu0 %2457
    %2460 = vst.msk [vmem:[%s2337 + $0x1] sm:$0x1] %vm2227, %v2458
    %2461 = vrot.lane.b32.xlu0 %v2444, 30
    %v2462 = vpop.permute.xlu0 %2461
    %2464 = vst.msk [vmem:[%s2337 + $0x1] sm:$0x1] %vm2253, %v2462
    // Predicated region
    $region78: #{tpu_custom_call.1} parent=1 // pred_check
      _
    $region79: #{tpu_custom_call.1} parent=1 // pred_check_branch
      %2466 = sbr.rel (0) target = $region81
    $region80: #{tpu_custom_call.1} parent=1 // pred_region
      %s2468 = ssub.s32 64, 64
      %2469 = vsyncadd [#allocation8], %s2468
      %s2470 = sshll.u32 [#allocation7], 4
      %s2471 = int_to_ptr.vmem [resolvable:$true] %s2470
      %2476 = dma.vmem_to_hbm [thread:$0]  %s2471, 64, %s19, [#allocation8], 32, 32, 2
    $region81: #{tpu_custom_call.1} parent=1 // pred_fallthru
      _
    // Predicated region
    $region82: #{tpu_custom_call.1} parent=1 // pred_check
      _
    $region83: #{tpu_custom_call.1} parent=1 // pred_check_branch
      %2478 = sbr.rel (0) target = $region85
    $region84: #{tpu_custom_call.1} parent=1 // pred_region
      %2479 = dma.done [#allocation8], 64
    $region85: #{tpu_custom_call.1} parent=1 // pred_fallthru
      _
    %2480 = vsyncpa [#allocation8], 1

</llo_original>
